<compile_context>
chip_gen: v6e
topology: v6e:2x2x1
jax: 0.10.0
libtpu: 0.0.40
codegen_flags: <defaults>
</compile_context>

<pallas_src>
import functools
import math

import jax
import jax.numpy as jnp
from jax.experimental import pallas as pl
from jax.experimental.pallas import tpu as pltpu

# ----------------------- tiny BERT config -----------------------
VOCAB = 100
HIDDEN = 32
N_LAYERS = 2
N_HEADS = 2
HEAD_DIM = HIDDEN // N_HEADS
INTERMEDIATE = 64
MAX_POS = 16
N_CLASSES = 12
LN_EPS = 1e-12


# ----------------------- fused forward kernel -----------------------

def _layernorm(x, g, b):
    mu = jnp.mean(x, axis=-1, keepdims=True)
    d = x - mu
    var = jnp.mean(d * d, axis=-1, keepdims=True)
    return d * jax.lax.rsqrt(var + LN_EPS) * g + b


def _gelu(y):
    # TODO(synk): HF BERT uses erf-GELU; tanh approximation used here for a clean
    # Mosaic lowering (numerically very close).
    c = math.sqrt(2.0 / math.pi)
    return 0.5 * y * (1.0 + jnp.tanh(c * (y + 0.044715 * y * y * y)))


def _bert_fwd_kernel(x_ref, mask_ref, emb_g_ref, emb_b_ref,
                     wqkv_ref, bqkv_ref, wo_ref, bo_ref,
                     ln1_g_ref, ln1_b_ref, w1_ref, b1_ref,
                     w2_ref, b2_ref, ln2_g_ref, ln2_b_ref,
                     wcls_ref, bcls_ref, o_ref):
    """Full BERT-encoder forward for one batch element; everything stays in VMEM."""
    n_layers = wqkv_ref.shape[0]
    scale = 1.0 / math.sqrt(HEAD_DIM)

    x = x_ref[0]                      # [S, H]  (summed embeddings)
    mask = mask_ref[0]                # [1, S]  additive mask, broadcasts over queries

    # Embedding LayerNorm (no residual path needed).
    x = _layernorm(x, emb_g_ref[...], emb_b_ref[...])

    for l in range(n_layers):
        # ---- fused QKV projection: one (S,H) @ (H,3H) matmul ----
        qkv = jnp.dot(x, wqkv_ref[l], preferred_element_type=jnp.float32) + bqkv_ref[l]

        # ---- attention: per-head static lane slices, Wo accumulated per head ----
        wo = wo_ref[l]                # [H, H]
        attn_out = bo_ref[l]          # [1, H] -> broadcasts to [S, H] on first add
        for h in range(N_HEADS):
            lo = h * HEAD_DIM
            qh = qkv[:, lo:lo + HEAD_DIM]                            # [S, Dh]
            kh = qkv[:, HIDDEN + lo:HIDDEN + lo + HEAD_DIM]          # [S, Dh]
            vh = qkv[:, 2 * HIDDEN + lo:2 * HIDDEN + lo + HEAD_DIM]  # [S, Dh]

            s = jax.lax.dot_general(qh, kh, (((1,), (1,)), ((), ())),
                                    preferred_element_type=jnp.float32)  # [S, S]
            s = s * scale + mask
            s = s - jnp.max(s, axis=-1, keepdims=True)
            p = jnp.exp(s)
            # After max-subtraction every row has a 1.0 entry, so the sum is >= 1
            # and the approximate (EUP) reciprocal is safe.
            p = p * pl.reciprocal(jnp.sum(p, axis=-1, keepdims=True), approx=True)

            ctx_h = jnp.dot(p, vh, preferred_element_type=jnp.float32)   # [S, Dh]
            attn_out = attn_out + jnp.dot(ctx_h, wo[lo:lo + HEAD_DIM, :],
                                          preferred_element_type=jnp.float32)

        # ---- residual + LayerNorm 1 (fused epilogue) ----
        x = _layernorm(attn_out + x, ln1_g_ref[l], ln1_b_ref[l])

        # ---- FFN (GELU) + residual + LayerNorm 2 ----
        ffn = _gelu(jnp.dot(x, w1_ref[l], preferred_element_type=jnp.float32)
                    + b1_ref[l])
        ffn = jnp.dot(ffn, w2_ref[l], preferred_element_type=jnp.float32) + b2_ref[l]
        x = _layernorm(ffn + x, ln2_g_ref[l], ln2_b_ref[l])

    # ---- mean-pool over seq + classifier head ----
    # Matches torch.mean(output, dim=1): unmasked mean over the sequence axis.
    pooled = jnp.mean(x, axis=0, keepdims=True)                          # [1, H]
    logits = (jnp.dot(pooled, wcls_ref[...], preferred_element_type=jnp.float32)
              + bcls_ref[...])                                           # [1, C]
    o_ref[0] = logits


def bert_forward_fused(x_emb, mask_add, params):
    """x_emb: [B, S, H] summed embeddings; mask_add: [B, 1, S] additive mask."""
    B, S, H = x_emb.shape
    L = N_LAYERS
    full3 = lambda shape: pl.BlockSpec(shape, lambda i: (0, 0, 0))
    full2 = lambda shape: pl.BlockSpec(shape, lambda i: (0, 0))

    out = pl.pallas_call(
        _bert_fwd_kernel,
        out_shape=jax.ShapeDtypeStruct((B, 1, N_CLASSES), jnp.float32),
        grid=(B,),
        in_specs=[
            pl.BlockSpec((1, S, H), lambda i: (i, 0, 0)),        # x_emb (per batch)
            pl.BlockSpec((1, 1, S), lambda i: (i, 0, 0)),        # mask  (per batch)
            full2((1, H)),                                       # emb_ln_g
            full2((1, H)),                                       # emb_ln_b
            full3((L, H, 3 * H)),                                # wqkv
            full3((L, 1, 3 * H)),                                # bqkv
            full3((L, H, H)),                                    # wo
            full3((L, 1, H)),                                    # bo
            full3((L, 1, H)),                                    # ln1_g
            full3((L, 1, H)),                                    # ln1_b
            full3((L, H, INTERMEDIATE)),                         # w1
            full3((L, 1, INTERMEDIATE)),                         # b1
            full3((L, INTERMEDIATE, H)),                         # w2
            full3((L, 1, H)),                                    # b2
            full3((L, 1, H)),                                    # ln2_g
            full3((L, 1, H)),                                    # ln2_b
            full2((H, N_CLASSES)),                               # w_cls
            full2((1, N_CLASSES)),                               # b_cls
        ],
        out_specs=pl.BlockSpec((1, 1, N_CLASSES), lambda i: (i, 0, 0)),
        compiler_params=pltpu.CompilerParams(
            dimension_semantics=("parallel",)),                  # v7x: batch over TCs
    )(x_emb, mask_add,
      params["emb_ln_g"], params["emb_ln_b"],
      params["wqkv"], params["bqkv"], params["wo"], params["bo"],
      params["ln1_g"], params["ln1_b"], params["w1"], params["b1"],
      params["w2"], params["b2"], params["ln2_g"], params["ln2_b"],
      params["w_cls"], params["b_cls"])
    return out[:, 0, :]


# ----------------------- parameter init (deterministic, synthetic) -----------------------

def init_params(key):
    def dense(k, fan_in, fan_out):
        kw, kb = jax.random.split(k)
        w = 0.02 * jax.random.normal(kw, (fan_in, fan_out), jnp.float32)
        b = 0.02 * jax.random.normal(kb, (1, fan_out), jnp.float32)
        return w, b

    keys = jax.random.split(key, 4 + N_LAYERS)
    params = {
        "word_emb": 0.02 * jax.random.normal(keys[0], (VOCAB, HIDDEN), jnp.float32),
        "pos_emb": 0.02 * jax.random.normal(keys[1], (MAX_POS, HIDDEN), jnp.float32),
        "tok_emb": 0.02 * jax.random.normal(keys[2], (2, HIDDEN), jnp.float32),
        "emb_ln_g": jnp.ones((1, HIDDEN), jnp.float32),
        "emb_ln_b": jnp.zeros((1, HIDDEN), jnp.float32),
    }

    wqkv, bqkv, wo, bo, w1, b1, w2, b2 = ([] for _ in range(8))
    for li in range(N_LAYERS):
        lk = jax.random.split(keys[3 + li], 6)
        wq, bq_ = dense(lk[0], HIDDEN, HIDDEN)
        wk, bk_ = dense(lk[1], HIDDEN, HIDDEN)
        wv, bv_ = dense(lk[2], HIDDEN, HIDDEN)
        wqkv.append(jnp.concatenate([wq, wk, wv], axis=1))       # [H, 3H]
        bqkv.append(jnp.concatenate([bq_, bk_, bv_], axis=1))    # [1, 3H]
        wo_, bo_ = dense(lk[3], HIDDEN, HIDDEN)
        w1_, b1_ = dense(lk[4], HIDDEN, INTERMEDIATE)
        w2_, b2_ = dense(lk[5], INTERMEDIATE, HIDDEN)
        wo.append(wo_); bo.append(bo_)
        w1.append(w1_); b1.append(b1_)
        w2.append(w2_); b2.append(b2_)

    params.update({
        "wqkv": jnp.stack(wqkv), "bqkv": jnp.stack(bqkv),
        "wo": jnp.stack(wo), "bo": jnp.stack(bo),
        "w1": jnp.stack(w1), "b1": jnp.stack(b1),
        "w2": jnp.stack(w2), "b2": jnp.stack(b2),
        "ln1_g": jnp.ones((N_LAYERS, 1, HIDDEN), jnp.float32),
        "ln1_b": jnp.zeros((N_LAYERS, 1, HIDDEN), jnp.float32),
        "ln2_g": jnp.ones((N_LAYERS, 1, HIDDEN), jnp.float32),
        "ln2_b": jnp.zeros((N_LAYERS, 1, HIDDEN), jnp.float32),
    })
    w_cls, b_cls = dense(keys[3 + N_LAYERS], HIDDEN, N_CLASSES)
    params["w_cls"] = w_cls
    params["b_cls"] = b_cls
    return params


# ----------------------- forward pass -----------------------

def bert_novel_classifier(params, input_ids, attention_mask):
    B, S = input_ids.shape

    # Embedding gather + sum stays in plain JAX (glue); LN happens in the kernel.
    x_emb = (jnp.take(params["word_emb"], input_ids, axis=0)
             + params["pos_emb"][None, :S, :]
             + params["tok_emb"][0][None, None, :])              # [B, S, H]

    # HF-style additive attention mask: 0 for keep, -1e9 for padding.
    mask_add = ((1.0 - attention_mask.astype(jnp.float32)) * -1e9)[:, None, :]  # [B,1,S]

    return bert_forward_fused(x_emb, mask_add, params)


# ----------------------- main -----------------------

if __name__ == "__main__":
    B, S = 2, 8
    key = jax.random.PRNGKey(0)
    k_ids, k_params = jax.random.split(key)

    input_ids = jax.random.randint(k_ids, (B, S), 0, VOCAB, dtype=jnp.int32)
    attention_mask = jnp.ones((B, S), dtype=jnp.int32).at[1, 6:].set(0)

    params = init_params(k_params)

    logits = bert_novel_classifier(params, input_ids, attention_mask)
    logits = jax.block_until_ready(logits)

    assert logits.shape == (B, N_CLASSES)
    assert logits.dtype == jnp.float32
    assert bool(jnp.all(jnp.isfinite(logits)))
    print("KERNEL_OK")
</pallas_src>

<mosaic_0001>
module attributes {stable_mosaic.version = 11 : i64} {
  func.func @_bert_fwd_kernel(%arg0: i32, %arg1: memref<1x8x32xf32, #tpu.memory_space<vmem>>, %arg2: memref<1x1x8xf32, #tpu.memory_space<vmem>>, %arg3: memref<1x32xf32, #tpu.memory_space<vmem>>, %arg4: memref<1x32xf32, #tpu.memory_space<vmem>>, %arg5: memref<2x32x96xf32, #tpu.memory_space<vmem>>, %arg6: memref<2x1x96xf32, #tpu.memory_space<vmem>>, %arg7: memref<2x32x32xf32, #tpu.memory_space<vmem>>, %arg8: memref<2x1x32xf32, #tpu.memory_space<vmem>>, %arg9: memref<2x1x32xf32, #tpu.memory_space<vmem>>, %arg10: memref<2x1x32xf32, #tpu.memory_space<vmem>>, %arg11: memref<2x32x64xf32, #tpu.memory_space<vmem>>, %arg12: memref<2x1x64xf32, #tpu.memory_space<vmem>>, %arg13: memref<2x64x32xf32, #tpu.memory_space<vmem>>, %arg14: memref<2x1x32xf32, #tpu.memory_space<vmem>>, %arg15: memref<2x1x32xf32, #tpu.memory_space<vmem>>, %arg16: memref<2x1x32xf32, #tpu.memory_space<vmem>>, %arg17: memref<32x12xf32, #tpu.memory_space<vmem>>, %arg18: memref<1x12xf32, #tpu.memory_space<vmem>>, %arg19: memref<1x1x12xf32, #tpu.memory_space<vmem>>) attributes {dimension_semantics = [#tpu.dimension_semantics<parallel>], iteration_bounds = array<i64: 2>, scalar_prefetch = 0 : i64, scratch_operands = 0 : i64, tpu.core_type = #tpu.core_type<tc>, window_params = [{transform_indices = @transform_0, window_bounds = array<i64: 1, 8, 32>}, {transform_indices = @transform_1, window_bounds = array<i64: 1, 1, 8>}, {pipeline_mode = #tpu.pipeline_mode<synchronous>, transform_indices = @transform_2, window_bounds = array<i64: 1, 32>}, {pipeline_mode = #tpu.pipeline_mode<synchronous>, transform_indices = @transform_3, window_bounds = array<i64: 1, 32>}, {pipeline_mode = #tpu.pipeline_mode<synchronous>, transform_indices = @transform_4, window_bounds = array<i64: 2, 32, 96>}, {pipeline_mode = #tpu.pipeline_mode<synchronous>, transform_indices = @transform_5, window_bounds = array<i64: 2, 1, 96>}, {pipeline_mode = #tpu.pipeline_mode<synchronous>, transform_indices = @transform_6, window_bounds = array<i64: 2, 32, 32>}, {pipeline_mode = #tpu.pipeline_mode<synchronous>, transform_indices = @transform_7, window_bounds = array<i64: 2, 1, 32>}, {pipeline_mode = #tpu.pipeline_mode<synchronous>, transform_indices = @transform_8, window_bounds = array<i64: 2, 1, 32>}, {pipeline_mode = #tpu.pipeline_mode<synchronous>, transform_indices = @transform_9, window_bounds = array<i64: 2, 1, 32>}, {pipeline_mode = #tpu.pipeline_mode<synchronous>, transform_indices = @transform_10, window_bounds = array<i64: 2, 32, 64>}, {pipeline_mode = #tpu.pipeline_mode<synchronous>, transform_indices = @transform_11, window_bounds = array<i64: 2, 1, 64>}, {pipeline_mode = #tpu.pipeline_mode<synchronous>, transform_indices = @transform_12, window_bounds = array<i64: 2, 64, 32>}, {pipeline_mode = #tpu.pipeline_mode<synchronous>, transform_indices = @transform_13, window_bounds = array<i64: 2, 1, 32>}, {pipeline_mode = #tpu.pipeline_mode<synchronous>, transform_indices = @transform_14, window_bounds = array<i64: 2, 1, 32>}, {pipeline_mode = #tpu.pipeline_mode<synchronous>, transform_indices = @transform_15, window_bounds = array<i64: 2, 1, 32>}, {pipeline_mode = #tpu.pipeline_mode<synchronous>, transform_indices = @transform_16, window_bounds = array<i64: 32, 12>}, {pipeline_mode = #tpu.pipeline_mode<synchronous>, transform_indices = @transform_17, window_bounds = array<i64: 1, 12>}, {transform_indices = @transform_18, window_bounds = array<i64: 1, 1, 12>}]} {
    %c0 = arith.constant 0 : index
    %c0_0 = arith.constant 0 : index
    %c0_1 = arith.constant 0 : index
    %0 = vector.load %arg1[%c0, %c0_0, %c0_1] : memref<1x8x32xf32, #tpu.memory_space<vmem>>, vector<1x8x32xf32>
    %1 = vector.shape_cast %0 : vector<1x8x32xf32> to vector<8x32xf32>
    %c0_2 = arith.constant 0 : index
    %c0_3 = arith.constant 0 : index
    %c0_4 = arith.constant 0 : index
    %2 = vector.load %arg2[%c0_2, %c0_3, %c0_4] : memref<1x1x8xf32, #tpu.memory_space<vmem>>, vector<1x1x8xf32>
    %3 = vector.shape_cast %2 : vector<1x1x8xf32> to vector<1x8xf32>
    %c0_5 = arith.constant 0 : index
    %c0_6 = arith.constant 0 : index
    %4 = vector.load %arg3[%c0_5, %c0_6] : memref<1x32xf32, #tpu.memory_space<vmem>>, vector<1x32xf32>
    %c0_7 = arith.constant 0 : index
    %c0_8 = arith.constant 0 : index
    %5 = vector.load %arg4[%c0_7, %c0_8] : memref<1x32xf32, #tpu.memory_space<vmem>>, vector<1x32xf32>
    %cst = arith.constant dense<0.000000e+00> : vector<8xf32>
    %6 = vector.multi_reduction <add>, %1, %cst [1] : vector<8x32xf32> to vector<8xf32>
    %7 = vector.shape_cast %6 : vector<8xf32> to vector<8x1xf32>
    %cst_9 = arith.constant 3.200000e+01 : f32
    %8 = vector.broadcast %cst_9 : f32 to vector<8x1xf32>
    %9 = arith.divf %7, %8 : vector<8x1xf32>
    %10 = vector.broadcast %9 : vector<8x1xf32> to vector<8x32xf32>
    %11 = arith.subf %1, %10 : vector<8x32xf32>
    %12 = arith.mulf %11, %11 : vector<8x32xf32>
    %cst_10 = arith.constant dense<0.000000e+00> : vector<8xf32>
    %13 = vector.multi_reduction <add>, %12, %cst_10 [1] : vector<8x32xf32> to vector<8xf32>
    %14 = vector.shape_cast %13 : vector<8xf32> to vector<8x1xf32>
    %cst_11 = arith.constant 3.200000e+01 : f32
    %15 = vector.broadcast %cst_11 : f32 to vector<8x1xf32>
    %16 = arith.divf %14, %15 : vector<8x1xf32>
    %cst_12 = arith.constant 9.99999996E-13 : f32
    %17 = vector.broadcast %cst_12 : f32 to vector<8x1xf32>
    %18 = arith.addf %16, %17 : vector<8x1xf32>
    %19 = math.rsqrt %18 : vector<8x1xf32>
    %20 = vector.broadcast %19 : vector<8x1xf32> to vector<8x32xf32>
    %21 = arith.mulf %11, %20 : vector<8x32xf32>
    %22 = vector.broadcast %4 : vector<1x32xf32> to vector<8x32xf32>
    %23 = arith.mulf %21, %22 : vector<8x32xf32>
    %24 = vector.broadcast %5 : vector<1x32xf32> to vector<8x32xf32>
    %25 = arith.addf %23, %24 : vector<8x32xf32>
    %c0_13 = arith.constant 0 : index
    %c0_14 = arith.constant 0 : index
    %c0_15 = arith.constant 0 : index
    %26 = vector.load %arg5[%c0_13, %c0_14, %c0_15] : memref<2x32x96xf32, #tpu.memory_space<vmem>>, vector<1x32x96xf32>
    %27 = vector.shape_cast %26 : vector<1x32x96xf32> to vector<32x96xf32>
    %cst_16 = arith.constant dense<0.000000e+00> : vector<8x96xf32>
    %28 = tpu.matmul %25, %27, %cst_16 {dimension_numbers = #tpu.dot_dimension_numbers<[1], [0], [0], [1], [0, 0, 1, 1], [], []>} : vector<8x32xf32>, vector<32x96xf32>, vector<8x96xf32> -> vector<8x96xf32>
    %c0_17 = arith.constant 0 : index
    %c0_18 = arith.constant 0 : index
    %c0_19 = arith.constant 0 : index
    %29 = vector.load %arg6[%c0_17, %c0_18, %c0_19] : memref<2x1x96xf32, #tpu.memory_space<vmem>>, vector<1x1x96xf32>
    %30 = vector.shape_cast %29 : vector<1x1x96xf32> to vector<1x96xf32>
    %31 = vector.broadcast %30 : vector<1x96xf32> to vector<8x96xf32>
    %32 = arith.addf %28, %31 : vector<8x96xf32>
    %c0_20 = arith.constant 0 : index
    %c0_21 = arith.constant 0 : index
    %c0_22 = arith.constant 0 : index
    %33 = vector.load %arg7[%c0_20, %c0_21, %c0_22] : memref<2x32x32xf32, #tpu.memory_space<vmem>>, vector<1x32x32xf32>
    %34 = vector.shape_cast %33 : vector<1x32x32xf32> to vector<32x32xf32>
    %c0_23 = arith.constant 0 : index
    %c0_24 = arith.constant 0 : index
    %c0_25 = arith.constant 0 : index
    %35 = vector.load %arg8[%c0_23, %c0_24, %c0_25] : memref<2x1x32xf32, #tpu.memory_space<vmem>>, vector<1x1x32xf32>
    %36 = vector.shape_cast %35 : vector<1x1x32xf32> to vector<1x32xf32>
    %37 = vector.extract_strided_slice %32 {offsets = [0, 0], sizes = [8, 16], strides = [1, 1]} : vector<8x96xf32> to vector<8x16xf32>
    %38 = vector.extract_strided_slice %32 {offsets = [0, 32], sizes = [8, 16], strides = [1, 1]} : vector<8x96xf32> to vector<8x16xf32>
    %39 = vector.extract_strided_slice %32 {offsets = [0, 64], sizes = [8, 16], strides = [1, 1]} : vector<8x96xf32> to vector<8x16xf32>
    %cst_26 = arith.constant dense<0.000000e+00> : vector<8x8xf32>
    %40 = tpu.matmul %37, %38, %cst_26 {dimension_numbers = #tpu.dot_dimension_numbers<[1], [1], [0], [0], [0, 0, 1, 0], [], []>} : vector<8x16xf32>, vector<8x16xf32>, vector<8x8xf32> -> vector<8x8xf32>
    %cst_27 = arith.constant 2.500000e-01 : f32
    %41 = vector.broadcast %cst_27 : f32 to vector<8x8xf32>
    %42 = arith.mulf %40, %41 : vector<8x8xf32>
    %43 = vector.broadcast %3 : vector<1x8xf32> to vector<8x8xf32>
    %44 = arith.addf %42, %43 : vector<8x8xf32>
    %cst_28 = arith.constant dense<0xFF800000> : vector<8xf32>
    %45 = vector.multi_reduction <maximumf>, %44, %cst_28 [1] : vector<8x8xf32> to vector<8xf32>
    %46 = vector.shape_cast %45 : vector<8xf32> to vector<8x1xf32>
    %47 = vector.broadcast %46 : vector<8x1xf32> to vector<8x8xf32>
    %48 = arith.subf %44, %47 : vector<8x8xf32>
    %49 = math.exp %48 : vector<8x8xf32>
    %cst_29 = arith.constant dense<0.000000e+00> : vector<8xf32>
    %50 = vector.multi_reduction <add>, %49, %cst_29 [1] : vector<8x8xf32> to vector<8xf32>
    %51 = vector.shape_cast %50 : vector<8xf32> to vector<8x1xf32>
    %52 = tpu.reciprocal %51 {approx = true} : vector<8x1xf32> -> vector<8x1xf32>
    %53 = vector.broadcast %52 : vector<8x1xf32> to vector<8x8xf32>
    %54 = arith.mulf %49, %53 : vector<8x8xf32>
    %cst_30 = arith.constant dense<0.000000e+00> : vector<8x16xf32>
    %55 = tpu.matmul %54, %39, %cst_30 {dimension_numbers = #tpu.dot_dimension_numbers<[1], [0], [0], [1], [0, 0, 1, 1], [], []>} : vector<8x8xf32>, vector<8x16xf32>, vector<8x16xf32> -> vector<8x16xf32>
    %56 = vector.extract_strided_slice %34 {offsets = [0, 0], sizes = [16, 32], strides = [1, 1]} : vector<32x32xf32> to vector<16x32xf32>
    %cst_31 = arith.constant dense<0.000000e+00> : vector<8x32xf32>
    %57 = tpu.matmul %55, %56, %cst_31 {dimension_numbers = #tpu.dot_dimension_numbers<[1], [0], [0], [1], [0, 0, 1, 1], [], []>} : vector<8x16xf32>, vector<16x32xf32>, vector<8x32xf32> -> vector<8x32xf32>
    %58 = vector.broadcast %36 : vector<1x32xf32> to vector<8x32xf32>
    %59 = arith.addf %58, %57 : vector<8x32xf32>
    %60 = vector.extract_strided_slice %32 {offsets = [0, 16], sizes = [8, 16], strides = [1, 1]} : vector<8x96xf32> to vector<8x16xf32>
    %61 = vector.extract_strided_slice %32 {offsets = [0, 48], sizes = [8, 16], strides = [1, 1]} : vector<8x96xf32> to vector<8x16xf32>
    %62 = vector.extract_strided_slice %32 {offsets = [0, 80], sizes = [8, 16], strides = [1, 1]} : vector<8x96xf32> to vector<8x16xf32>
    %cst_32 = arith.constant dense<0.000000e+00> : vector<8x8xf32>
    %63 = tpu.matmul %60, %61, %cst_32 {dimension_numbers = #tpu.dot_dimension_numbers<[1], [1], [0], [0], [0, 0, 1, 0], [], []>} : vector<8x16xf32>, vector<8x16xf32>, vector<8x8xf32> -> vector<8x8xf32>
    %cst_33 = arith.constant 2.500000e-01 : f32
    %64 = vector.broadcast %cst_33 : f32 to vector<8x8xf32>
    %65 = arith.mulf %63, %64 : vector<8x8xf32>
    %66 = vector.broadcast %3 : vector<1x8xf32> to vector<8x8xf32>
    %67 = arith.addf %65, %66 : vector<8x8xf32>
    %cst_34 = arith.constant dense<0xFF800000> : vector<8xf32>
    %68 = vector.multi_reduction <maximumf>, %67, %cst_34 [1] : vector<8x8xf32> to vector<8xf32>
    %69 = vector.shape_cast %68 : vector<8xf32> to vector<8x1xf32>
    %70 = vector.broadcast %69 : vector<8x1xf32> to vector<8x8xf32>
    %71 = arith.subf %67, %70 : vector<8x8xf32>
    %72 = math.exp %71 : vector<8x8xf32>
    %cst_35 = arith.constant dense<0.000000e+00> : vector<8xf32>
    %73 = vector.multi_reduction <add>, %72, %cst_35 [1] : vector<8x8xf32> to vector<8xf32>
    %74 = vector.shape_cast %73 : vector<8xf32> to vector<8x1xf32>
    %75 = tpu.reciprocal %74 {approx = true} : vector<8x1xf32> -> vector<8x1xf32>
    %76 = vector.broadcast %75 : vector<8x1xf32> to vector<8x8xf32>
    %77 = arith.mulf %72, %76 : vector<8x8xf32>
    %cst_36 = arith.constant dense<0.000000e+00> : vector<8x16xf32>
    %78 = tpu.matmul %77, %62, %cst_36 {dimension_numbers = #tpu.dot_dimension_numbers<[1], [0], [0], [1], [0, 0, 1, 1], [], []>} : vector<8x8xf32>, vector<8x16xf32>, vector<8x16xf32> -> vector<8x16xf32>
    %79 = vector.extract_strided_slice %34 {offsets = [16, 0], sizes = [16, 32], strides = [1, 1]} : vector<32x32xf32> to vector<16x32xf32>
    %cst_37 = arith.constant dense<0.000000e+00> : vector<8x32xf32>
    %80 = tpu.matmul %78, %79, %cst_37 {dimension_numbers = #tpu.dot_dimension_numbers<[1], [0], [0], [1], [0, 0, 1, 1], [], []>} : vector<8x16xf32>, vector<16x32xf32>, vector<8x32xf32> -> vector<8x32xf32>
    %81 = arith.addf %59, %80 : vector<8x32xf32>
    %82 = arith.addf %81, %25 : vector<8x32xf32>
    %c0_38 = arith.constant 0 : index
    %c0_39 = arith.constant 0 : index
    %c0_40 = arith.constant 0 : index
    %83 = vector.load %arg9[%c0_38, %c0_39, %c0_40] : memref<2x1x32xf32, #tpu.memory_space<vmem>>, vector<1x1x32xf32>
    %84 = vector.shape_cast %83 : vector<1x1x32xf32> to vector<1x32xf32>
    %c0_41 = arith.constant 0 : index
    %c0_42 = arith.constant 0 : index
    %c0_43 = arith.constant 0 : index
    %85 = vector.load %arg10[%c0_41, %c0_42, %c0_43] : memref<2x1x32xf32, #tpu.memory_space<vmem>>, vector<1x1x32xf32>
    %86 = vector.shape_cast %85 : vector<1x1x32xf32> to vector<1x32xf32>
    %cst_44 = arith.constant dense<0.000000e+00> : vector<8xf32>
    %87 = vector.multi_reduction <add>, %82, %cst_44 [1] : vector<8x32xf32> to vector<8xf32>
    %88 = vector.shape_cast %87 : vector<8xf32> to vector<8x1xf32>
    %cst_45 = arith.constant 3.200000e+01 : f32
    %89 = vector.broadcast %cst_45 : f32 to vector<8x1xf32>
    %90 = arith.divf %88, %89 : vector<8x1xf32>
    %91 = vector.broadcast %90 : vector<8x1xf32> to vector<8x32xf32>
    %92 = arith.subf %82, %91 : vector<8x32xf32>
    %93 = arith.mulf %92, %92 : vector<8x32xf32>
    %cst_46 = arith.constant dense<0.000000e+00> : vector<8xf32>
    %94 = vector.multi_reduction <add>, %93, %cst_46 [1] : vector<8x32xf32> to vector<8xf32>
    %95 = vector.shape_cast %94 : vector<8xf32> to vector<8x1xf32>
    %cst_47 = arith.constant 3.200000e+01 : f32
    %96 = vector.broadcast %cst_47 : f32 to vector<8x1xf32>
    %97 = arith.divf %95, %96 : vector<8x1xf32>
    %cst_48 = arith.constant 9.99999996E-13 : f32
    %98 = vector.broadcast %cst_48 : f32 to vector<8x1xf32>
    %99 = arith.addf %97, %98 : vector<8x1xf32>
    %100 = math.rsqrt %99 : vector<8x1xf32>
    %101 = vector.broadcast %100 : vector<8x1xf32> to vector<8x32xf32>
    %102 = arith.mulf %92, %101 : vector<8x32xf32>
    %103 = vector.broadcast %84 : vector<1x32xf32> to vector<8x32xf32>
    %104 = arith.mulf %102, %103 : vector<8x32xf32>
    %105 = vector.broadcast %86 : vector<1x32xf32> to vector<8x32xf32>
    %106 = arith.addf %104, %105 : vector<8x32xf32>
    %c0_49 = arith.constant 0 : index
    %c0_50 = arith.constant 0 : index
    %c0_51 = arith.constant 0 : index
    %107 = vector.load %arg11[%c0_49, %c0_50, %c0_51] : memref<2x32x64xf32, #tpu.memory_space<vmem>>, vector<1x32x64xf32>
    %108 = vector.shape_cast %107 : vector<1x32x64xf32> to vector<32x64xf32>
    %cst_52 = arith.constant dense<0.000000e+00> : vector<8x64xf32>
    %109 = tpu.matmul %106, %108, %cst_52 {dimension_numbers = #tpu.dot_dimension_numbers<[1], [0], [0], [1], [0, 0, 1, 1], [], []>} : vector<8x32xf32>, vector<32x64xf32>, vector<8x64xf32> -> vector<8x64xf32>
    %c0_53 = arith.constant 0 : index
    %c0_54 = arith.constant 0 : index
    %c0_55 = arith.constant 0 : index
    %110 = vector.load %arg12[%c0_53, %c0_54, %c0_55] : memref<2x1x64xf32, #tpu.memory_space<vmem>>, vector<1x1x64xf32>
    %111 = vector.shape_cast %110 : vector<1x1x64xf32> to vector<1x64xf32>
    %112 = vector.broadcast %111 : vector<1x64xf32> to vector<8x64xf32>
    %113 = arith.addf %109, %112 : vector<8x64xf32>
    %cst_56 = arith.constant 5.000000e-01 : f32
    %114 = vector.broadcast %cst_56 : f32 to vector<8x64xf32>
    %115 = arith.mulf %114, %113 : vector<8x64xf32>
    %cst_57 = arith.constant 4.471500e-02 : f32
    %116 = vector.broadcast %cst_57 : f32 to vector<8x64xf32>
    %117 = arith.mulf %116, %113 : vector<8x64xf32>
    %118 = arith.mulf %117, %113 : vector<8x64xf32>
    %119 = arith.mulf %118, %113 : vector<8x64xf32>
    %120 = arith.addf %113, %119 : vector<8x64xf32>
    %cst_58 = arith.constant 0.797884583 : f32
    %121 = vector.broadcast %cst_58 : f32 to vector<8x64xf32>
    %122 = arith.mulf %121, %120 : vector<8x64xf32>
    %123 = math.tanh %122 : vector<8x64xf32>
    %cst_59 = arith.constant 1.000000e+00 : f32
    %124 = vector.broadcast %cst_59 : f32 to vector<8x64xf32>
    %125 = arith.addf %124, %123 : vector<8x64xf32>
    %126 = arith.mulf %115, %125 : vector<8x64xf32>
    %c0_60 = arith.constant 0 : index
    %c0_61 = arith.constant 0 : index
    %c0_62 = arith.constant 0 : index
    %127 = vector.load %arg13[%c0_60, %c0_61, %c0_62] : memref<2x64x32xf32, #tpu.memory_space<vmem>>, vector<1x64x32xf32>
    %128 = vector.shape_cast %127 : vector<1x64x32xf32> to vector<64x32xf32>
    %cst_63 = arith.constant dense<0.000000e+00> : vector<8x32xf32>
    %129 = tpu.matmul %126, %128, %cst_63 {dimension_numbers = #tpu.dot_dimension_numbers<[1], [0], [0], [1], [0, 0, 1, 1], [], []>} : vector<8x64xf32>, vector<64x32xf32>, vector<8x32xf32> -> vector<8x32xf32>
    %c0_64 = arith.constant 0 : index
    %c0_65 = arith.constant 0 : index
    %c0_66 = arith.constant 0 : index
    %130 = vector.load %arg14[%c0_64, %c0_65, %c0_66] : memref<2x1x32xf32, #tpu.memory_space<vmem>>, vector<1x1x32xf32>
    %131 = vector.shape_cast %130 : vector<1x1x32xf32> to vector<1x32xf32>
    %132 = vector.broadcast %131 : vector<1x32xf32> to vector<8x32xf32>
    %133 = arith.addf %129, %132 : vector<8x32xf32>
    %134 = arith.addf %133, %106 : vector<8x32xf32>
    %c0_67 = arith.constant 0 : index
    %c0_68 = arith.constant 0 : index
    %c0_69 = arith.constant 0 : index
    %135 = vector.load %arg15[%c0_67, %c0_68, %c0_69] : memref<2x1x32xf32, #tpu.memory_space<vmem>>, vector<1x1x32xf32>
    %136 = vector.shape_cast %135 : vector<1x1x32xf32> to vector<1x32xf32>
    %c0_70 = arith.constant 0 : index
    %c0_71 = arith.constant 0 : index
    %c0_72 = arith.constant 0 : index
    %137 = vector.load %arg16[%c0_70, %c0_71, %c0_72] : memref<2x1x32xf32, #tpu.memory_space<vmem>>, vector<1x1x32xf32>
    %138 = vector.shape_cast %137 : vector<1x1x32xf32> to vector<1x32xf32>
    %cst_73 = arith.constant dense<0.000000e+00> : vector<8xf32>
    %139 = vector.multi_reduction <add>, %134, %cst_73 [1] : vector<8x32xf32> to vector<8xf32>
    %140 = vector.shape_cast %139 : vector<8xf32> to vector<8x1xf32>
    %cst_74 = arith.constant 3.200000e+01 : f32
    %141 = vector.broadcast %cst_74 : f32 to vector<8x1xf32>
    %142 = arith.divf %140, %141 : vector<8x1xf32>
    %143 = vector.broadcast %142 : vector<8x1xf32> to vector<8x32xf32>
    %144 = arith.subf %134, %143 : vector<8x32xf32>
    %145 = arith.mulf %144, %144 : vector<8x32xf32>
    %cst_75 = arith.constant dense<0.000000e+00> : vector<8xf32>
    %146 = vector.multi_reduction <add>, %145, %cst_75 [1] : vector<8x32xf32> to vector<8xf32>
    %147 = vector.shape_cast %146 : vector<8xf32> to vector<8x1xf32>
    %cst_76 = arith.constant 3.200000e+01 : f32
    %148 = vector.broadcast %cst_76 : f32 to vector<8x1xf32>
    %149 = arith.divf %147, %148 : vector<8x1xf32>
    %cst_77 = arith.constant 9.99999996E-13 : f32
    %150 = vector.broadcast %cst_77 : f32 to vector<8x1xf32>
    %151 = arith.addf %149, %150 : vector<8x1xf32>
    %152 = math.rsqrt %151 : vector<8x1xf32>
    %153 = vector.broadcast %152 : vector<8x1xf32> to vector<8x32xf32>
    %154 = arith.mulf %144, %153 : vector<8x32xf32>
    %155 = vector.broadcast %136 : vector<1x32xf32> to vector<8x32xf32>
    %156 = arith.mulf %154, %155 : vector<8x32xf32>
    %157 = vector.broadcast %138 : vector<1x32xf32> to vector<8x32xf32>
    %158 = arith.addf %156, %157 : vector<8x32xf32>
    %c1 = arith.constant 1 : index
    %c0_78 = arith.constant 0 : index
    %c0_79 = arith.constant 0 : index
    %159 = vector.load %arg5[%c1, %c0_78, %c0_79] : memref<2x32x96xf32, #tpu.memory_space<vmem>>, vector<1x32x96xf32>
    %160 = vector.shape_cast %159 : vector<1x32x96xf32> to vector<32x96xf32>
    %cst_80 = arith.constant dense<0.000000e+00> : vector<8x96xf32>
    %161 = tpu.matmul %158, %160, %cst_80 {dimension_numbers = #tpu.dot_dimension_numbers<[1], [0], [0], [1], [0, 0, 1, 1], [], []>} : vector<8x32xf32>, vector<32x96xf32>, vector<8x96xf32> -> vector<8x96xf32>
    %c1_81 = arith.constant 1 : index
    %c0_82 = arith.constant 0 : index
    %c0_83 = arith.constant 0 : index
    %162 = vector.load %arg6[%c1_81, %c0_82, %c0_83] : memref<2x1x96xf32, #tpu.memory_space<vmem>>, vector<1x1x96xf32>
    %163 = vector.shape_cast %162 : vector<1x1x96xf32> to vector<1x96xf32>
    %164 = vector.broadcast %163 : vector<1x96xf32> to vector<8x96xf32>
    %165 = arith.addf %161, %164 : vector<8x96xf32>
    %c1_84 = arith.constant 1 : index
    %c0_85 = arith.constant 0 : index
    %c0_86 = arith.constant 0 : index
    %166 = vector.load %arg7[%c1_84, %c0_85, %c0_86] : memref<2x32x32xf32, #tpu.memory_space<vmem>>, vector<1x32x32xf32>
    %167 = vector.shape_cast %166 : vector<1x32x32xf32> to vector<32x32xf32>
    %c1_87 = arith.constant 1 : index
    %c0_88 = arith.constant 0 : index
    %c0_89 = arith.constant 0 : index
    %168 = vector.load %arg8[%c1_87, %c0_88, %c0_89] : memref<2x1x32xf32, #tpu.memory_space<vmem>>, vector<1x1x32xf32>
    %169 = vector.shape_cast %168 : vector<1x1x32xf32> to vector<1x32xf32>
    %170 = vector.extract_strided_slice %165 {offsets = [0, 0], sizes = [8, 16], strides = [1, 1]} : vector<8x96xf32> to vector<8x16xf32>
    %171 = vector.extract_strided_slice %165 {offsets = [0, 32], sizes = [8, 16], strides = [1, 1]} : vector<8x96xf32> to vector<8x16xf32>
    %172 = vector.extract_strided_slice %165 {offsets = [0, 64], sizes = [8, 16], strides = [1, 1]} : vector<8x96xf32> to vector<8x16xf32>
    %cst_90 = arith.constant dense<0.000000e+00> : vector<8x8xf32>
    %173 = tpu.matmul %170, %171, %cst_90 {dimension_numbers = #tpu.dot_dimension_numbers<[1], [1], [0], [0], [0, 0, 1, 0], [], []>} : vector<8x16xf32>, vector<8x16xf32>, vector<8x8xf32> -> vector<8x8xf32>
    %cst_91 = arith.constant 2.500000e-01 : f32
    %174 = vector.broadcast %cst_91 : f32 to vector<8x8xf32>
    %175 = arith.mulf %173, %174 : vector<8x8xf32>
    %176 = vector.broadcast %3 : vector<1x8xf32> to vector<8x8xf32>
    %177 = arith.addf %175, %176 : vector<8x8xf32>
    %cst_92 = arith.constant dense<0xFF800000> : vector<8xf32>
    %178 = vector.multi_reduction <maximumf>, %177, %cst_92 [1] : vector<8x8xf32> to vector<8xf32>
    %179 = vector.shape_cast %178 : vector<8xf32> to vector<8x1xf32>
    %180 = vector.broadcast %179 : vector<8x1xf32> to vector<8x8xf32>
    %181 = arith.subf %177, %180 : vector<8x8xf32>
    %182 = math.exp %181 : vector<8x8xf32>
    %cst_93 = arith.constant dense<0.000000e+00> : vector<8xf32>
    %183 = vector.multi_reduction <add>, %182, %cst_93 [1] : vector<8x8xf32> to vector<8xf32>
    %184 = vector.shape_cast %183 : vector<8xf32> to vector<8x1xf32>
    %185 = tpu.reciprocal %184 {approx = true} : vector<8x1xf32> -> vector<8x1xf32>
    %186 = vector.broadcast %185 : vector<8x1xf32> to vector<8x8xf32>
    %187 = arith.mulf %182, %186 : vector<8x8xf32>
    %cst_94 = arith.constant dense<0.000000e+00> : vector<8x16xf32>
    %188 = tpu.matmul %187, %172, %cst_94 {dimension_numbers = #tpu.dot_dimension_numbers<[1], [0], [0], [1], [0, 0, 1, 1], [], []>} : vector<8x8xf32>, vector<8x16xf32>, vector<8x16xf32> -> vector<8x16xf32>
    %189 = vector.extract_strided_slice %167 {offsets = [0, 0], sizes = [16, 32], strides = [1, 1]} : vector<32x32xf32> to vector<16x32xf32>
    %cst_95 = arith.constant dense<0.000000e+00> : vector<8x32xf32>
    %190 = tpu.matmul %188, %189, %cst_95 {dimension_numbers = #tpu.dot_dimension_numbers<[1], [0], [0], [1], [0, 0, 1, 1], [], []>} : vector<8x16xf32>, vector<16x32xf32>, vector<8x32xf32> -> vector<8x32xf32>
    %191 = vector.broadcast %169 : vector<1x32xf32> to vector<8x32xf32>
    %192 = arith.addf %191, %190 : vector<8x32xf32>
    %193 = vector.extract_strided_slice %165 {offsets = [0, 16], sizes = [8, 16], strides = [1, 1]} : vector<8x96xf32> to vector<8x16xf32>
    %194 = vector.extract_strided_slice %165 {offsets = [0, 48], sizes = [8, 16], strides = [1, 1]} : vector<8x96xf32> to vector<8x16xf32>
    %195 = vector.extract_strided_slice %165 {offsets = [0, 80], sizes = [8, 16], strides = [1, 1]} : vector<8x96xf32> to vector<8x16xf32>
    %cst_96 = arith.constant dense<0.000000e+00> : vector<8x8xf32>
    %196 = tpu.matmul %193, %194, %cst_96 {dimension_numbers = #tpu.dot_dimension_numbers<[1], [1], [0], [0], [0, 0, 1, 0], [], []>} : vector<8x16xf32>, vector<8x16xf32>, vector<8x8xf32> -> vector<8x8xf32>
    %cst_97 = arith.constant 2.500000e-01 : f32
    %197 = vector.broadcast %cst_97 : f32 to vector<8x8xf32>
    %198 = arith.mulf %196, %197 : vector<8x8xf32>
    %199 = vector.broadcast %3 : vector<1x8xf32> to vector<8x8xf32>
    %200 = arith.addf %198, %199 : vector<8x8xf32>
    %cst_98 = arith.constant dense<0xFF800000> : vector<8xf32>
    %201 = vector.multi_reduction <maximumf>, %200, %cst_98 [1] : vector<8x8xf32> to vector<8xf32>
    %202 = vector.shape_cast %201 : vector<8xf32> to vector<8x1xf32>
    %203 = vector.broadcast %202 : vector<8x1xf32> to vector<8x8xf32>
    %204 = arith.subf %200, %203 : vector<8x8xf32>
    %205 = math.exp %204 : vector<8x8xf32>
    %cst_99 = arith.constant dense<0.000000e+00> : vector<8xf32>
    %206 = vector.multi_reduction <add>, %205, %cst_99 [1] : vector<8x8xf32> to vector<8xf32>
    %207 = vector.shape_cast %206 : vector<8xf32> to vector<8x1xf32>
    %208 = tpu.reciprocal %207 {approx = true} : vector<8x1xf32> -> vector<8x1xf32>
    %209 = vector.broadcast %208 : vector<8x1xf32> to vector<8x8xf32>
    %210 = arith.mulf %205, %209 : vector<8x8xf32>
    %cst_100 = arith.constant dense<0.000000e+00> : vector<8x16xf32>
    %211 = tpu.matmul %210, %195, %cst_100 {dimension_numbers = #tpu.dot_dimension_numbers<[1], [0], [0], [1], [0, 0, 1, 1], [], []>} : vector<8x8xf32>, vector<8x16xf32>, vector<8x16xf32> -> vector<8x16xf32>
    %212 = vector.extract_strided_slice %167 {offsets = [16, 0], sizes = [16, 32], strides = [1, 1]} : vector<32x32xf32> to vector<16x32xf32>
    %cst_101 = arith.constant dense<0.000000e+00> : vector<8x32xf32>
    %213 = tpu.matmul %211, %212, %cst_101 {dimension_numbers = #tpu.dot_dimension_numbers<[1], [0], [0], [1], [0, 0, 1, 1], [], []>} : vector<8x16xf32>, vector<16x32xf32>, vector<8x32xf32> -> vector<8x32xf32>
    %214 = arith.addf %192, %213 : vector<8x32xf32>
    %215 = arith.addf %214, %158 : vector<8x32xf32>
    %c1_102 = arith.constant 1 : index
    %c0_103 = arith.constant 0 : index
    %c0_104 = arith.constant 0 : index
    %216 = vector.load %arg9[%c1_102, %c0_103, %c0_104] : memref<2x1x32xf32, #tpu.memory_space<vmem>>, vector<1x1x32xf32>
    %217 = vector.shape_cast %216 : vector<1x1x32xf32> to vector<1x32xf32>
    %c1_105 = arith.constant 1 : index
    %c0_106 = arith.constant 0 : index
    %c0_107 = arith.constant 0 : index
    %218 = vector.load %arg10[%c1_105, %c0_106, %c0_107] : memref<2x1x32xf32, #tpu.memory_space<vmem>>, vector<1x1x32xf32>
    %219 = vector.shape_cast %218 : vector<1x1x32xf32> to vector<1x32xf32>
    %cst_108 = arith.constant dense<0.000000e+00> : vector<8xf32>
    %220 = vector.multi_reduction <add>, %215, %cst_108 [1] : vector<8x32xf32> to vector<8xf32>
    %221 = vector.shape_cast %220 : vector<8xf32> to vector<8x1xf32>
    %cst_109 = arith.constant 3.200000e+01 : f32
    %222 = vector.broadcast %cst_109 : f32 to vector<8x1xf32>
    %223 = arith.divf %221, %222 : vector<8x1xf32>
    %224 = vector.broadcast %223 : vector<8x1xf32> to vector<8x32xf32>
    %225 = arith.subf %215, %224 : vector<8x32xf32>
    %226 = arith.mulf %225, %225 : vector<8x32xf32>
    %cst_110 = arith.constant dense<0.000000e+00> : vector<8xf32>
    %227 = vector.multi_reduction <add>, %226, %cst_110 [1] : vector<8x32xf32> to vector<8xf32>
    %228 = vector.shape_cast %227 : vector<8xf32> to vector<8x1xf32>
    %cst_111 = arith.constant 3.200000e+01 : f32
    %229 = vector.broadcast %cst_111 : f32 to vector<8x1xf32>
    %230 = arith.divf %228, %229 : vector<8x1xf32>
    %cst_112 = arith.constant 9.99999996E-13 : f32
    %231 = vector.broadcast %cst_112 : f32 to vector<8x1xf32>
    %232 = arith.addf %230, %231 : vector<8x1xf32>
    %233 = math.rsqrt %232 : vector<8x1xf32>
    %234 = vector.broadcast %233 : vector<8x1xf32> to vector<8x32xf32>
    %235 = arith.mulf %225, %234 : vector<8x32xf32>
    %236 = vector.broadcast %217 : vector<1x32xf32> to vector<8x32xf32>
    %237 = arith.mulf %235, %236 : vector<8x32xf32>
    %238 = vector.broadcast %219 : vector<1x32xf32> to vector<8x32xf32>
    %239 = arith.addf %237, %238 : vector<8x32xf32>
    %c1_113 = arith.constant 1 : index
    %c0_114 = arith.constant 0 : index
    %c0_115 = arith.constant 0 : index
    %240 = vector.load %arg11[%c1_113, %c0_114, %c0_115] : memref<2x32x64xf32, #tpu.memory_space<vmem>>, vector<1x32x64xf32>
    %241 = vector.shape_cast %240 : vector<1x32x64xf32> to vector<32x64xf32>
    %cst_116 = arith.constant dense<0.000000e+00> : vector<8x64xf32>
    %242 = tpu.matmul %239, %241, %cst_116 {dimension_numbers = #tpu.dot_dimension_numbers<[1], [0], [0], [1], [0, 0, 1, 1], [], []>} : vector<8x32xf32>, vector<32x64xf32>, vector<8x64xf32> -> vector<8x64xf32>
    %c1_117 = arith.constant 1 : index
    %c0_118 = arith.constant 0 : index
    %c0_119 = arith.constant 0 : index
    %243 = vector.load %arg12[%c1_117, %c0_118, %c0_119] : memref<2x1x64xf32, #tpu.memory_space<vmem>>, vector<1x1x64xf32>
    %244 = vector.shape_cast %243 : vector<1x1x64xf32> to vector<1x64xf32>
    %245 = vector.broadcast %244 : vector<1x64xf32> to vector<8x64xf32>
    %246 = arith.addf %242, %245 : vector<8x64xf32>
    %cst_120 = arith.constant 5.000000e-01 : f32
    %247 = vector.broadcast %cst_120 : f32 to vector<8x64xf32>
    %248 = arith.mulf %247, %246 : vector<8x64xf32>
    %cst_121 = arith.constant 4.471500e-02 : f32
    %249 = vector.broadcast %cst_121 : f32 to vector<8x64xf32>
    %250 = arith.mulf %249, %246 : vector<8x64xf32>
    %251 = arith.mulf %250, %246 : vector<8x64xf32>
    %252 = arith.mulf %251, %246 : vector<8x64xf32>
    %253 = arith.addf %246, %252 : vector<8x64xf32>
    %cst_122 = arith.constant 0.797884583 : f32
    %254 = vector.broadcast %cst_122 : f32 to vector<8x64xf32>
    %255 = arith.mulf %254, %253 : vector<8x64xf32>
    %256 = math.tanh %255 : vector<8x64xf32>
    %cst_123 = arith.constant 1.000000e+00 : f32
    %257 = vector.broadcast %cst_123 : f32 to vector<8x64xf32>
    %258 = arith.addf %257, %256 : vector<8x64xf32>
    %259 = arith.mulf %248, %258 : vector<8x64xf32>
    %c1_124 = arith.constant 1 : index
    %c0_125 = arith.constant 0 : index
    %c0_126 = arith.constant 0 : index
    %260 = vector.load %arg13[%c1_124, %c0_125, %c0_126] : memref<2x64x32xf32, #tpu.memory_space<vmem>>, vector<1x64x32xf32>
    %261 = vector.shape_cast %260 : vector<1x64x32xf32> to vector<64x32xf32>
    %cst_127 = arith.constant dense<0.000000e+00> : vector<8x32xf32>
    %262 = tpu.matmul %259, %261, %cst_127 {dimension_numbers = #tpu.dot_dimension_numbers<[1], [0], [0], [1], [0, 0, 1, 1], [], []>} : vector<8x64xf32>, vector<64x32xf32>, vector<8x32xf32> -> vector<8x32xf32>
    %c1_128 = arith.constant 1 : index
    %c0_129 = arith.constant 0 : index
    %c0_130 = arith.constant 0 : index
    %263 = vector.load %arg14[%c1_128, %c0_129, %c0_130] : memref<2x1x32xf32, #tpu.memory_space<vmem>>, vector<1x1x32xf32>
    %264 = vector.shape_cast %263 : vector<1x1x32xf32> to vector<1x32xf32>
    %265 = vector.broadcast %264 : vector<1x32xf32> to vector<8x32xf32>
    %266 = arith.addf %262, %265 : vector<8x32xf32>
    %267 = arith.addf %266, %239 : vector<8x32xf32>
    %c1_131 = arith.constant 1 : index
    %c0_132 = arith.constant 0 : index
    %c0_133 = arith.constant 0 : index
    %268 = vector.load %arg15[%c1_131, %c0_132, %c0_133] : memref<2x1x32xf32, #tpu.memory_space<vmem>>, vector<1x1x32xf32>
    %269 = vector.shape_cast %268 : vector<1x1x32xf32> to vector<1x32xf32>
    %c1_134 = arith.constant 1 : index
    %c0_135 = arith.constant 0 : index
    %c0_136 = arith.constant 0 : index
    %270 = vector.load %arg16[%c1_134, %c0_135, %c0_136] : memref<2x1x32xf32, #tpu.memory_space<vmem>>, vector<1x1x32xf32>
    %271 = vector.shape_cast %270 : vector<1x1x32xf32> to vector<1x32xf32>
    %cst_137 = arith.constant dense<0.000000e+00> : vector<8xf32>
    %272 = vector.multi_reduction <add>, %267, %cst_137 [1] : vector<8x32xf32> to vector<8xf32>
    %273 = vector.shape_cast %272 : vector<8xf32> to vector<8x1xf32>
    %cst_138 = arith.constant 3.200000e+01 : f32
    %274 = vector.broadcast %cst_138 : f32 to vector<8x1xf32>
    %275 = arith.divf %273, %274 : vector<8x1xf32>
    %276 = vector.broadcast %275 : vector<8x1xf32> to vector<8x32xf32>
    %277 = arith.subf %267, %276 : vector<8x32xf32>
    %278 = arith.mulf %277, %277 : vector<8x32xf32>
    %cst_139 = arith.constant dense<0.000000e+00> : vector<8xf32>
    %279 = vector.multi_reduction <add>, %278, %cst_139 [1] : vector<8x32xf32> to vector<8xf32>
    %280 = vector.shape_cast %279 : vector<8xf32> to vector<8x1xf32>
    %cst_140 = arith.constant 3.200000e+01 : f32
    %281 = vector.broadcast %cst_140 : f32 to vector<8x1xf32>
    %282 = arith.divf %280, %281 : vector<8x1xf32>
    %cst_141 = arith.constant 9.99999996E-13 : f32
    %283 = vector.broadcast %cst_141 : f32 to vector<8x1xf32>
    %284 = arith.addf %282, %283 : vector<8x1xf32>
    %285 = math.rsqrt %284 : vector<8x1xf32>
    %286 = vector.broadcast %285 : vector<8x1xf32> to vector<8x32xf32>
    %287 = arith.mulf %277, %286 : vector<8x32xf32>
    %288 = vector.broadcast %269 : vector<1x32xf32> to vector<8x32xf32>
    %289 = arith.mulf %287, %288 : vector<8x32xf32>
    %290 = vector.broadcast %271 : vector<1x32xf32> to vector<8x32xf32>
    %291 = arith.addf %289, %290 : vector<8x32xf32>
    %cst_142 = arith.constant dense<0.000000e+00> : vector<32xf32>
    %292 = vector.multi_reduction <add>, %291, %cst_142 [0] : vector<8x32xf32> to vector<32xf32>
    %293 = vector.shape_cast %292 : vector<32xf32> to vector<1x32xf32>
    %cst_143 = arith.constant 8.000000e+00 : f32
    %294 = vector.broadcast %cst_143 : f32 to vector<1x32xf32>
    %295 = arith.divf %293, %294 : vector<1x32xf32>
    %c0_144 = arith.constant 0 : index
    %c0_145 = arith.constant 0 : index
    %296 = vector.load %arg17[%c0_144, %c0_145] : memref<32x12xf32, #tpu.memory_space<vmem>>, vector<32x12xf32>
    %cst_146 = arith.constant dense<0.000000e+00> : vector<1x12xf32>
    %297 = tpu.matmul %295, %296, %cst_146 {dimension_numbers = #tpu.dot_dimension_numbers<[1], [0], [0], [1], [0, 0, 1, 1], [], []>} : vector<1x32xf32>, vector<32x12xf32>, vector<1x12xf32> -> vector<1x12xf32>
    %c0_147 = arith.constant 0 : index
    %c0_148 = arith.constant 0 : index
    %298 = vector.load %arg18[%c0_147, %c0_148] : memref<1x12xf32, #tpu.memory_space<vmem>>, vector<1x12xf32>
    %299 = arith.addf %297, %298 : vector<1x12xf32>
    %c0_149 = arith.constant 0 : index
    %c0_150 = arith.constant 0 : index
    %c0_151 = arith.constant 0 : index
    %300 = vector.load %arg19[%c0_149, %c0_150, %c0_151] : memref<1x1x12xf32, #tpu.memory_space<vmem>>, vector<1x1x12xf32>
    %301 = vector.shape_cast %300 : vector<1x1x12xf32> to vector<1x12xf32>
    %302 = vector.shape_cast %299 : vector<1x12xf32> to vector<1x1x12xf32>
    tpu.vector_store %arg19[%c0_149, %c0_150, %c0_151], %302 {strides = array<i32>} : memref<1x1x12xf32, #tpu.memory_space<vmem>>, vector<1x1x12xf32>,
    return
  }
  func.func @transform_0(%arg0: i32) -> (i32, i32, i32) {
    %c0_i32 = arith.constant 0 : i32
    %c0_i32_0 = arith.constant 0 : i32
    %c0_i32_1 = arith.constant 0 : i32
    return %arg0, %c0_i32, %c0_i32_0 : i32, i32, i32
  }
  func.func @transform_1(%arg0: i32) -> (i32, i32, i32) {
    %c0_i32 = arith.constant 0 : i32
    %c0_i32_0 = arith.constant 0 : i32
    %c0_i32_1 = arith.constant 0 : i32
    return %arg0, %c0_i32, %c0_i32_0 : i32, i32, i32
  }
  func.func @transform_2(%arg0: i32) -> (i32, i32) {
    %c0_i32 = arith.constant 0 : i32
    %c0_i32_0 = arith.constant 0 : i32
    %c0_i32_1 = arith.constant 0 : i32
    return %c0_i32, %c0_i32_0 : i32, i32
  }
  func.func @transform_3(%arg0: i32) -> (i32, i32) {
    %c0_i32 = arith.constant 0 : i32
    %c0_i32_0 = arith.constant 0 : i32
    %c0_i32_1 = arith.constant 0 : i32
    return %c0_i32, %c0_i32_0 : i32, i32
  }
  func.func @transform_4(%arg0: i32) -> (i32, i32, i32) {
    %c0_i32 = arith.constant 0 : i32
    %c0_i32_0 = arith.constant 0 : i32
    %c0_i32_1 = arith.constant 0 : i32
    %c0_i32_2 = arith.constant 0 : i32
    return %c0_i32, %c0_i32_0, %c0_i32_1 : i32, i32, i32
  }
  func.func @transform_5(%arg0: i32) -> (i32, i32, i32) {
    %c0_i32 = arith.constant 0 : i32
    %c0_i32_0 = arith.constant 0 : i32
    %c0_i32_1 = arith.constant 0 : i32
    %c0_i32_2 = arith.constant 0 : i32
    return %c0_i32, %c0_i32_0, %c0_i32_1 : i32, i32, i32
  }
  func.func @transform_6(%arg0: i32) -> (i32, i32, i32) {
    %c0_i32 = arith.constant 0 : i32
    %c0_i32_0 = arith.constant 0 : i32
    %c0_i32_1 = arith.constant 0 : i32
    %c0_i32_2 = arith.constant 0 : i32
    return %c0_i32, %c0_i32_0, %c0_i32_1 : i32, i32, i32
  }
  func.func @transform_7(%arg0: i32) -> (i32, i32, i32) {
    %c0_i32 = arith.constant 0 : i32
    %c0_i32_0 = arith.constant 0 : i32
    %c0_i32_1 = arith.constant 0 : i32
    %c0_i32_2 = arith.constant 0 : i32
    return %c0_i32, %c0_i32_0, %c0_i32_1 : i32, i32, i32
  }
  func.func @transform_8(%arg0: i32) -> (i32, i32, i32) {
    %c0_i32 = arith.constant 0 : i32
    %c0_i32_0 = arith.constant 0 : i32
    %c0_i32_1 = arith.constant 0 : i32
    %c0_i32_2 = arith.constant 0 : i32
    return %c0_i32, %c0_i32_0, %c0_i32_1 : i32, i32, i32
  }
  func.func @transform_9(%arg0: i32) -> (i32, i32, i32) {
    %c0_i32 = arith.constant 0 : i32
    %c0_i32_0 = arith.constant 0 : i32
    %c0_i32_1 = arith.constant 0 : i32
    %c0_i32_2 = arith.constant 0 : i32
    return %c0_i32, %c0_i32_0, %c0_i32_1 : i32, i32, i32
  }
  func.func @transform_10(%arg0: i32) -> (i32, i32, i32) {
    %c0_i32 = arith.constant 0 : i32
    %c0_i32_0 = arith.constant 0 : i32
    %c0_i32_1 = arith.constant 0 : i32
    %c0_i32_2 = arith.constant 0 : i32
    return %c0_i32, %c0_i32_0, %c0_i32_1 : i32, i32, i32
  }
  func.func @transform_11(%arg0: i32) -> (i32, i32, i32) {
    %c0_i32 = arith.constant 0 : i32
    %c0_i32_0 = arith.constant 0 : i32
    %c0_i32_1 = arith.constant 0 : i32
    %c0_i32_2 = arith.constant 0 : i32
    return %c0_i32, %c0_i32_0, %c0_i32_1 : i32, i32, i32
  }
  func.func @transform_12(%arg0: i32) -> (i32, i32, i32) {
    %c0_i32 = arith.constant 0 : i32
    %c0_i32_0 = arith.constant 0 : i32
    %c0_i32_1 = arith.constant 0 : i32
    %c0_i32_2 = arith.constant 0 : i32
    return %c0_i32, %c0_i32_0, %c0_i32_1 : i32, i32, i32
  }
  func.func @transform_13(%arg0: i32) -> (i32, i32, i32) {
    %c0_i32 = arith.constant 0 : i32
    %c0_i32_0 = arith.constant 0 : i32
    %c0_i32_1 = arith.constant 0 : i32
    %c0_i32_2 = arith.constant 0 : i32
    return %c0_i32, %c0_i32_0, %c0_i32_1 : i32, i32, i32
  }
  func.func @transform_14(%arg0: i32) -> (i32, i32, i32) {
    %c0_i32 = arith.constant 0 : i32
    %c0_i32_0 = arith.constant 0 : i32
    %c0_i32_1 = arith.constant 0 : i32
    %c0_i32_2 = arith.constant 0 : i32
    return %c0_i32, %c0_i32_0, %c0_i32_1 : i32, i32, i32
  }
  func.func @transform_15(%arg0: i32) -> (i32, i32, i32) {
    %c0_i32 = arith.constant 0 : i32
    %c0_i32_0 = arith.constant 0 : i32
    %c0_i32_1 = arith.constant 0 : i32
    %c0_i32_2 = arith.constant 0 : i32
    return %c0_i32, %c0_i32_0, %c0_i32_1 : i32, i32, i32
  }
  func.func @transform_16(%arg0: i32) -> (i32, i32) {
    %c0_i32 = arith.constant 0 : i32
    %c0_i32_0 = arith.constant 0 : i32
    %c0_i32_1 = arith.constant 0 : i32
    return %c0_i32, %c0_i32_0 : i32, i32
  }
  func.func @transform_17(%arg0: i32) -> (i32, i32) {
    %c0_i32 = arith.constant 0 : i32
    %c0_i32_0 = arith.constant 0 : i32
    %c0_i32_1 = arith.constant 0 : i32
    return %c0_i32, %c0_i32_0 : i32, i32
  }
  func.func @transform_18(%arg0: i32) -> (i32, i32, i32) {
    %c0_i32 = arith.constant 0 : i32
    %c0_i32_0 = arith.constant 0 : i32
    %c0_i32_1 = arith.constant 0 : i32
    return %arg0, %c0_i32, %c0_i32_0 : i32, i32, i32
  }
}

</mosaic_0001>

<llo_original>
// kernel: tpu_custom_call.1
$region0: #{tpu_custom_call.1}
  #allocation0 [shape = 'u32[]', space=smem, size = 0x4, offset = 0x4, fixed_abs, tag = 'smem constant byte address 0x4 - core index']
  #allocation1 [shape = 'u32[144,128]{1,0:T(1,128)}', space=vmem, size = 0x12000, scoped, tag = 'internal scratch']
  %s0 = inlined_call_operand.hbm [shape: f32[2,8,32], index: 0, kind: input, shape index: {}]
  %s1 = inlined_call_operand.vmem [shape: f32[2,1,8], index: 1, kind: input, shape index: {}]
  %s2 = inlined_call_operand.vmem [shape: f32[1,32], index: 2, kind: input, shape index: {}]
  %s3 = inlined_call_operand.hbm [shape: f32[1,32], index: 3, kind: input, shape index: {}]
  %s4 = inlined_call_operand.vmem [shape: f32[2,32,96], index: 4, kind: input, shape index: {}]
  %s5 = inlined_call_operand.vmem [shape: f32[2,1,96], index: 5, kind: input, shape index: {}]
  %s6 = inlined_call_operand.vmem [shape: f32[2,32,32], index: 6, kind: input, shape index: {}]
  %s7 = inlined_call_operand.hbm [shape: f32[2,1,32], index: 7, kind: input, shape index: {}]
  %s8 = inlined_call_operand.hbm [shape: f32[2,1,32], index: 8, kind: input, shape index: {}]
  %s9 = inlined_call_operand.hbm [shape: f32[2,1,32], index: 9, kind: input, shape index: {}]
  %s10 = inlined_call_operand.vmem [shape: f32[2,32,64], index: 10, kind: input, shape index: {}]
  %s11 = inlined_call_operand.hbm [shape: f32[2,1,64], index: 11, kind: input, shape index: {}]
  %s12 = inlined_call_operand.vmem [shape: f32[2,64,32], index: 12, kind: input, shape index: {}]
  %s13 = inlined_call_operand.hbm [shape: f32[2,1,32], index: 13, kind: input, shape index: {}]
  %s14 = inlined_call_operand.vmem [shape: f32[2,1,32], index: 14, kind: input, shape index: {}]
  %s15 = inlined_call_operand.vmem [shape: f32[2,1,32], index: 15, kind: input, shape index: {}]
  %s16 = inlined_call_operand.vmem [shape: f32[32,12], index: 16, kind: input, shape index: {}]
  %s17 = inlined_call_operand.vmem [shape: f32[1,12], index: 17, kind: input, shape index: {}]
  %s18 = inlined_call_operand.hbm [shape: f32[2,1,12], index: 18, kind: output, shape index: {}]
  %s19 = sld [smem:[#allocation0]]
  $region133: #{tpu_custom_call.1} parent=0
    _
  %s21 = ssub.s32 1, %s19
  %s22 = scalar_select 0, %s21, %s19
  $region1: #{tpu_custom_call.1} parent=0
    #allocation2 [shape = 'u8[8192]{0}', space=vmem, size = 0x2000, scoped, tag = 'input window, operand 0']
    #allocation3 [shape = 's32[2]{0}', space=sflag, size = 0x8, scoped, tag = 'scoped memory for tpu_custom_call.1']
    #allocation4 [shape = 's32[2]{0}', space=sflag, size = 0x8, scoped, tag = 'scoped memory for tpu_custom_call.1']
    #allocation5 [shape = 'u8[512]{0}', space=vmem, size = 0x400, scoped, tag = 'input window, operand 3, single buffered']
    #allocation6 [shape = 's32[1]{0}', space=sflag, size = 0x4, scoped, tag = 'scoped memory for tpu_custom_call.1']
    #allocation7 [shape = 'u8[1024]{0}', space=vmem, size = 0x400, scoped, tag = 'input window, operand 7, single buffered']
    #allocation8 [shape = 'u8[1024]{0}', space=vmem, size = 0x400, scoped, tag = 'input window, operand 8, single buffered']
    #allocation9 [shape = 's32[1]{0}', space=sflag, size = 0x4, scoped, tag = 'scoped memory for tpu_custom_call.1']
    #allocation10 [shape = 'u8[1024]{0}', space=vmem, size = 0x400, scoped, tag = 'input window, operand 9, single buffered']
    #allocation11 [shape = 'u8[1024]{0}', space=vmem, size = 0x400, scoped, tag = 'input window, operand 11, single buffered']
    #allocation12 [shape = 's32[1]{0}', space=sflag, size = 0x4, scoped, tag = 'scoped memory for tpu_custom_call.1']
    #allocation13 [shape = 'u8[1024]{0}', space=vmem, size = 0x400, scoped, tag = 'input window, operand 13, single buffered']
    #allocation14 [shape = 'u8[1024]{0}', space=vmem, size = 0x400, scoped, tag = 'output window, operand 0']
    %23 = vsyncpa [#allocation3], 0
    %s24 = scalar_lea.sflag [#allocation3], 1
    %25 = vsyncpa %s24, 0
    %26 = vsyncpa [#allocation6], 0
    %27 = vsyncpa [#allocation9], 0
    %28 = vsyncpa [#allocation12], 0
    %29 = vsyncpa [#allocation4], 0
    %s30 = scalar_lea.sflag [#allocation4], 1
    %31 = vsyncpa %s30, 0
    loop: start=0, step=1, limit=4
    $region2: #{tpu_custom_call.1} parent=1 // loop_pre_header
      _
    $region3: #{tpu_custom_call.1} parent=1 // loop_header
      %s33 = sphi 0, %s37
      %p34 = scmp.ge.s32.totalorder %s33, 4
      %s43 = sphi 0, %s45
      %s46 = sphi 0, %s43
      %s47 = sphi 0, %s46
      %s63 = sphi 0, %s47
      %s69 = sphi 0, %s71
      %s72 = sphi 0, %s69
      %s73 = sphi 0, %s72
      %s89 = sphi 0, %s73
      %s93 = sphi 0, %s93
      %s95 = sphi 0, %s93
      %s96 = sphi 0, %s95
      %s110 = sphi 0, %s96
      %s114 = sphi 0, %s114
      %s116 = sphi 0, %s114
      %s117 = sphi 0, %s116
      %s131 = sphi 0, %s117
      %s135 = sphi 0, %s135
      %s137 = sphi 0, %s135
      %s138 = sphi 0, %s137
      %s152 = sphi 0, %s138
      %s156 = sphi 0, %s156
      %s158 = sphi 0, %s156
      %s159 = sphi 0, %s158
      %s173 = sphi 0, %s159
      %s177 = sphi 0, %s177
      %s179 = sphi 0, %s177
      %s180 = sphi 0, %s179
      %s194 = sphi 0, %s180
      %s198 = sphi 0, %s198
      %s200 = sphi 0, %s198
      %s201 = sphi 0, %s200
      %s215 = sphi 0, %s201
      %s219 = sphi 0, %s219
      %s221 = sphi 0, %s219
      %s222 = sphi 0, %s221
      %s236 = sphi 0, %s222
      %s240 = sphi 0, %s240
      %s242 = sphi 0, %s240
      %s243 = sphi 0, %s242
      %s257 = sphi 0, %s243
      %s261 = sphi 0, %s261
      %s263 = sphi 0, %s261
      %s264 = sphi 0, %s263
      %s278 = sphi 0, %s264
      %s282 = sphi 0, %s282
      %s284 = sphi 0, %s282
      %s285 = sphi 0, %s284
      %s299 = sphi 0, %s285
      %s303 = sphi 0, %s303
      %s305 = sphi 0, %s303
      %s306 = sphi 0, %s305
      %s320 = sphi 0, %s306
      %s324 = sphi 0, %s324
      %s326 = sphi 0, %s324
      %s327 = sphi 0, %s326
      %s341 = sphi 0, %s327
      %s345 = sphi 0, %s345
      %s347 = sphi 0, %s345
      %s348 = sphi 0, %s347
      %s362 = sphi 0, %s348
      %s366 = sphi 0, %s366
      %s368 = sphi 0, %s366
      %s369 = sphi 0, %s368
      %s383 = sphi 0, %s369
      %s387 = sphi 0, %s387
      %s389 = sphi 0, %s387
      %s390 = sphi 0, %s389
      %s404 = sphi 0, %s390
      %s408 = sphi 0, %s408
      %s410 = sphi 0, %s408
      %s411 = sphi 0, %s410
      %s425 = sphi 0, %s411
      %s431 = sphi 0, %s433
      %s434 = sphi 0, %s431
      %s435 = sphi 0, %s434
      %s451 = sphi 0, %s435
    $region4: #{tpu_custom_call.1} parent=1 // loop_header_branch
      %36 = sbr.rel (%p34) target = $region8
    $region5: #{tpu_custom_call.1} parent=1 // loop_body
      %s38 = ssub.s32 %s33, 1
      %s39 = ssub.s32 %s33, 2
      %s40 = sadd.s32 %s33, 1
      %s41 = ssub.s32 %s33, %s40
      %p42 = scmp.eq.s32.totalorder %s41, 0
      %s44 = sadd.s32 %s43, 1
      %s45 = scalar_select %p42, %s43, %s44
      %p48 = pneg %p42
      %p49 = scmp.eq.s32.totalorder %s33, 1
      %p50 = por %p48, %p49
      %p51 = scmp.ne.s32.totalorder %s43, %s46
      %p52 = scmp.eq.s32.totalorder %s33, 0
      %p53 = por %p51, %p52
      %p54 = scmp.ne.s32.totalorder %s43, %s46
      %p55 = scmp.eq.s32.totalorder %s38, 1
      %p56 = por %p54, %p55
      %p57 = scmp.ne.s32.totalorder %s46, %s47
      %p58 = scmp.eq.s32.totalorder %s38, 0
      %p59 = por %p57, %p58
      %p60 = scmp.ne.s32.totalorder %s46, %s47
      %p61 = scmp.eq.s32.totalorder %s39, 1
      %p62 = por %p60, %p61
      %p64 = scmp.ne.s32.totalorder %s47, %s63
      %p65 = scmp.eq.s32.totalorder %s39, 0
      %p66 = por %p64, %p65
      %s67 = ssub.s32 %s33, %s40
      %p68 = scmp.eq.s32.totalorder %s67, 0
      %s70 = sadd.s32 %s69, 1
      %s71 = scalar_select %p68, %s69, %s70
      %p74 = pneg %p68
      %p75 = scmp.eq.s32.totalorder %s33, 1
      %p76 = por %p74, %p75
      %p77 = scmp.ne.s32.totalorder %s69, %s72
      %p78 = scmp.eq.s32.totalorder %s33, 0
      %p79 = por %p77, %p78
      %p80 = scmp.ne.s32.totalorder %s69, %s72
      %p81 = scmp.eq.s32.totalorder %s38, 1
      %p82 = por %p80, %p81
      %p83 = scmp.ne.s32.totalorder %s72, %s73
      %p84 = scmp.eq.s32.totalorder %s38, 0
      %p85 = por %p83, %p84
      %p86 = scmp.ne.s32.totalorder %s72, %s73
      %p87 = scmp.eq.s32.totalorder %s39, 1
      %p88 = por %p86, %p87
      %p90 = scmp.ne.s32.totalorder %s73, %s89
      %p91 = scmp.eq.s32.totalorder %s39, 0
      %p92 = por %p90, %p91
      %s94 = sadd.s32 %s93, 1
      %p97 = scmp.eq.s32.totalorder %s33, 1
      %p98 = scmp.ne.s32.totalorder %s93, %s95
      %p99 = scmp.eq.s32.totalorder %s33, 0
      %p100 = por %p98, %p99
      %p101 = scmp.ne.s32.totalorder %s93, %s95
      %p102 = scmp.eq.s32.totalorder %s38, 1
      %p103 = por %p101, %p102
      %p104 = scmp.ne.s32.totalorder %s95, %s96
      %p105 = scmp.eq.s32.totalorder %s38, 0
      %p106 = por %p104, %p105
      %p107 = scmp.ne.s32.totalorder %s95, %s96
      %p108 = scmp.eq.s32.totalorder %s39, 1
      %p109 = por %p107, %p108
      %p111 = scmp.ne.s32.totalorder %s96, %s110
      %p112 = scmp.eq.s32.totalorder %s39, 0
      %p113 = por %p111, %p112
      %s115 = sadd.s32 %s114, 1
      %p118 = scmp.eq.s32.totalorder %s33, 1
      %p119 = scmp.ne.s32.totalorder %s114, %s116
      %p120 = scmp.eq.s32.totalorder %s33, 0
      %p121 = por %p119, %p120
      %p122 = scmp.ne.s32.totalorder %s114, %s116
      %p123 = scmp.eq.s32.totalorder %s38, 1
      %p124 = por %p122, %p123
      %p125 = scmp.ne.s32.totalorder %s116, %s117
      %p126 = scmp.eq.s32.totalorder %s38, 0
      %p127 = por %p125, %p126
      %p128 = scmp.ne.s32.totalorder %s116, %s117
      %p129 = scmp.eq.s32.totalorder %s39, 1
      %p130 = por %p128, %p129
      %p132 = scmp.ne.s32.totalorder %s117, %s131
      %p133 = scmp.eq.s32.totalorder %s39, 0
      %p134 = por %p132, %p133
      %s136 = sadd.s32 %s135, 1
      %p139 = scmp.eq.s32.totalorder %s33, 1
      %p140 = scmp.ne.s32.totalorder %s135, %s137
      %p141 = scmp.eq.s32.totalorder %s33, 0
      %p142 = por %p140, %p141
      %p143 = scmp.ne.s32.totalorder %s135, %s137
      %p144 = scmp.eq.s32.totalorder %s38, 1
      %p145 = por %p143, %p144
      %p146 = scmp.ne.s32.totalorder %s137, %s138
      %p147 = scmp.eq.s32.totalorder %s38, 0
      %p148 = por %p146, %p147
      %p149 = scmp.ne.s32.totalorder %s137, %s138
      %p150 = scmp.eq.s32.totalorder %s39, 1
      %p151 = por %p149, %p150
      %p153 = scmp.ne.s32.totalorder %s138, %s152
      %p154 = scmp.eq.s32.totalorder %s39, 0
      %p155 = por %p153, %p154
      %s157 = sadd.s32 %s156, 1
      %p160 = scmp.eq.s32.totalorder %s33, 1
      %p161 = scmp.ne.s32.totalorder %s156, %s158
      %p162 = scmp.eq.s32.totalorder %s33, 0
      %p163 = por %p161, %p162
      %p164 = scmp.ne.s32.totalorder %s156, %s158
      %p165 = scmp.eq.s32.totalorder %s38, 1
      %p166 = por %p164, %p165
      %p167 = scmp.ne.s32.totalorder %s158, %s159
      %p168 = scmp.eq.s32.totalorder %s38, 0
      %p169 = por %p167, %p168
      %p170 = scmp.ne.s32.totalorder %s158, %s159
      %p171 = scmp.eq.s32.totalorder %s39, 1
      %p172 = por %p170, %p171
      %p174 = scmp.ne.s32.totalorder %s159, %s173
      %p175 = scmp.eq.s32.totalorder %s39, 0
      %p176 = por %p174, %p175
      %s178 = sadd.s32 %s177, 1
      %p181 = scmp.eq.s32.totalorder %s33, 1
      %p182 = scmp.ne.s32.totalorder %s177, %s179
      %p183 = scmp.eq.s32.totalorder %s33, 0
      %p184 = por %p182, %p183
      %p185 = scmp.ne.s32.totalorder %s177, %s179
      %p186 = scmp.eq.s32.totalorder %s38, 1
      %p187 = por %p185, %p186
      %p188 = scmp.ne.s32.totalorder %s179, %s180
      %p189 = scmp.eq.s32.totalorder %s38, 0
      %p190 = por %p188, %p189
      %p191 = scmp.ne.s32.totalorder %s179, %s180
      %p192 = scmp.eq.s32.totalorder %s39, 1
      %p193 = por %p191, %p192
      %p195 = scmp.ne.s32.totalorder %s180, %s194
      %p196 = scmp.eq.s32.totalorder %s39, 0
      %p197 = por %p195, %p196
      %s199 = sadd.s32 %s198, 1
      %p202 = scmp.eq.s32.totalorder %s33, 1
      %p203 = scmp.ne.s32.totalorder %s198, %s200
      %p204 = scmp.eq.s32.totalorder %s33, 0
      %p205 = por %p203, %p204
      %p206 = scmp.ne.s32.totalorder %s198, %s200
      %p207 = scmp.eq.s32.totalorder %s38, 1
      %p208 = por %p206, %p207
      %p209 = scmp.ne.s32.totalorder %s200, %s201
      %p210 = scmp.eq.s32.totalorder %s38, 0
      %p211 = por %p209, %p210
      %p212 = scmp.ne.s32.totalorder %s200, %s201
      %p213 = scmp.eq.s32.totalorder %s39, 1
      %p214 = por %p212, %p213
      %p216 = scmp.ne.s32.totalorder %s201, %s215
      %p217 = scmp.eq.s32.totalorder %s39, 0
      %p218 = por %p216, %p217
      %s220 = sadd.s32 %s219, 1
      %p223 = scmp.eq.s32.totalorder %s33, 1
      %p224 = scmp.ne.s32.totalorder %s219, %s221
      %p225 = scmp.eq.s32.totalorder %s33, 0
      %p226 = por %p224, %p225
      %p227 = scmp.ne.s32.totalorder %s219, %s221
      %p228 = scmp.eq.s32.totalorder %s38, 1
      %p229 = por %p227, %p228
      %p230 = scmp.ne.s32.totalorder %s221, %s222
      %p231 = scmp.eq.s32.totalorder %s38, 0
      %p232 = por %p230, %p231
      %p233 = scmp.ne.s32.totalorder %s221, %s222
      %p234 = scmp.eq.s32.totalorder %s39, 1
      %p235 = por %p233, %p234
      %p237 = scmp.ne.s32.totalorder %s222, %s236
      %p238 = scmp.eq.s32.totalorder %s39, 0
      %p239 = por %p237, %p238
      %s241 = sadd.s32 %s240, 1
      %p244 = scmp.eq.s32.totalorder %s33, 1
      %p245 = scmp.ne.s32.totalorder %s240, %s242
      %p246 = scmp.eq.s32.totalorder %s33, 0
      %p247 = por %p245, %p246
      %p248 = scmp.ne.s32.totalorder %s240, %s242
      %p249 = scmp.eq.s32.totalorder %s38, 1
      %p250 = por %p248, %p249
      %p251 = scmp.ne.s32.totalorder %s242, %s243
      %p252 = scmp.eq.s32.totalorder %s38, 0
      %p253 = por %p251, %p252
      %p254 = scmp.ne.s32.totalorder %s242, %s243
      %p255 = scmp.eq.s32.totalorder %s39, 1
      %p256 = por %p254, %p255
      %p258 = scmp.ne.s32.totalorder %s243, %s257
      %p259 = scmp.eq.s32.totalorder %s39, 0
      %p260 = por %p258, %p259
      %s262 = sadd.s32 %s261, 1
      %p265 = scmp.eq.s32.totalorder %s33, 1
      %p266 = scmp.ne.s32.totalorder %s261, %s263
      %p267 = scmp.eq.s32.totalorder %s33, 0
      %p268 = por %p266, %p267
      %p269 = scmp.ne.s32.totalorder %s261, %s263
      %p270 = scmp.eq.s32.totalorder %s38, 1
      %p271 = por %p269, %p270
      %p272 = scmp.ne.s32.totalorder %s263, %s264
      %p273 = scmp.eq.s32.totalorder %s38, 0
      %p274 = por %p272, %p273
      %p275 = scmp.ne.s32.totalorder %s263, %s264
      %p276 = scmp.eq.s32.totalorder %s39, 1
      %p277 = por %p275, %p276
      %p279 = scmp.ne.s32.totalorder %s264, %s278
      %p280 = scmp.eq.s32.totalorder %s39, 0
      %p281 = por %p279, %p280
      %s283 = sadd.s32 %s282, 1
      %p286 = scmp.eq.s32.totalorder %s33, 1
      %p287 = scmp.ne.s32.totalorder %s282, %s284
      %p288 = scmp.eq.s32.totalorder %s33, 0
      %p289 = por %p287, %p288
      %p290 = scmp.ne.s32.totalorder %s282, %s284
      %p291 = scmp.eq.s32.totalorder %s38, 1
      %p292 = por %p290, %p291
      %p293 = scmp.ne.s32.totalorder %s284, %s285
      %p294 = scmp.eq.s32.totalorder %s38, 0
      %p295 = por %p293, %p294
      %p296 = scmp.ne.s32.totalorder %s284, %s285
      %p297 = scmp.eq.s32.totalorder %s39, 1
      %p298 = por %p296, %p297
      %p300 = scmp.ne.s32.totalorder %s285, %s299
      %p301 = scmp.eq.s32.totalorder %s39, 0
      %p302 = por %p300, %p301
      %s304 = sadd.s32 %s303, 1
      %p307 = scmp.eq.s32.totalorder %s33, 1
      %p308 = scmp.ne.s32.totalorder %s303, %s305
      %p309 = scmp.eq.s32.totalorder %s33, 0
      %p310 = por %p308, %p309
      %p311 = scmp.ne.s32.totalorder %s303, %s305
      %p312 = scmp.eq.s32.totalorder %s38, 1
      %p313 = por %p311, %p312
      %p314 = scmp.ne.s32.totalorder %s305, %s306
      %p315 = scmp.eq.s32.totalorder %s38, 0
      %p316 = por %p314, %p315
      %p317 = scmp.ne.s32.totalorder %s305, %s306
      %p318 = scmp.eq.s32.totalorder %s39, 1
      %p319 = por %p317, %p318
      %p321 = scmp.ne.s32.totalorder %s306, %s320
      %p322 = scmp.eq.s32.totalorder %s39, 0
      %p323 = por %p321, %p322
      %s325 = sadd.s32 %s324, 1
      %p328 = scmp.eq.s32.totalorder %s33, 1
      %p329 = scmp.ne.s32.totalorder %s324, %s326
      %p330 = scmp.eq.s32.totalorder %s33, 0
      %p331 = por %p329, %p330
      %p332 = scmp.ne.s32.totalorder %s324, %s326
      %p333 = scmp.eq.s32.totalorder %s38, 1
      %p334 = por %p332, %p333
      %p335 = scmp.ne.s32.totalorder %s326, %s327
      %p336 = scmp.eq.s32.totalorder %s38, 0
      %p337 = por %p335, %p336
      %p338 = scmp.ne.s32.totalorder %s326, %s327
      %p339 = scmp.eq.s32.totalorder %s39, 1
      %p340 = por %p338, %p339
      %p342 = scmp.ne.s32.totalorder %s327, %s341
      %p343 = scmp.eq.s32.totalorder %s39, 0
      %p344 = por %p342, %p343
      %s346 = sadd.s32 %s345, 1
      %p349 = scmp.eq.s32.totalorder %s33, 1
      %p350 = scmp.ne.s32.totalorder %s345, %s347
      %p351 = scmp.eq.s32.totalorder %s33, 0
      %p352 = por %p350, %p351
      %p353 = scmp.ne.s32.totalorder %s345, %s347
      %p354 = scmp.eq.s32.totalorder %s38, 1
      %p355 = por %p353, %p354
      %p356 = scmp.ne.s32.totalorder %s347, %s348
      %p357 = scmp.eq.s32.totalorder %s38, 0
      %p358 = por %p356, %p357
      %p359 = scmp.ne.s32.totalorder %s347, %s348
      %p360 = scmp.eq.s32.totalorder %s39, 1
      %p361 = por %p359, %p360
      %p363 = scmp.ne.s32.totalorder %s348, %s362
      %p364 = scmp.eq.s32.totalorder %s39, 0
      %p365 = por %p363, %p364
      %s367 = sadd.s32 %s366, 1
      %p370 = scmp.eq.s32.totalorder %s33, 1
      %p371 = scmp.ne.s32.totalorder %s366, %s368
      %p372 = scmp.eq.s32.totalorder %s33, 0
      %p373 = por %p371, %p372
      %p374 = scmp.ne.s32.totalorder %s366, %s368
      %p375 = scmp.eq.s32.totalorder %s38, 1
      %p376 = por %p374, %p375
      %p377 = scmp.ne.s32.totalorder %s368, %s369
      %p378 = scmp.eq.s32.totalorder %s38, 0
      %p379 = por %p377, %p378
      %p380 = scmp.ne.s32.totalorder %s368, %s369
      %p381 = scmp.eq.s32.totalorder %s39, 1
      %p382 = por %p380, %p381
      %p384 = scmp.ne.s32.totalorder %s369, %s383
      %p385 = scmp.eq.s32.totalorder %s39, 0
      %p386 = por %p384, %p385
      %s388 = sadd.s32 %s387, 1
      %p391 = scmp.eq.s32.totalorder %s33, 1
      %p392 = scmp.ne.s32.totalorder %s387, %s389
      %p393 = scmp.eq.s32.totalorder %s33, 0
      %p394 = por %p392, %p393
      %p395 = scmp.ne.s32.totalorder %s387, %s389
      %p396 = scmp.eq.s32.totalorder %s38, 1
      %p397 = por %p395, %p396
      %p398 = scmp.ne.s32.totalorder %s389, %s390
      %p399 = scmp.eq.s32.totalorder %s38, 0
      %p400 = por %p398, %p399
      %p401 = scmp.ne.s32.totalorder %s389, %s390
      %p402 = scmp.eq.s32.totalorder %s39, 1
      %p403 = por %p401, %p402
      %p405 = scmp.ne.s32.totalorder %s390, %s404
      %p406 = scmp.eq.s32.totalorder %s39, 0
      %p407 = por %p405, %p406
      %s409 = sadd.s32 %s408, 1
      %p412 = scmp.eq.s32.totalorder %s33, 1
      %p413 = scmp.ne.s32.totalorder %s408, %s410
      %p414 = scmp.eq.s32.totalorder %s33, 0
      %p415 = por %p413, %p414
      %p416 = scmp.ne.s32.totalorder %s408, %s410
      %p417 = scmp.eq.s32.totalorder %s38, 1
      %p418 = por %p416, %p417
      %p419 = scmp.ne.s32.totalorder %s410, %s411
      %p420 = scmp.eq.s32.totalorder %s38, 0
      %p421 = por %p419, %p420
      %p422 = scmp.ne.s32.totalorder %s410, %s411
      %p423 = scmp.eq.s32.totalorder %s39, 1
      %p424 = por %p422, %p423
      %p426 = scmp.ne.s32.totalorder %s411, %s425
      %p427 = scmp.eq.s32.totalorder %s39, 0
      %p428 = por %p426, %p427
      %s429 = ssub.s32 %s33, %s40
      %p430 = scmp.eq.s32.totalorder %s429, 0
      %s432 = sadd.s32 %s431, 1
      %s433 = scalar_select %p430, %s431, %s432
      %p436 = pneg %p430
      %p437 = scmp.eq.s32.totalorder %s33, 1
      %p438 = por %p436, %p437
      %p439 = scmp.ne.s32.totalorder %s431, %s434
      %p440 = scmp.eq.s32.totalorder %s33, 0
      %p441 = por %p439, %p440
      %p442 = scmp.ne.s32.totalorder %s431, %s434
      %p443 = scmp.eq.s32.totalorder %s38, 1
      %p444 = por %p442, %p443
      %p445 = scmp.ne.s32.totalorder %s434, %s435
      %p446 = scmp.eq.s32.totalorder %s38, 0
      %p447 = por %p445, %p446
      %p448 = scmp.ne.s32.totalorder %s434, %s435
      %p449 = scmp.eq.s32.totalorder %s39, 1
      %p450 = por %p448, %p449
      %p452 = scmp.ne.s32.totalorder %s435, %s451
      %p453 = scmp.eq.s32.totalorder %s39, 0
      %p454 = por %p452, %p453
      %p455 = scmp.le.s32.totalorder 1, %s33
      %p456 = scmp.lt.s32.totalorder %s33, 3
      %p457 = pnand %p455, %p456
      %p458 = pneg %p457
      // Predicated region
      $region9: #{tpu_custom_call.1} parent=5 // pred_check
        _
      $region10: #{tpu_custom_call.1} parent=5 // pred_check_branch
        %460 = sbr.rel (%p457) target = $region12
      $region11: #{tpu_custom_call.1} parent=5 // pred_region
        %s461 = ssub.s32 %s33, 1
        // Predicated region
        $region13: #{tpu_custom_call.1} parent=11 // pred_check
          %p462 = pneg %p106
        $region14: #{tpu_custom_call.1} parent=11 // pred_check_branch
          %464 = sbr.rel (%p462) target = $region16
        $region15: #{tpu_custom_call.1} parent=11 // pred_region
          _
        $region16: #{tpu_custom_call.1} parent=11 // pred_fallthru
          _
        // Predicated region
        $region17: #{tpu_custom_call.1} parent=11 // pred_check
          %p465 = pneg %p127
        $region18: #{tpu_custom_call.1} parent=11 // pred_check_branch
          %467 = sbr.rel (%p465) target = $region20
        $region19: #{tpu_custom_call.1} parent=11 // pred_region
          %s469 = ssub.s32 16, 16
          %470 = vsyncadd [#allocation6], %s469
          %s472 = sshll.u32 [#allocation5], 4
          %s473 = int_to_ptr.vmem [resolvable:$true] %s472
          %475 = dma.hbm_to_vmem [thread:$0]  %s3, 16, %s473, [#allocation6]
        $region20: #{tpu_custom_call.1} parent=11 // pred_fallthru
          _
        // Predicated region
        $region21: #{tpu_custom_call.1} parent=11 // pred_check
          %p476 = pneg %p148
        $region22: #{tpu_custom_call.1} parent=11 // pred_check_branch
          %478 = sbr.rel (%p476) target = $region24
        $region23: #{tpu_custom_call.1} parent=11 // pred_region
          _
        $region24: #{tpu_custom_call.1} parent=11 // pred_fallthru
          _
        // Predicated region
        $region25: #{tpu_custom_call.1} parent=11 // pred_check
          %p479 = pneg %p169
        $region26: #{tpu_custom_call.1} parent=11 // pred_check_branch
          %481 = sbr.rel (%p479) target = $region28
        $region27: #{tpu_custom_call.1} parent=11 // pred_region
          _
        $region28: #{tpu_custom_call.1} parent=11 // pred_fallthru
          _
        // Predicated region
        $region29: #{tpu_custom_call.1} parent=11 // pred_check
          %p482 = pneg %p190
        $region30: #{tpu_custom_call.1} parent=11 // pred_check_branch
          %484 = sbr.rel (%p482) target = $region32
        $region31: #{tpu_custom_call.1} parent=11 // pred_region
          _
        $region32: #{tpu_custom_call.1} parent=11 // pred_fallthru
          _
        // Predicated region
        $region33: #{tpu_custom_call.1} parent=11 // pred_check
          %p485 = pneg %p211
        $region34: #{tpu_custom_call.1} parent=11 // pred_check_branch
          %487 = sbr.rel (%p485) target = $region36
        $region35: #{tpu_custom_call.1} parent=11 // pred_region
          %s489 = ssub.s32 32, 32
          %490 = vsyncadd [#allocation6], %s489
          %s491 = sshll.u32 [#allocation7], 4
          %s492 = int_to_ptr.vmem [resolvable:$true] %s491
          %497 = dma.hbm_to_vmem [thread:$0]  %s7, 32, %s492, [#allocation6], 16, 16, 1
        $region36: #{tpu_custom_call.1} parent=11 // pred_fallthru
          _
        // Predicated region
        $region37: #{tpu_custom_call.1} parent=11 // pred_check
          %p498 = pneg %p232
        $region38: #{tpu_custom_call.1} parent=11 // pred_check_branch
          %500 = sbr.rel (%p498) target = $region40
        $region39: #{tpu_custom_call.1} parent=11 // pred_region
          %s502 = ssub.s32 32, 32
          %503 = vsyncadd [#allocation9], %s502
          %s504 = sshll.u32 [#allocation8], 4
          %s505 = int_to_ptr.vmem [resolvable:$true] %s504
          %510 = dma.hbm_to_vmem [thread:$0]  %s8, 32, %s505, [#allocation9], 16, 16, 1
        $region40: #{tpu_custom_call.1} parent=11 // pred_fallthru
          _
        // Predicated region
        $region41: #{tpu_custom_call.1} parent=11 // pred_check
          %p511 = pneg %p253
        $region42: #{tpu_custom_call.1} parent=11 // pred_check_branch
          %513 = sbr.rel (%p511) target = $region44
        $region43: #{tpu_custom_call.1} parent=11 // pred_region
          %s515 = ssub.s32 32, 32
          %516 = vsyncadd [#allocation9], %s515
          %s517 = sshll.u32 [#allocation10], 4
          %s518 = int_to_ptr.vmem [resolvable:$true] %s517
          %523 = dma.hbm_to_vmem [thread:$0]  %s9, 32, %s518, [#allocation9], 16, 16, 1
        $region44: #{tpu_custom_call.1} parent=11 // pred_fallthru
          _
        // Predicated region
        $region45: #{tpu_custom_call.1} parent=11 // pred_check
          %p524 = pneg %p274
        $region46: #{tpu_custom_call.1} parent=11 // pred_check_branch
          %526 = sbr.rel (%p524) target = $region48
        $region47: #{tpu_custom_call.1} parent=11 // pred_region
          _
        $region48: #{tpu_custom_call.1} parent=11 // pred_fallthru
          _
        // Predicated region
        $region49: #{tpu_custom_call.1} parent=11 // pred_check
          %p527 = pneg %p295
        $region50: #{tpu_custom_call.1} parent=11 // pred_check_branch
          %529 = sbr.rel (%p527) target = $region52
        $region51: #{tpu_custom_call.1} parent=11 // pred_region
          %s531 = ssub.s32 32, 32
          %532 = vsyncadd [#allocation12], %s531
          %s533 = sshll.u32 [#allocation11], 4
          %s534 = int_to_ptr.vmem [resolvable:$true] %s533
          %539 = dma.hbm_to_vmem [thread:$0]  %s11, 32, %s534, [#allocation12], 16, 16, 1
        $region52: #{tpu_custom_call.1} parent=11 // pred_fallthru
          _
        // Predicated region
        $region53: #{tpu_custom_call.1} parent=11 // pred_check
          %p540 = pneg %p316
        $region54: #{tpu_custom_call.1} parent=11 // pred_check_branch
          %542 = sbr.rel (%p540) target = $region56
        $region55: #{tpu_custom_call.1} parent=11 // pred_region
          _
        $region56: #{tpu_custom_call.1} parent=11 // pred_fallthru
          _
        // Predicated region
        $region57: #{tpu_custom_call.1} parent=11 // pred_check
          %p543 = pneg %p337
        $region58: #{tpu_custom_call.1} parent=11 // pred_check_branch
          %545 = sbr.rel (%p543) target = $region60
        $region59: #{tpu_custom_call.1} parent=11 // pred_region
          %s547 = ssub.s32 32, 32
          %548 = vsyncadd [#allocation12], %s547
          %s549 = sshll.u32 [#allocation13], 4
          %s550 = int_to_ptr.vmem [resolvable:$true] %s549
          %555 = dma.hbm_to_vmem [thread:$0]  %s13, 32, %s550, [#allocation12], 16, 16, 1
        $region60: #{tpu_custom_call.1} parent=11 // pred_fallthru
          _
        // Predicated region
        $region61: #{tpu_custom_call.1} parent=11 // pred_check
          %p556 = pneg %p358
        $region62: #{tpu_custom_call.1} parent=11 // pred_check_branch
          %558 = sbr.rel (%p556) target = $region64
        $region63: #{tpu_custom_call.1} parent=11 // pred_region
          _
        $region64: #{tpu_custom_call.1} parent=11 // pred_fallthru
          _
        // Predicated region
        $region65: #{tpu_custom_call.1} parent=11 // pred_check
          %p559 = pneg %p379
        $region66: #{tpu_custom_call.1} parent=11 // pred_check_branch
          %561 = sbr.rel (%p559) target = $region68
        $region67: #{tpu_custom_call.1} parent=11 // pred_region
          _
        $region68: #{tpu_custom_call.1} parent=11 // pred_fallthru
          _
        // Predicated region
        $region69: #{tpu_custom_call.1} parent=11 // pred_check
          %p562 = pneg %p400
        $region70: #{tpu_custom_call.1} parent=11 // pred_check_branch
          %564 = sbr.rel (%p562) target = $region72
        $region71: #{tpu_custom_call.1} parent=11 // pred_region
          _
        $region72: #{tpu_custom_call.1} parent=11 // pred_fallthru
          _
        // Predicated region
        $region73: #{tpu_custom_call.1} parent=11 // pred_check
          %p565 = pneg %p421
        $region74: #{tpu_custom_call.1} parent=11 // pred_check_branch
          %567 = sbr.rel (%p565) target = $region76
        $region75: #{tpu_custom_call.1} parent=11 // pred_region
          _
        $region76: #{tpu_custom_call.1} parent=11 // pred_fallthru
          _
      $region12: #{tpu_custom_call.1} parent=5 // pred_fallthru
        _
      %p568 = scmp.lt.s32.totalorder %s33, 2
      // Predicated region
      $region77: #{tpu_custom_call.1} parent=5 // pred_check
        %p569 = pneg %p568
      $region78: #{tpu_custom_call.1} parent=5 // pred_check_branch
        %571 = sbr.rel (%p569) target = $region80
      $region79: #{tpu_custom_call.1} parent=5 // pred_region
        // Predicated region
        $region81: #{tpu_custom_call.1} parent=79 // pred_check
          %p572 = pneg %p53
        $region82: #{tpu_custom_call.1} parent=79 // pred_check_branch
          %574 = sbr.rel (%p572) target = $region84
        $region83: #{tpu_custom_call.1} parent=79 // pred_region
          %s575 = sand.u32 %s43, 1
          %s576 = scalar_lea.sflag [#allocation3], %s575
          %s577 = sand.u32 %s43, 1
          %s578 = smul.addr %s577, 8
          %s579 = scalar_lea.vmem [#allocation2], %s578
          %s581 = ssub.s32 128, 128
          %582 = vsyncadd %s576, %s581
          %s583 = smul.addr %s33, 128
          %s584 = scalar_lea.hbm %s0, %s583
          %s586 = sshll.u32 %s579, 4
          %s587 = int_to_ptr.vmem [resolvable:$true] %s586
          %589 = dma.hbm_to_vmem [thread:$0]  %s584, 128, %s587, %s576
        $region84: #{tpu_custom_call.1} parent=79 // pred_fallthru
          _
        // Predicated region
        $region85: #{tpu_custom_call.1} parent=79 // pred_check
          %p590 = pneg %p79
        $region86: #{tpu_custom_call.1} parent=79 // pred_check_branch
          %592 = sbr.rel (%p590) target = $region88
        $region87: #{tpu_custom_call.1} parent=79 // pred_region
          %p593 = scmp.lt.s32.totalorder %s33, 1
          %s594 = scalar_select %p593, %s33, 1
          %s595 = scalar_lea.vmem %s1, %s594
        $region88: #{tpu_custom_call.1} parent=79 // pred_fallthru
          _
      $region80: #{tpu_custom_call.1} parent=5 // pred_fallthru
        _
      %p596 = scmp.le.s32.totalorder 1, %s33
      %p597 = scmp.lt.s32.totalorder %s33, 3
      %p598 = pnand %p596, %p597
      %p599 = pneg %p598
      // Predicated region
      $region89: #{tpu_custom_call.1} parent=5 // pred_check
        _
      $region90: #{tpu_custom_call.1} parent=5 // pred_check_branch
        %601 = sbr.rel (%p598) target = $region92
      $region91: #{tpu_custom_call.1} parent=5 // pred_region
        %s602 = ssub.s32 %s33, 1
        %s603 = sand.u32 %s46, 1
        %s604 = scalar_lea.sflag [#allocation3], %s603
        %s605 = sand.u32 %s46, 1
        %s606 = smul.addr %s605, 8
        %s607 = scalar_lea.vmem [#allocation2], %s606
        // Predicated region
        $region93: #{tpu_custom_call.1} parent=91 // pred_check
          %p608 = pneg %p59
        $region94: #{tpu_custom_call.1} parent=91 // pred_check_branch
          %610 = sbr.rel (%p608) target = $region96
        $region95: #{tpu_custom_call.1} parent=91 // pred_region
          %611 = dma.done %s604, 128
        $region96: #{tpu_custom_call.1} parent=91 // pred_fallthru
          _
        // Predicated region
        $region97: #{tpu_custom_call.1} parent=91 // pred_check
          %p612 = pneg %p127
        $region98: #{tpu_custom_call.1} parent=91 // pred_check_branch
          %614 = sbr.rel (%p612) target = $region100
        $region99: #{tpu_custom_call.1} parent=91 // pred_region
          %615 = dma.done [#allocation6], 16
        $region100: #{tpu_custom_call.1} parent=91 // pred_fallthru
          _
        // Predicated region
        $region101: #{tpu_custom_call.1} parent=91 // pred_check
          %p616 = pneg %p211
        $region102: #{tpu_custom_call.1} parent=91 // pred_check_branch
          %618 = sbr.rel (%p616) target = $region104
        $region103: #{tpu_custom_call.1} parent=91 // pred_region
          %619 = dma.done [#allocation6], 32
        $region104: #{tpu_custom_call.1} parent=91 // pred_fallthru
          _
        // Predicated region
        $region105: #{tpu_custom_call.1} parent=91 // pred_check
          %p620 = pneg %p232
        $region106: #{tpu_custom_call.1} parent=91 // pred_check_branch
          %622 = sbr.rel (%p620) target = $region108
        $region107: #{tpu_custom_call.1} parent=91 // pred_region
          %623 = dma.done [#allocation9], 32
        $region108: #{tpu_custom_call.1} parent=91 // pred_fallthru
          _
        // Predicated region
        $region109: #{tpu_custom_call.1} parent=91 // pred_check
          %p624 = pneg %p253
        $region110: #{tpu_custom_call.1} parent=91 // pred_check_branch
          %626 = sbr.rel (%p624) target = $region112
        $region111: #{tpu_custom_call.1} parent=91 // pred_region
          %627 = dma.done [#allocation9], 32
        $region112: #{tpu_custom_call.1} parent=91 // pred_fallthru
          _
        // Predicated region
        $region113: #{tpu_custom_call.1} parent=91 // pred_check
          %p628 = pneg %p295
        $region114: #{tpu_custom_call.1} parent=91 // pred_check_branch
          %630 = sbr.rel (%p628) target = $region116
        $region115: #{tpu_custom_call.1} parent=91 // pred_region
          %631 = dma.done [#allocation12], 32
        $region116: #{tpu_custom_call.1} parent=91 // pred_fallthru
          _
        // Predicated region
        $region117: #{tpu_custom_call.1} parent=91 // pred_check
          %p632 = pneg %p337
        $region118: #{tpu_custom_call.1} parent=91 // pred_check_branch
          %634 = sbr.rel (%p632) target = $region120
        $region119: #{tpu_custom_call.1} parent=91 // pred_region
          %635 = dma.done [#allocation12], 32
        $region120: #{tpu_custom_call.1} parent=91 // pred_fallthru
          _
        %s636 = sand.u32 %s46, 1
        %s637 = scalar_lea.sflag [#allocation3], %s636
        %s638 = sand.u32 %s46, 1
        %s639 = smul.addr %s638, 8
        %s640 = scalar_lea.vmem [#allocation2], %s639
        %p641 = pneg %p59
        %p642 = pneg %p56
        %p643 = scmp.lt.s32.totalorder %s38, 1
        %s644 = scalar_select %p643, %s38, 1
        %s645 = scalar_lea.vmem %s1, %s644
        %p646 = pneg %p85
        %p647 = pneg %p82
        %p648 = pneg %p106
        %p649 = pneg %p103
        %p650 = pneg %p127
        %p651 = pneg %p124
        %p652 = pneg %p148
        %p653 = pneg %p145
        %p654 = pneg %p169
        %p655 = pneg %p166
        %p656 = pneg %p190
        %p657 = pneg %p187
        %p658 = pneg %p211
        %p659 = pneg %p208
        %p660 = pneg %p232
        %p661 = pneg %p229
        %p662 = pneg %p253
        %p663 = pneg %p250
        %p664 = pneg %p274
        %p665 = pneg %p271
        %p666 = pneg %p295
        %p667 = pneg %p292
        %p668 = pneg %p316
        %p669 = pneg %p313
        %p670 = pneg %p337
        %p671 = pneg %p334
        %p672 = pneg %p358
        %p673 = pneg %p355
        %p674 = pneg %p379
        %p675 = pneg %p376
        %p676 = pneg %p400
        %p677 = pneg %p397
        %p678 = pneg %p421
        %p679 = pneg %p418
        %p680 = pneg %p447
        %p681 = pneg %p444
        %s682 = sand.u32 %s434, 1
        %s683 = scalar_lea.sflag [#allocation4], %s682
        %s684 = sand.u32 %s434, 1
        %s685 = scalar_lea.vmem [#allocation14], %s684
        %p686 = scmp.lt.s32.totalorder %s38, 1
        %s687 = scalar_select %p686, %s38, 1
        %s688 = scalar_lea.vmem %s1, %s687
        %v689 = vld [vmem:[%s607] sm:$0xff]
        %v690 = vld [vmem:[%s688] sm:$0x1]
        %v691 = vld [vmem:[%s2] sm:$0x1]
        %v692 = vld [vmem:[#allocation5] sm:$0x1]
        %vm693 = vcmask 261120
        %v694 = vsel %vm693, %v689, 0.0
        %695 = vadd.xlane.f32.xlu0 %v694
        %v696 = vpop.xlane.xlu0 %695
        %v697 = vrcp.pop 32.0
        %v698 = vmul.f32 %v696, %v697
        %v699 = vsub.f32 %v689, %v698
        %v700 = vmul.f32 %v699, %v699
        %v701 = vsel %vm693, %v700, 0.0
        %702 = vadd.xlane.f32.xlu0 %v701
        %v703 = vpop.xlane.xlu0 %702
        %v704 = vmul.f32 %v703, %v697
        %v705 = vadd.f32 %v704, 1e-12
        %v706 = vrsqrt.pop %v705
        %v707 = vmul.f32 %v699, %v706
        %v709 = vlaneseq
        %v710 = vshrl.u32 %v709, 7
        %v711 = vsub.s32 0, %v710
        %v712 = vrot.slane %v691, %v711
        %v714 = vmul.f32 %v707, %v712
        %v716 = vlaneseq
        %v717 = vshrl.u32 %v716, 7
        %v718 = vsub.s32 0, %v717
        %v719 = vrot.slane %v692, %v718
        %v721 = vadd.f32 %v714, %v719
        %v722 = vld [vmem:[%s4] sm:$0xff]
        %v723 = vld [vmem:[%s4 + $0x8] sm:$0xff]
        %v724 = vld [vmem:[%s4 + $0x10] sm:$0xff]
        %v725 = vld [vmem:[%s4 + $0x18] sm:$0xff]
        %v726 = vld [vmem:[%s5] sm:$0x1]
        %v728 = vlaneseq
        %v729 = vshrl.u32 %v728, 7
        %v730 = vsub.s32 0, %v729
        %v731 = vrot.slane %v726, %v730
        %v734 = vsel %vm693, %v721, 0
        %736 = vmatprep.subr.mxu0 0.0
        %737 = vmatpush1.msra.mxu0 0.0
        %738 = vmatprep.subr.mxu0 0.0
        %739 = vmatpush1.msra.mxu0 0.0
        %740 = vmatprep.subr.mxu0 0.0
        %741 = vmatpush1.msra.mxu0 0.0
        %742 = vmatprep.subr.mxu0 0.0
        %743 = vmatpush1.msra.mxu0 0.0
        %744 = vmatprep.subr.mxu0 0.0
        %745 = vmatpush1.msra.mxu0 0.0
        %746 = vmatprep.subr.mxu0 0.0
        %747 = vmatpush1.msra.mxu0 0.0
        %748 = vmatprep.subr.mxu0 0.0
        %749 = vmatpush1.msra.mxu0 0.0
        %750 = vmatprep.subr.mxu0 0.0
        %751 = vmatpush1.msra.mxu0 0.0
        %752 = vmatprep.subr.mxu0 0.0
        %753 = vmatpush1.msra.mxu0 0.0
        %754 = vmatprep.subr.mxu0 0.0
        %755 = vmatpush1.msra.mxu0 0.0
        %756 = vmatprep.subr.mxu0 0.0
        %757 = vmatpush1.msra.mxu0 0.0
        %758 = vmatprep.subr.mxu0 0.0
        %759 = vmatpush1.msra.mxu0 0.0
        %760 = vmatprep.subr.mxu0 0.0
        %761 = vmatpush1.msra.mxu0 %v725
        %762 = vmatprep.subr.mxu0 0.0
        %763 = vmatpush1.msra.mxu0 %v724
        %764 = vmatprep.subr.mxu0 0.0
        %765 = vmatpush1.msra.mxu0 %v723
        %766 = vmatprep.subr.mxu0 0.0
        %767 = vmatpush1.msra.mxu0 %v722
        %768 = vmatprep.subr.mxu0 0.0
        %769 = vmatpush2.msra.mxu0 0.0
        %770 = vmatprep.subr.mxu0 0.0
        %771 = vmatpush2.msra.mxu0 0.0
        %772 = vmatprep.subr.mxu0 0.0
        %773 = vmatpush2.msra.mxu0 0.0
        %774 = vmatprep.subr.mxu0 0.0
        %775 = vmatpush2.msra.mxu0 0.0
        %776 = vmatprep.subr.mxu0 0.0
        %777 = vmatpush2.msra.mxu0 0.0
        %778 = vmatprep.subr.mxu0 0.0
        %779 = vmatpush2.msra.mxu0 0.0
        %780 = vmatprep.subr.mxu0 0.0
        %781 = vmatpush2.msra.mxu0 0.0
        %782 = vmatprep.subr.mxu0 0.0
        %783 = vmatpush2.msra.mxu0 0.0
        %784 = vmatprep.subr.mxu0 0.0
        %785 = vmatpush2.msra.mxu0 0.0
        %786 = vmatprep.subr.mxu0 0.0
        %787 = vmatpush2.msra.mxu0 0.0
        %788 = vmatprep.subr.mxu0 0.0
        %789 = vmatpush2.msra.mxu0 0.0
        %790 = vmatprep.subr.mxu0 0.0
        %791 = vmatpush2.msra.mxu0 0.0
        %792 = vmatprep.subr.mxu0 0.0
        %793 = vmatpush2.msra.mxu0 0.0
        %794 = vmatprep.subr.mxu0 0.0
        %795 = vmatpush2.msra.mxu0 0.0
        %796 = vmatprep.subr.mxu0 0.0
        %797 = vmatpush2.msra.mxu0 0.0
        %798 = vmatprep.subr.mxu0 0.0
        %799 = vmatpush2.msra.mxu0 0.0
        %800 = vmatprep.mubr.f32.mxu0 0.0
        %801 = vmatmul.mubr.f32.gmra.mxu0 %v734
        %v802 = vpop.f32.mrf.mxu0
        %v803 = vadd.f32 %v731, %v802
        %v804 = vpop.f32.mrf.mxu0
        %805 = vdwg.mxu0
        %v806 = vld [vmem:[%s6] sm:$0xff]
        %v807 = vld [vmem:[%s6 + $0x8] sm:$0xff]
        %v808 = vld [vmem:[%s6 + $0x10] sm:$0xff]
        %v809 = vld [vmem:[%s6 + $0x18] sm:$0xff]
        %v810 = vld [vmem:[#allocation7] sm:$0x1]
        %812 = vrot.lane.b32.xlu0 %v803, 96
        %v813 = vpop.permute.xlu0 %812
        %vm814 = vcmask 130048
        %v815 = vsel %vm814, %v803, 0
        %v817 = vsel %vm814, %v813, 0
        %819 = vmatprep.subr.mxu0 0.0
        %820 = vmatpush1.xpose.msra.mxu0 0.0
        %821 = vmatprep.subr.mxu0 0.0
        %822 = vmatpush1.xpose.msra.mxu0 0.0
        %823 = vmatprep.subr.mxu0 0.0
        %824 = vmatpush1.xpose.msra.mxu0 0.0
        %825 = vmatprep.subr.mxu0 0.0
        %826 = vmatpush1.xpose.msra.mxu0 0.0
        %827 = vmatprep.subr.mxu0 0.0
        %828 = vmatpush1.xpose.msra.mxu0 0.0
        %829 = vmatprep.subr.mxu0 0.0
        %830 = vmatpush1.xpose.msra.mxu0 0.0
        %831 = vmatprep.subr.mxu0 0.0
        %832 = vmatpush1.xpose.msra.mxu0 0.0
        %833 = vmatprep.subr.mxu0 0.0
        %834 = vmatpush1.xpose.msra.mxu0 0.0
        %835 = vmatprep.subr.mxu0 0.0
        %836 = vmatpush1.xpose.msra.mxu0 0.0
        %837 = vmatprep.subr.mxu0 0.0
        %838 = vmatpush1.xpose.msra.mxu0 0.0
        %839 = vmatprep.subr.mxu0 0.0
        %840 = vmatpush1.xpose.msra.mxu0 0.0
        %841 = vmatprep.subr.mxu0 0.0
        %842 = vmatpush1.xpose.msra.mxu0 0.0
        %843 = vmatprep.subr.mxu0 0.0
        %844 = vmatpush1.xpose.msra.mxu0 0.0
        %845 = vmatprep.subr.mxu0 0.0
        %846 = vmatpush1.xpose.msra.mxu0 0.0
        %847 = vmatprep.subr.mxu0 0.0
        %848 = vmatpush1.xpose.msra.mxu0 0.0
        %849 = vmatprep.subr.mxu0 0.0
        %850 = vmatpush1.xpose.msra.mxu0 %v817
        %851 = vmatprep.subr.mxu0 0.0
        %852 = vmatpush2.xpose.msra.mxu0 0.0
        %853 = vmatprep.subr.mxu0 0.0
        %854 = vmatpush2.xpose.msra.mxu0 0.0
        %855 = vmatprep.subr.mxu0 0.0
        %856 = vmatpush2.xpose.msra.mxu0 0.0
        %857 = vmatprep.subr.mxu0 0.0
        %858 = vmatpush2.xpose.msra.mxu0 0.0
        %859 = vmatprep.subr.mxu0 0.0
        %860 = vmatpush2.xpose.msra.mxu0 0.0
        %861 = vmatprep.subr.mxu0 0.0
        %862 = vmatpush2.xpose.msra.mxu0 0.0
        %863 = vmatprep.subr.mxu0 0.0
        %864 = vmatpush2.xpose.msra.mxu0 0.0
        %865 = vmatprep.subr.mxu0 0.0
        %866 = vmatpush2.xpose.msra.mxu0 0.0
        %867 = vmatprep.subr.mxu0 0.0
        %868 = vmatpush2.xpose.msra.mxu0 0.0
        %869 = vmatprep.subr.mxu0 0.0
        %870 = vmatpush2.xpose.msra.mxu0 0.0
        %871 = vmatprep.subr.mxu0 0.0
        %872 = vmatpush2.xpose.msra.mxu0 0.0
        %873 = vmatprep.subr.mxu0 0.0
        %874 = vmatpush2.xpose.msra.mxu0 0.0
        %875 = vmatprep.subr.mxu0 0.0
        %876 = vmatpush2.xpose.msra.mxu0 0.0
        %877 = vmatprep.subr.mxu0 0.0
        %878 = vmatpush2.xpose.msra.mxu0 0.0
        %879 = vmatprep.subr.mxu0 0.0
        %880 = vmatpush2.xpose.msra.mxu0 0.0
        %881 = vmatprep.subr.mxu0 0.0
        %882 = vmatpush2.xpose.msra.mxu0 0.0
        %883 = vmatprep.mubr.f32.mxu0 0.0
        %884 = vmatmul.mubr.f32.gmra.mxu0 %v815
        %v885 = vpop.f32.mrf.mxu0
        %v886 = vadd.f32 0.0, %v885
        %v887 = vpop.f32.mrf.mxu0
        %888 = vdwg.mxu0
        %v889 = vmul.f32 %v886, 0.25
        %v891 = vlaneseq
        %v892 = vshrl.u32 %v891, 7
        %v893 = vsub.s32 0, %v892
        %v894 = vrot.slane %v690, %v893
        %v896 = vadd.f32 %v889, %v894
        %vm897 = vcmask 64512
        %v898 = vsel %vm897, %v896, -inf
        %899 = vmax.xlane.f32.xlu0 %v898
        %v900 = vpop.xlane.xlu0 %899
        %v901 = vsub.f32 %v896, %v900
        %v902 = vmul.f32 %v901, 1.442695
        %v903 = vpow.pop %v902
        %v904 = vsel %vm897, %v903, 0.0
        %905 = vadd.xlane.f32.xlu0 %v904
        %v906 = vpop.xlane.xlu0 %905
        %v907 = vrcp.pop %v906
        %v908 = vmul.f32 %v903, %v907
        %909 = vrot.lane.b32.xlu0 %v803, 64
        %v910 = vpop.permute.xlu0 %909
        %v913 = vsel %vm897, %v908, 0
        %915 = vmatprep.subr.mxu0 0.0
        %916 = vmatpush1.msra.mxu0 0.0
        %917 = vmatprep.subr.mxu0 0.0
        %918 = vmatpush1.msra.mxu0 0.0
        %919 = vmatprep.subr.mxu0 0.0
        %920 = vmatpush1.msra.mxu0 0.0
        %921 = vmatprep.subr.mxu0 0.0
        %922 = vmatpush1.msra.mxu0 0.0
        %923 = vmatprep.subr.mxu0 0.0
        %924 = vmatpush1.msra.mxu0 0.0
        %925 = vmatprep.subr.mxu0 0.0
        %926 = vmatpush1.msra.mxu0 0.0
        %927 = vmatprep.subr.mxu0 0.0
        %928 = vmatpush1.msra.mxu0 0.0
        %929 = vmatprep.subr.mxu0 0.0
        %930 = vmatpush1.msra.mxu0 0.0
        %931 = vmatprep.subr.mxu0 0.0
        %932 = vmatpush1.msra.mxu0 0.0
        %933 = vmatprep.subr.mxu0 0.0
        %934 = vmatpush1.msra.mxu0 0.0
        %935 = vmatprep.subr.mxu0 0.0
        %936 = vmatpush1.msra.mxu0 0.0
        %937 = vmatprep.subr.mxu0 0.0
        %938 = vmatpush1.msra.mxu0 0.0
        %939 = vmatprep.subr.mxu0 0.0
        %940 = vmatpush1.msra.mxu0 0.0
        %941 = vmatprep.subr.mxu0 0.0
        %942 = vmatpush1.msra.mxu0 0.0
        %943 = vmatprep.subr.mxu0 0.0
        %944 = vmatpush1.msra.mxu0 0.0
        %945 = vmatprep.subr.mxu0 0.0
        %946 = vmatpush1.msra.mxu0 %v910
        %947 = vmatprep.subr.mxu0 0.0
        %948 = vmatpush2.msra.mxu0 0.0
        %949 = vmatprep.subr.mxu0 0.0
        %950 = vmatpush2.msra.mxu0 0.0
        %951 = vmatprep.subr.mxu0 0.0
        %952 = vmatpush2.msra.mxu0 0.0
        %953 = vmatprep.subr.mxu0 0.0
        %954 = vmatpush2.msra.mxu0 0.0
        %955 = vmatprep.subr.mxu0 0.0
        %956 = vmatpush2.msra.mxu0 0.0
        %957 = vmatprep.subr.mxu0 0.0
        %958 = vmatpush2.msra.mxu0 0.0
        %959 = vmatprep.subr.mxu0 0.0
        %960 = vmatpush2.msra.mxu0 0.0
        %961 = vmatprep.subr.mxu0 0.0
        %962 = vmatpush2.msra.mxu0 0.0
        %963 = vmatprep.subr.mxu0 0.0
        %964 = vmatpush2.msra.mxu0 0.0
        %965 = vmatprep.subr.mxu0 0.0
        %966 = vmatpush2.msra.mxu0 0.0
        %967 = vmatprep.subr.mxu0 0.0
        %968 = vmatpush2.msra.mxu0 0.0
        %969 = vmatprep.subr.mxu0 0.0
        %970 = vmatpush2.msra.mxu0 0.0
        %971 = vmatprep.subr.mxu0 0.0
        %972 = vmatpush2.msra.mxu0 0.0
        %973 = vmatprep.subr.mxu0 0.0
        %974 = vmatpush2.msra.mxu0 0.0
        %975 = vmatprep.subr.mxu0 0.0
        %976 = vmatpush2.msra.mxu0 0.0
        %977 = vmatprep.subr.mxu0 0.0
        %978 = vmatpush2.msra.mxu0 0.0
        %979 = vmatprep.mubr.f32.mxu0 0.0
        %980 = vmatmul.mubr.f32.gmra.mxu0 %v913
        %v981 = vpop.f32.mrf.mxu0
        %v982 = vadd.f32 0.0, %v981
        %v983 = vpop.f32.mrf.mxu0
        %984 = vdwg.mxu0
        %v986 = vsel %vm814, %v982, 0
        %988 = vmatprep.subr.mxu0 0.0
        %989 = vmatpush1.msra.mxu0 0.0
        %990 = vmatprep.subr.mxu0 0.0
        %991 = vmatpush1.msra.mxu0 0.0
        %992 = vmatprep.subr.mxu0 0.0
        %993 = vmatpush1.msra.mxu0 0.0
        %994 = vmatprep.subr.mxu0 0.0
        %995 = vmatpush1.msra.mxu0 0.0
        %996 = vmatprep.subr.mxu0 0.0
        %997 = vmatpush1.msra.mxu0 0.0
        %998 = vmatprep.subr.mxu0 0.0
        %999 = vmatpush1.msra.mxu0 0.0
        %1000 = vmatprep.subr.mxu0 0.0
        %1001 = vmatpush1.msra.mxu0 0.0
        %1002 = vmatprep.subr.mxu0 0.0
        %1003 = vmatpush1.msra.mxu0 0.0
        %1004 = vmatprep.subr.mxu0 0.0
        %1005 = vmatpush1.msra.mxu0 0.0
        %1006 = vmatprep.subr.mxu0 0.0
        %1007 = vmatpush1.msra.mxu0 0.0
        %1008 = vmatprep.subr.mxu0 0.0
        %1009 = vmatpush1.msra.mxu0 0.0
        %1010 = vmatprep.subr.mxu0 0.0
        %1011 = vmatpush1.msra.mxu0 0.0
        %1012 = vmatprep.subr.mxu0 0.0
        %1013 = vmatpush1.msra.mxu0 0.0
        %1014 = vmatprep.subr.mxu0 0.0
        %1015 = vmatpush1.msra.mxu0 0.0
        %1016 = vmatprep.subr.mxu0 0.0
        %1017 = vmatpush1.msra.mxu0 %v807
        %1018 = vmatprep.subr.mxu0 0.0
        %1019 = vmatpush1.msra.mxu0 %v806
        %1020 = vmatprep.subr.mxu0 0.0
        %1021 = vmatpush2.msra.mxu0 0.0
        %1022 = vmatprep.subr.mxu0 0.0
        %1023 = vmatpush2.msra.mxu0 0.0
        %1024 = vmatprep.subr.mxu0 0.0
        %1025 = vmatpush2.msra.mxu0 0.0
        %1026 = vmatprep.subr.mxu0 0.0
        %1027 = vmatpush2.msra.mxu0 0.0
        %1028 = vmatprep.subr.mxu0 0.0
        %1029 = vmatpush2.msra.mxu0 0.0
        %1030 = vmatprep.subr.mxu0 0.0
        %1031 = vmatpush2.msra.mxu0 0.0
        %1032 = vmatprep.subr.mxu0 0.0
        %1033 = vmatpush2.msra.mxu0 0.0
        %1034 = vmatprep.subr.mxu0 0.0
        %1035 = vmatpush2.msra.mxu0 0.0
        %1036 = vmatprep.subr.mxu0 0.0
        %1037 = vmatpush2.msra.mxu0 0.0
        %1038 = vmatprep.subr.mxu0 0.0
        %1039 = vmatpush2.msra.mxu0 0.0
        %1040 = vmatprep.subr.mxu0 0.0
        %1041 = vmatpush2.msra.mxu0 0.0
        %1042 = vmatprep.subr.mxu0 0.0
        %1043 = vmatpush2.msra.mxu0 0.0
        %1044 = vmatprep.subr.mxu0 0.0
        %1045 = vmatpush2.msra.mxu0 0.0
        %1046 = vmatprep.subr.mxu0 0.0
        %1047 = vmatpush2.msra.mxu0 0.0
        %1048 = vmatprep.subr.mxu0 0.0
        %1049 = vmatpush2.msra.mxu0 0.0
        %1050 = vmatprep.subr.mxu0 0.0
        %1051 = vmatpush2.msra.mxu0 0.0
        %1052 = vmatprep.mubr.f32.mxu0 0.0
        %1053 = vmatmul.mubr.f32.gmra.mxu0 %v986
        %v1054 = vpop.f32.mrf.mxu0
        %v1055 = vadd.f32 0.0, %v1054
        %v1056 = vpop.f32.mrf.mxu0
        %1057 = vdwg.mxu0
        %v1059 = vlaneseq
        %v1060 = vshrl.u32 %v1059, 7
        %v1061 = vsub.s32 0, %v1060
        %v1062 = vrot.slane %v810, %v1061
        %v1064 = vadd.f32 %v1062, %v1055
        %1065 = vrot.lane.b32.xlu0 %v803, 112
        %v1066 = vpop.permute.xlu0 %1065
        %1067 = vrot.lane.b32.xlu0 %v803, 80
        %v1068 = vpop.permute.xlu0 %1067
        %v1069 = vsel %vm814, %v1066, 0
        %v1071 = vsel %vm814, %v1068, 0
        %1073 = vmatprep.subr.mxu0 0.0
        %1074 = vmatpush1.xpose.msra.mxu0 0.0
        %1075 = vmatprep.subr.mxu0 0.0
        %1076 = vmatpush1.xpose.msra.mxu0 0.0
        %1077 = vmatprep.subr.mxu0 0.0
        %1078 = vmatpush1.xpose.msra.mxu0 0.0
        %1079 = vmatprep.subr.mxu0 0.0
        %1080 = vmatpush1.xpose.msra.mxu0 0.0
        %1081 = vmatprep.subr.mxu0 0.0
        %1082 = vmatpush1.xpose.msra.mxu0 0.0
        %1083 = vmatprep.subr.mxu0 0.0
        %1084 = vmatpush1.xpose.msra.mxu0 0.0
        %1085 = vmatprep.subr.mxu0 0.0
        %1086 = vmatpush1.xpose.msra.mxu0 0.0
        %1087 = vmatprep.subr.mxu0 0.0
        %1088 = vmatpush1.xpose.msra.mxu0 0.0
        %1089 = vmatprep.subr.mxu0 0.0
        %1090 = vmatpush1.xpose.msra.mxu0 0.0
        %1091 = vmatprep.subr.mxu0 0.0
        %1092 = vmatpush1.xpose.msra.mxu0 0.0
        %1093 = vmatprep.subr.mxu0 0.0
        %1094 = vmatpush1.xpose.msra.mxu0 0.0
        %1095 = vmatprep.subr.mxu0 0.0
        %1096 = vmatpush1.xpose.msra.mxu0 0.0
        %1097 = vmatprep.subr.mxu0 0.0
        %1098 = vmatpush1.xpose.msra.mxu0 0.0
        %1099 = vmatprep.subr.mxu0 0.0
        %1100 = vmatpush1.xpose.msra.mxu0 0.0
        %1101 = vmatprep.subr.mxu0 0.0
        %1102 = vmatpush1.xpose.msra.mxu0 0.0
        %1103 = vmatprep.subr.mxu0 0.0
        %1104 = vmatpush1.xpose.msra.mxu0 %v1071
        %1105 = vmatprep.subr.mxu0 0.0
        %1106 = vmatpush2.xpose.msra.mxu0 0.0
        %1107 = vmatprep.subr.mxu0 0.0
        %1108 = vmatpush2.xpose.msra.mxu0 0.0
        %1109 = vmatprep.subr.mxu0 0.0
        %1110 = vmatpush2.xpose.msra.mxu0 0.0
        %1111 = vmatprep.subr.mxu0 0.0
        %1112 = vmatpush2.xpose.msra.mxu0 0.0
        %1113 = vmatprep.subr.mxu0 0.0
        %1114 = vmatpush2.xpose.msra.mxu0 0.0
        %1115 = vmatprep.subr.mxu0 0.0
        %1116 = vmatpush2.xpose.msra.mxu0 0.0
        %1117 = vmatprep.subr.mxu0 0.0
        %1118 = vmatpush2.xpose.msra.mxu0 0.0
        %1119 = vmatprep.subr.mxu0 0.0
        %1120 = vmatpush2.xpose.msra.mxu0 0.0
        %1121 = vmatprep.subr.mxu0 0.0
        %1122 = vmatpush2.xpose.msra.mxu0 0.0
        %1123 = vmatprep.subr.mxu0 0.0
        %1124 = vmatpush2.xpose.msra.mxu0 0.0
        %1125 = vmatprep.subr.mxu0 0.0
        %1126 = vmatpush2.xpose.msra.mxu0 0.0
        %1127 = vmatprep.subr.mxu0 0.0
        %1128 = vmatpush2.xpose.msra.mxu0 0.0
        %1129 = vmatprep.subr.mxu0 0.0
        %1130 = vmatpush2.xpose.msra.mxu0 0.0
        %1131 = vmatprep.subr.mxu0 0.0
        %1132 = vmatpush2.xpose.msra.mxu0 0.0
        %1133 = vmatprep.subr.mxu0 0.0
        %1134 = vmatpush2.xpose.msra.mxu0 0.0
        %1135 = vmatprep.subr.mxu0 0.0
        %1136 = vmatpush2.xpose.msra.mxu0 0.0
        %1137 = vmatprep.mubr.f32.mxu0 0.0
        %1138 = vmatmul.mubr.f32.gmra.mxu0 %v1069
        %v1139 = vpop.f32.mrf.mxu0
        %v1140 = vadd.f32 0.0, %v1139
        %v1141 = vpop.f32.mrf.mxu0
        %1142 = vdwg.mxu0
        %v1143 = vmul.f32 %v1140, 0.25
        %v1144 = vadd.f32 %v1143, %v894
        %v1145 = vsel %vm897, %v1144, -inf
        %1146 = vmax.xlane.f32.xlu0 %v1145
        %v1147 = vpop.xlane.xlu0 %1146
        %v1148 = vsub.f32 %v1144, %v1147
        %v1149 = vmul.f32 %v1148, 1.442695
        %v1150 = vpow.pop %v1149
        %v1151 = vsel %vm897, %v1150, 0.0
        %1152 = vadd.xlane.f32.xlu0 %v1151
        %v1153 = vpop.xlane.xlu0 %1152
        %v1154 = vrcp.pop %v1153
        %v1155 = vmul.f32 %v1150, %v1154
        %1156 = vrot.lane.b32.xlu0 %v803, 48
        %v1157 = vpop.permute.xlu0 %1156
        %v1160 = vsel %vm897, %v1155, 0
        %1162 = vmatprep.subr.mxu0 0.0
        %1163 = vmatpush1.msra.mxu0 0.0
        %1164 = vmatprep.subr.mxu0 0.0
        %1165 = vmatpush1.msra.mxu0 0.0
        %1166 = vmatprep.subr.mxu0 0.0
        %1167 = vmatpush1.msra.mxu0 0.0
        %1168 = vmatprep.subr.mxu0 0.0
        %1169 = vmatpush1.msra.mxu0 0.0
        %1170 = vmatprep.subr.mxu0 0.0
        %1171 = vmatpush1.msra.mxu0 0.0
        %1172 = vmatprep.subr.mxu0 0.0
        %1173 = vmatpush1.msra.mxu0 0.0
        %1174 = vmatprep.subr.mxu0 0.0
        %1175 = vmatpush1.msra.mxu0 0.0
        %1176 = vmatprep.subr.mxu0 0.0
        %1177 = vmatpush1.msra.mxu0 0.0
        %1178 = vmatprep.subr.mxu0 0.0
        %1179 = vmatpush1.msra.mxu0 0.0
        %1180 = vmatprep.subr.mxu0 0.0
        %1181 = vmatpush1.msra.mxu0 0.0
        %1182 = vmatprep.subr.mxu0 0.0
        %1183 = vmatpush1.msra.mxu0 0.0
        %1184 = vmatprep.subr.mxu0 0.0
        %1185 = vmatpush1.msra.mxu0 0.0
        %1186 = vmatprep.subr.mxu0 0.0
        %1187 = vmatpush1.msra.mxu0 0.0
        %1188 = vmatprep.subr.mxu0 0.0
        %1189 = vmatpush1.msra.mxu0 0.0
        %1190 = vmatprep.subr.mxu0 0.0
        %1191 = vmatpush1.msra.mxu0 0.0
        %1192 = vmatprep.subr.mxu0 0.0
        %1193 = vmatpush1.msra.mxu0 %v1157
        %1194 = vmatprep.subr.mxu0 0.0
        %1195 = vmatpush2.msra.mxu0 0.0
        %1196 = vmatprep.subr.mxu0 0.0
        %1197 = vmatpush2.msra.mxu0 0.0
        %1198 = vmatprep.subr.mxu0 0.0
        %1199 = vmatpush2.msra.mxu0 0.0
        %1200 = vmatprep.subr.mxu0 0.0
        %1201 = vmatpush2.msra.mxu0 0.0
        %1202 = vmatprep.subr.mxu0 0.0
        %1203 = vmatpush2.msra.mxu0 0.0
        %1204 = vmatprep.subr.mxu0 0.0
        %1205 = vmatpush2.msra.mxu0 0.0
        %1206 = vmatprep.subr.mxu0 0.0
        %1207 = vmatpush2.msra.mxu0 0.0
        %1208 = vmatprep.subr.mxu0 0.0
        %1209 = vmatpush2.msra.mxu0 0.0
        %1210 = vmatprep.subr.mxu0 0.0
        %1211 = vmatpush2.msra.mxu0 0.0
        %1212 = vmatprep.subr.mxu0 0.0
        %1213 = vmatpush2.msra.mxu0 0.0
        %1214 = vmatprep.subr.mxu0 0.0
        %1215 = vmatpush2.msra.mxu0 0.0
        %1216 = vmatprep.subr.mxu0 0.0
        %1217 = vmatpush2.msra.mxu0 0.0
        %1218 = vmatprep.subr.mxu0 0.0
        %1219 = vmatpush2.msra.mxu0 0.0
        %1220 = vmatprep.subr.mxu0 0.0
        %1221 = vmatpush2.msra.mxu0 0.0
        %1222 = vmatprep.subr.mxu0 0.0
        %1223 = vmatpush2.msra.mxu0 0.0
        %1224 = vmatprep.subr.mxu0 0.0
        %1225 = vmatpush2.msra.mxu0 0.0
        %1226 = vmatprep.mubr.f32.mxu0 0.0
        %1227 = vmatmul.mubr.f32.gmra.mxu0 %v1160
        %v1228 = vpop.f32.mrf.mxu0
        %v1229 = vadd.f32 0.0, %v1228
        %v1230 = vpop.f32.mrf.mxu0
        %1231 = vdwg.mxu0
        %v1233 = vsel %vm814, %v1229, 0
        %1235 = vmatprep.subr.mxu0 0.0
        %1236 = vmatpush1.msra.mxu0 0.0
        %1237 = vmatprep.subr.mxu0 0.0
        %1238 = vmatpush1.msra.mxu0 0.0
        %1239 = vmatprep.subr.mxu0 0.0
        %1240 = vmatpush1.msra.mxu0 0.0
        %1241 = vmatprep.subr.mxu0 0.0
        %1242 = vmatpush1.msra.mxu0 0.0
        %1243 = vmatprep.subr.mxu0 0.0
        %1244 = vmatpush1.msra.mxu0 0.0
        %1245 = vmatprep.subr.mxu0 0.0
        %1246 = vmatpush1.msra.mxu0 0.0
        %1247 = vmatprep.subr.mxu0 0.0
        %1248 = vmatpush1.msra.mxu0 0.0
        %1249 = vmatprep.subr.mxu0 0.0
        %1250 = vmatpush1.msra.mxu0 0.0
        %1251 = vmatprep.subr.mxu0 0.0
        %1252 = vmatpush1.msra.mxu0 0.0
        %1253 = vmatprep.subr.mxu0 0.0
        %1254 = vmatpush1.msra.mxu0 0.0
        %1255 = vmatprep.subr.mxu0 0.0
        %1256 = vmatpush1.msra.mxu0 0.0
        %1257 = vmatprep.subr.mxu0 0.0
        %1258 = vmatpush1.msra.mxu0 0.0
        %1259 = vmatprep.subr.mxu0 0.0
        %1260 = vmatpush1.msra.mxu0 0.0
        %1261 = vmatprep.subr.mxu0 0.0
        %1262 = vmatpush1.msra.mxu0 0.0
        %1263 = vmatprep.subr.mxu0 0.0
        %1264 = vmatpush1.msra.mxu0 %v809
        %1265 = vmatprep.subr.mxu0 0.0
        %1266 = vmatpush1.msra.mxu0 %v808
        %1267 = vmatprep.subr.mxu0 0.0
        %1268 = vmatpush2.msra.mxu0 0.0
        %1269 = vmatprep.subr.mxu0 0.0
        %1270 = vmatpush2.msra.mxu0 0.0
        %1271 = vmatprep.subr.mxu0 0.0
        %1272 = vmatpush2.msra.mxu0 0.0
        %1273 = vmatprep.subr.mxu0 0.0
        %1274 = vmatpush2.msra.mxu0 0.0
        %1275 = vmatprep.subr.mxu0 0.0
        %1276 = vmatpush2.msra.mxu0 0.0
        %1277 = vmatprep.subr.mxu0 0.0
        %1278 = vmatpush2.msra.mxu0 0.0
        %1279 = vmatprep.subr.mxu0 0.0
        %1280 = vmatpush2.msra.mxu0 0.0
        %1281 = vmatprep.subr.mxu0 0.0
        %1282 = vmatpush2.msra.mxu0 0.0
        %1283 = vmatprep.subr.mxu0 0.0
        %1284 = vmatpush2.msra.mxu0 0.0
        %1285 = vmatprep.subr.mxu0 0.0
        %1286 = vmatpush2.msra.mxu0 0.0
        %1287 = vmatprep.subr.mxu0 0.0
        %1288 = vmatpush2.msra.mxu0 0.0
        %1289 = vmatprep.subr.mxu0 0.0
        %1290 = vmatpush2.msra.mxu0 0.0
        %1291 = vmatprep.subr.mxu0 0.0
        %1292 = vmatpush2.msra.mxu0 0.0
        %1293 = vmatprep.subr.mxu0 0.0
        %1294 = vmatpush2.msra.mxu0 0.0
        %1295 = vmatprep.subr.mxu0 0.0
        %1296 = vmatpush2.msra.mxu0 0.0
        %1297 = vmatprep.subr.mxu0 0.0
        %1298 = vmatpush2.msra.mxu0 0.0
        %1299 = vmatprep.mubr.f32.mxu0 0.0
        %1300 = vmatmul.mubr.f32.gmra.mxu0 %v1233
        %v1301 = vpop.f32.mrf.mxu0
        %v1302 = vadd.f32 0.0, %v1301
        %v1303 = vpop.f32.mrf.mxu0
        %1304 = vdwg.mxu0
        %v1305 = vadd.f32 %v1064, %v1302
        %v1306 = vadd.f32 %v1305, %v721
        %v1307 = vld [vmem:[#allocation8] sm:$0x1]
        %v1308 = vld [vmem:[#allocation10] sm:$0x1]
        %v1309 = vsel %vm693, %v1306, 0.0
        %1310 = vadd.xlane.f32.xlu0 %v1309
        %v1311 = vpop.xlane.xlu0 %1310
        %v1312 = vmul.f32 %v1311, %v697
        %v1313 = vsub.f32 %v1306, %v1312
        %v1314 = vmul.f32 %v1313, %v1313
        %v1315 = vsel %vm693, %v1314, 0.0
        %1316 = vadd.xlane.f32.xlu0 %v1315
        %v1317 = vpop.xlane.xlu0 %1316
        %v1318 = vmul.f32 %v1317, %v697
        %v1319 = vadd.f32 %v1318, 1e-12
        %v1320 = vrsqrt.pop %v1319
        %v1321 = vmul.f32 %v1313, %v1320
        %v1323 = vlaneseq
        %v1324 = vshrl.u32 %v1323, 7
        %v1325 = vsub.s32 0, %v1324
        %v1326 = vrot.slane %v1307, %v1325
        %v1328 = vmul.f32 %v1321, %v1326
        %v1330 = vlaneseq
        %v1331 = vshrl.u32 %v1330, 7
        %v1332 = vsub.s32 0, %v1331
        %v1333 = vrot.slane %v1308, %v1332
        %v1335 = vadd.f32 %v1328, %v1333
        %v1336 = vld [vmem:[%s10] sm:$0xff]
        %v1337 = vld [vmem:[%s10 + $0x8] sm:$0xff]
        %v1338 = vld [vmem:[%s10 + $0x10] sm:$0xff]
        %v1339 = vld [vmem:[%s10 + $0x18] sm:$0xff]
        %v1340 = vld [vmem:[#allocation11] sm:$0x1]
        %v1342 = vlaneseq
        %v1343 = vshrl.u32 %v1342, 7
        %v1344 = vsub.s32 0, %v1343
        %v1345 = vrot.slane %v1340, %v1344
        %v1348 = vsel %vm693, %v1335, 0
        %1350 = vmatprep.subr.mxu0 0.0
        %1351 = vmatpush1.msra.mxu0 0.0
        %1352 = vmatprep.subr.mxu0 0.0
        %1353 = vmatpush1.msra.mxu0 0.0
        %1354 = vmatprep.subr.mxu0 0.0
        %1355 = vmatpush1.msra.mxu0 0.0
        %1356 = vmatprep.subr.mxu0 0.0
        %1357 = vmatpush1.msra.mxu0 0.0
        %1358 = vmatprep.subr.mxu0 0.0
        %1359 = vmatpush1.msra.mxu0 0.0
        %1360 = vmatprep.subr.mxu0 0.0
        %1361 = vmatpush1.msra.mxu0 0.0
        %1362 = vmatprep.subr.mxu0 0.0
        %1363 = vmatpush1.msra.mxu0 0.0
        %1364 = vmatprep.subr.mxu0 0.0
        %1365 = vmatpush1.msra.mxu0 0.0
        %1366 = vmatprep.subr.mxu0 0.0
        %1367 = vmatpush1.msra.mxu0 0.0
        %1368 = vmatprep.subr.mxu0 0.0
        %1369 = vmatpush1.msra.mxu0 0.0
        %1370 = vmatprep.subr.mxu0 0.0
        %1371 = vmatpush1.msra.mxu0 0.0
        %1372 = vmatprep.subr.mxu0 0.0
        %1373 = vmatpush1.msra.mxu0 0.0
        %1374 = vmatprep.subr.mxu0 0.0
        %1375 = vmatpush1.msra.mxu0 %v1339
        %1376 = vmatprep.subr.mxu0 0.0
        %1377 = vmatpush1.msra.mxu0 %v1338
        %1378 = vmatprep.subr.mxu0 0.0
        %1379 = vmatpush1.msra.mxu0 %v1337
        %1380 = vmatprep.subr.mxu0 0.0
        %1381 = vmatpush1.msra.mxu0 %v1336
        %1382 = vmatprep.subr.mxu0 0.0
        %1383 = vmatpush2.msra.mxu0 0.0
        %1384 = vmatprep.subr.mxu0 0.0
        %1385 = vmatpush2.msra.mxu0 0.0
        %1386 = vmatprep.subr.mxu0 0.0
        %1387 = vmatpush2.msra.mxu0 0.0
        %1388 = vmatprep.subr.mxu0 0.0
        %1389 = vmatpush2.msra.mxu0 0.0
        %1390 = vmatprep.subr.mxu0 0.0
        %1391 = vmatpush2.msra.mxu0 0.0
        %1392 = vmatprep.subr.mxu0 0.0
        %1393 = vmatpush2.msra.mxu0 0.0
        %1394 = vmatprep.subr.mxu0 0.0
        %1395 = vmatpush2.msra.mxu0 0.0
        %1396 = vmatprep.subr.mxu0 0.0
        %1397 = vmatpush2.msra.mxu0 0.0
        %1398 = vmatprep.subr.mxu0 0.0
        %1399 = vmatpush2.msra.mxu0 0.0
        %1400 = vmatprep.subr.mxu0 0.0
        %1401 = vmatpush2.msra.mxu0 0.0
        %1402 = vmatprep.subr.mxu0 0.0
        %1403 = vmatpush2.msra.mxu0 0.0
        %1404 = vmatprep.subr.mxu0 0.0
        %1405 = vmatpush2.msra.mxu0 0.0
        %1406 = vmatprep.subr.mxu0 0.0
        %1407 = vmatpush2.msra.mxu0 0.0
        %1408 = vmatprep.subr.mxu0 0.0
        %1409 = vmatpush2.msra.mxu0 0.0
        %1410 = vmatprep.subr.mxu0 0.0
        %1411 = vmatpush2.msra.mxu0 0.0
        %1412 = vmatprep.subr.mxu0 0.0
        %1413 = vmatpush2.msra.mxu0 0.0
        %1414 = vmatprep.mubr.f32.mxu0 0.0
        %1415 = vmatmul.mubr.f32.gmra.mxu0 %v1348
        %v1416 = vpop.f32.mrf.mxu0
        %v1417 = vadd.f32 %v1345, %v1416
        %v1418 = vpop.f32.mrf.mxu0
        %1419 = vdwg.mxu0
        %v1420 = vmul.f32 %v1417, 0.5
        %v1421 = vmul.f32 %v1417, 0.044715
        %v1422 = vmul.f32 %v1421, %v1417
        %v1423 = vmul.f32 %v1422, %v1417
        %v1424 = vadd.f32 %v1417, %v1423
        %v1425 = vmul.f32 %v1424, 0.7978846
        %v1426 = vtanh.pop %v1425
        %v1427 = vadd.f32 %v1426, 1.0
        %v1428 = vmul.f32 %v1420, %v1427
        %v1429 = vld [vmem:[%s12] sm:$0xff]
        %v1430 = vld [vmem:[%s12 + $0x8] sm:$0xff]
        %v1431 = vld [vmem:[%s12 + $0x10] sm:$0xff]
        %v1432 = vld [vmem:[%s12 + $0x18] sm:$0xff]
        %v1433 = vld [vmem:[%s12 + $0x20] sm:$0xff]
        %v1434 = vld [vmem:[%s12 + $0x28] sm:$0xff]
        %v1435 = vld [vmem:[%s12 + $0x30] sm:$0xff]
        %v1436 = vld [vmem:[%s12 + $0x38] sm:$0xff]
        %v1437 = vld [vmem:[#allocation13] sm:$0x1]
        %v1439 = vlaneseq
        %v1440 = vshrl.u32 %v1439, 7
        %v1441 = vsub.s32 0, %v1440
        %v1442 = vrot.slane %v1437, %v1441
        %vm1444 = vcmask 523264
        %v1446 = vsel %vm1444, %v1428, 0
        %1448 = vmatprep.subr.mxu0 0.0
        %1449 = vmatpush1.msra.mxu0 0.0
        %1450 = vmatprep.subr.mxu0 0.0
        %1451 = vmatpush1.msra.mxu0 0.0
        %1452 = vmatprep.subr.mxu0 0.0
        %1453 = vmatpush1.msra.mxu0 0.0
        %1454 = vmatprep.subr.mxu0 0.0
        %1455 = vmatpush1.msra.mxu0 0.0
        %1456 = vmatprep.subr.mxu0 0.0
        %1457 = vmatpush1.msra.mxu0 0.0
        %1458 = vmatprep.subr.mxu0 0.0
        %1459 = vmatpush1.msra.mxu0 0.0
        %1460 = vmatprep.subr.mxu0 0.0
        %1461 = vmatpush1.msra.mxu0 0.0
        %1462 = vmatprep.subr.mxu0 0.0
        %1463 = vmatpush1.msra.mxu0 0.0
        %1464 = vmatprep.subr.mxu0 0.0
        %1465 = vmatpush1.msra.mxu0 %v1436
        %1466 = vmatprep.subr.mxu0 0.0
        %1467 = vmatpush1.msra.mxu0 %v1435
        %1468 = vmatprep.subr.mxu0 0.0
        %1469 = vmatpush1.msra.mxu0 %v1434
        %1470 = vmatprep.subr.mxu0 0.0
        %1471 = vmatpush1.msra.mxu0 %v1433
        %1472 = vmatprep.subr.mxu0 0.0
        %1473 = vmatpush1.msra.mxu0 %v1432
        %1474 = vmatprep.subr.mxu0 0.0
        %1475 = vmatpush1.msra.mxu0 %v1431
        %1476 = vmatprep.subr.mxu0 0.0
        %1477 = vmatpush1.msra.mxu0 %v1430
        %1478 = vmatprep.subr.mxu0 0.0
        %1479 = vmatpush1.msra.mxu0 %v1429
        %1480 = vmatprep.subr.mxu0 0.0
        %1481 = vmatpush2.msra.mxu0 0.0
        %1482 = vmatprep.subr.mxu0 0.0
        %1483 = vmatpush2.msra.mxu0 0.0
        %1484 = vmatprep.subr.mxu0 0.0
        %1485 = vmatpush2.msra.mxu0 0.0
        %1486 = vmatprep.subr.mxu0 0.0
        %1487 = vmatpush2.msra.mxu0 0.0
        %1488 = vmatprep.subr.mxu0 0.0
        %1489 = vmatpush2.msra.mxu0 0.0
        %1490 = vmatprep.subr.mxu0 0.0
        %1491 = vmatpush2.msra.mxu0 0.0
        %1492 = vmatprep.subr.mxu0 0.0
        %1493 = vmatpush2.msra.mxu0 0.0
        %1494 = vmatprep.subr.mxu0 0.0
        %1495 = vmatpush2.msra.mxu0 0.0
        %1496 = vmatprep.subr.mxu0 0.0
        %1497 = vmatpush2.msra.mxu0 0.0
        %1498 = vmatprep.subr.mxu0 0.0
        %1499 = vmatpush2.msra.mxu0 0.0
        %1500 = vmatprep.subr.mxu0 0.0
        %1501 = vmatpush2.msra.mxu0 0.0
        %1502 = vmatprep.subr.mxu0 0.0
        %1503 = vmatpush2.msra.mxu0 0.0
        %1504 = vmatprep.subr.mxu0 0.0
        %1505 = vmatpush2.msra.mxu0 0.0
        %1506 = vmatprep.subr.mxu0 0.0
        %1507 = vmatpush2.msra.mxu0 0.0
        %1508 = vmatprep.subr.mxu0 0.0
        %1509 = vmatpush2.msra.mxu0 0.0
        %1510 = vmatprep.subr.mxu0 0.0
        %1511 = vmatpush2.msra.mxu0 0.0
        %1512 = vmatprep.mubr.f32.mxu0 0.0
        %1513 = vmatmul.mubr.f32.gmra.mxu0 %v1446
        %v1514 = vpop.f32.mrf.mxu0
        %v1515 = vadd.f32 %v1442, %v1514
        %v1516 = vpop.f32.mrf.mxu0
        %1517 = vdwg.mxu0
        %v1518 = vadd.f32 %v1515, %v1335
        %v1519 = vld [vmem:[%s14] sm:$0x1]
        %v1520 = vld [vmem:[%s15] sm:$0x1]
        %v1521 = vsel %vm693, %v1518, 0.0
        %1522 = vadd.xlane.f32.xlu0 %v1521
        %v1523 = vpop.xlane.xlu0 %1522
        %v1524 = vmul.f32 %v1523, %v697
        %v1525 = vsub.f32 %v1518, %v1524
        %v1526 = vmul.f32 %v1525, %v1525
        %v1527 = vsel %vm693, %v1526, 0.0
        %1528 = vadd.xlane.f32.xlu0 %v1527
        %v1529 = vpop.xlane.xlu0 %1528
        %v1530 = vmul.f32 %v1529, %v697
        %v1531 = vadd.f32 %v1530, 1e-12
        %v1532 = vrsqrt.pop %v1531
        %v1533 = vmul.f32 %v1525, %v1532
        %v1535 = vlaneseq
        %v1536 = vshrl.u32 %v1535, 7
        %v1537 = vsub.s32 0, %v1536
        %v1538 = vrot.slane %v1519, %v1537
        %v1540 = vmul.f32 %v1533, %v1538
        %v1542 = vlaneseq
        %v1543 = vshrl.u32 %v1542, 7
        %v1544 = vsub.s32 0, %v1543
        %v1545 = vrot.slane %v1520, %v1544
        %v1547 = vadd.f32 %v1540, %v1545
        %s1548 = scalar_lea.vmem %s4, 32
        %v1549 = vld [vmem:[%s1548] sm:$0xff]
        %v1550 = vld [vmem:[%s1548 + $0x8] sm:$0xff]
        %v1551 = vld [vmem:[%s1548 + $0x10] sm:$0xff]
        %v1552 = vld [vmem:[%s1548 + $0x18] sm:$0xff]
        %s1553 = scalar_lea.vmem %s5, 1
        %v1554 = vld [vmem:[%s1553] sm:$0x1]
        %v1556 = vlaneseq
        %v1557 = vshrl.u32 %v1556, 7
        %v1558 = vsub.s32 0, %v1557
        %v1559 = vrot.slane %v1554, %v1558
        %v1562 = vsel %vm693, %v1547, 0
        %1564 = vmatprep.subr.mxu0 0.0
        %1565 = vmatpush1.msra.mxu0 0.0
        %1566 = vmatprep.subr.mxu0 0.0
        %1567 = vmatpush1.msra.mxu0 0.0
        %1568 = vmatprep.subr.mxu0 0.0
        %1569 = vmatpush1.msra.mxu0 0.0
        %1570 = vmatprep.subr.mxu0 0.0
        %1571 = vmatpush1.msra.mxu0 0.0
        %1572 = vmatprep.subr.mxu0 0.0
        %1573 = vmatpush1.msra.mxu0 0.0
        %1574 = vmatprep.subr.mxu0 0.0
        %1575 = vmatpush1.msra.mxu0 0.0
        %1576 = vmatprep.subr.mxu0 0.0
        %1577 = vmatpush1.msra.mxu0 0.0
        %1578 = vmatprep.subr.mxu0 0.0
        %1579 = vmatpush1.msra.mxu0 0.0
        %1580 = vmatprep.subr.mxu0 0.0
        %1581 = vmatpush1.msra.mxu0 0.0
        %1582 = vmatprep.subr.mxu0 0.0
        %1583 = vmatpush1.msra.mxu0 0.0
        %1584 = vmatprep.subr.mxu0 0.0
        %1585 = vmatpush1.msra.mxu0 0.0
        %1586 = vmatprep.subr.mxu0 0.0
        %1587 = vmatpush1.msra.mxu0 0.0
        %1588 = vmatprep.subr.mxu0 0.0
        %1589 = vmatpush1.msra.mxu0 %v1552
        %1590 = vmatprep.subr.mxu0 0.0
        %1591 = vmatpush1.msra.mxu0 %v1551
        %1592 = vmatprep.subr.mxu0 0.0
        %1593 = vmatpush1.msra.mxu0 %v1550
        %1594 = vmatprep.subr.mxu0 0.0
        %1595 = vmatpush1.msra.mxu0 %v1549
        %1596 = vmatprep.subr.mxu0 0.0
        %1597 = vmatpush2.msra.mxu0 0.0
        %1598 = vmatprep.subr.mxu0 0.0
        %1599 = vmatpush2.msra.mxu0 0.0
        %1600 = vmatprep.subr.mxu0 0.0
        %1601 = vmatpush2.msra.mxu0 0.0
        %1602 = vmatprep.subr.mxu0 0.0
        %1603 = vmatpush2.msra.mxu0 0.0
        %1604 = vmatprep.subr.mxu0 0.0
        %1605 = vmatpush2.msra.mxu0 0.0
        %1606 = vmatprep.subr.mxu0 0.0
        %1607 = vmatpush2.msra.mxu0 0.0
        %1608 = vmatprep.subr.mxu0 0.0
        %1609 = vmatpush2.msra.mxu0 0.0
        %1610 = vmatprep.subr.mxu0 0.0
        %1611 = vmatpush2.msra.mxu0 0.0
        %1612 = vmatprep.subr.mxu0 0.0
        %1613 = vmatpush2.msra.mxu0 0.0
        %1614 = vmatprep.subr.mxu0 0.0
        %1615 = vmatpush2.msra.mxu0 0.0
        %1616 = vmatprep.subr.mxu0 0.0
        %1617 = vmatpush2.msra.mxu0 0.0
        %1618 = vmatprep.subr.mxu0 0.0
        %1619 = vmatpush2.msra.mxu0 0.0
        %1620 = vmatprep.subr.mxu0 0.0
        %1621 = vmatpush2.msra.mxu0 0.0
        %1622 = vmatprep.subr.mxu0 0.0
        %1623 = vmatpush2.msra.mxu0 0.0
        %1624 = vmatprep.subr.mxu0 0.0
        %1625 = vmatpush2.msra.mxu0 0.0
        %1626 = vmatprep.subr.mxu0 0.0
        %1627 = vmatpush2.msra.mxu0 0.0
        %1628 = vmatprep.mubr.f32.mxu0 0.0
        %1629 = vmatmul.mubr.f32.gmra.mxu0 %v1562
        %v1630 = vpop.f32.mrf.mxu0
        %v1631 = vadd.f32 %v1559, %v1630
        %v1632 = vpop.f32.mrf.mxu0
        %1633 = vdwg.mxu0
        %s1634 = scalar_lea.vmem %s6, 32
        %v1635 = vld [vmem:[%s1634] sm:$0xff]
        %v1636 = vld [vmem:[%s1634 + $0x8] sm:$0xff]
        %v1637 = vld [vmem:[%s1634 + $0x10] sm:$0xff]
        %v1638 = vld [vmem:[%s1634 + $0x18] sm:$0xff]
        %s1639 = scalar_lea.vmem [#allocation7], 1
        %v1640 = vld [vmem:[%s1639] sm:$0x1]
        %1642 = vrot.lane.b32.xlu0 %v1631, 96
        %v1643 = vpop.permute.xlu0 %1642
        %v1644 = vsel %vm814, %v1631, 0
        %v1646 = vsel %vm814, %v1643, 0
        %1648 = vmatprep.subr.mxu0 0.0
        %1649 = vmatpush1.xpose.msra.mxu0 0.0
        %1650 = vmatprep.subr.mxu0 0.0
        %1651 = vmatpush1.xpose.msra.mxu0 0.0
        %1652 = vmatprep.subr.mxu0 0.0
        %1653 = vmatpush1.xpose.msra.mxu0 0.0
        %1654 = vmatprep.subr.mxu0 0.0
        %1655 = vmatpush1.xpose.msra.mxu0 0.0
        %1656 = vmatprep.subr.mxu0 0.0
        %1657 = vmatpush1.xpose.msra.mxu0 0.0
        %1658 = vmatprep.subr.mxu0 0.0
        %1659 = vmatpush1.xpose.msra.mxu0 0.0
        %1660 = vmatprep.subr.mxu0 0.0
        %1661 = vmatpush1.xpose.msra.mxu0 0.0
        %1662 = vmatprep.subr.mxu0 0.0
        %1663 = vmatpush1.xpose.msra.mxu0 0.0
        %1664 = vmatprep.subr.mxu0 0.0
        %1665 = vmatpush1.xpose.msra.mxu0 0.0
        %1666 = vmatprep.subr.mxu0 0.0
        %1667 = vmatpush1.xpose.msra.mxu0 0.0
        %1668 = vmatprep.subr.mxu0 0.0
        %1669 = vmatpush1.xpose.msra.mxu0 0.0
        %1670 = vmatprep.subr.mxu0 0.0
        %1671 = vmatpush1.xpose.msra.mxu0 0.0
        %1672 = vmatprep.subr.mxu0 0.0
        %1673 = vmatpush1.xpose.msra.mxu0 0.0
        %1674 = vmatprep.subr.mxu0 0.0
        %1675 = vmatpush1.xpose.msra.mxu0 0.0
        %1676 = vmatprep.subr.mxu0 0.0
        %1677 = vmatpush1.xpose.msra.mxu0 0.0
        %1678 = vmatprep.subr.mxu0 0.0
        %1679 = vmatpush1.xpose.msra.mxu0 %v1646
        %1680 = vmatprep.subr.mxu0 0.0
        %1681 = vmatpush2.xpose.msra.mxu0 0.0
        %1682 = vmatprep.subr.mxu0 0.0
        %1683 = vmatpush2.xpose.msra.mxu0 0.0
        %1684 = vmatprep.subr.mxu0 0.0
        %1685 = vmatpush2.xpose.msra.mxu0 0.0
        %1686 = vmatprep.subr.mxu0 0.0
        %1687 = vmatpush2.xpose.msra.mxu0 0.0
        %1688 = vmatprep.subr.mxu0 0.0
        %1689 = vmatpush2.xpose.msra.mxu0 0.0
        %1690 = vmatprep.subr.mxu0 0.0
        %1691 = vmatpush2.xpose.msra.mxu0 0.0
        %1692 = vmatprep.subr.mxu0 0.0
        %1693 = vmatpush2.xpose.msra.mxu0 0.0
        %1694 = vmatprep.subr.mxu0 0.0
        %1695 = vmatpush2.xpose.msra.mxu0 0.0
        %1696 = vmatprep.subr.mxu0 0.0
        %1697 = vmatpush2.xpose.msra.mxu0 0.0
        %1698 = vmatprep.subr.mxu0 0.0
        %1699 = vmatpush2.xpose.msra.mxu0 0.0
        %1700 = vmatprep.subr.mxu0 0.0
        %1701 = vmatpush2.xpose.msra.mxu0 0.0
        %1702 = vmatprep.subr.mxu0 0.0
        %1703 = vmatpush2.xpose.msra.mxu0 0.0
        %1704 = vmatprep.subr.mxu0 0.0
        %1705 = vmatpush2.xpose.msra.mxu0 0.0
        %1706 = vmatprep.subr.mxu0 0.0
        %1707 = vmatpush2.xpose.msra.mxu0 0.0
        %1708 = vmatprep.subr.mxu0 0.0
        %1709 = vmatpush2.xpose.msra.mxu0 0.0
        %1710 = vmatprep.subr.mxu0 0.0
        %1711 = vmatpush2.xpose.msra.mxu0 0.0
        %1712 = vmatprep.mubr.f32.mxu0 0.0
        %1713 = vmatmul.mubr.f32.gmra.mxu0 %v1644
        %v1714 = vpop.f32.mrf.mxu0
        %v1715 = vadd.f32 0.0, %v1714
        %v1716 = vpop.f32.mrf.mxu0
        %1717 = vdwg.mxu0
        %v1718 = vmul.f32 %v1715, 0.25
        %v1719 = vadd.f32 %v1718, %v894
        %v1720 = vsel %vm897, %v1719, -inf
        %1721 = vmax.xlane.f32.xlu0 %v1720
        %v1722 = vpop.xlane.xlu0 %1721
        %v1723 = vsub.f32 %v1719, %v1722
        %v1724 = vmul.f32 %v1723, 1.442695
        %v1725 = vpow.pop %v1724
        %v1726 = vsel %vm897, %v1725, 0.0
        %1727 = vadd.xlane.f32.xlu0 %v1726
        %v1728 = vpop.xlane.xlu0 %1727
        %v1729 = vrcp.pop %v1728
        %v1730 = vmul.f32 %v1725, %v1729
        %1731 = vrot.lane.b32.xlu0 %v1631, 64
        %v1732 = vpop.permute.xlu0 %1731
        %v1735 = vsel %vm897, %v1730, 0
        %1737 = vmatprep.subr.mxu0 0.0
        %1738 = vmatpush1.msra.mxu0 0.0
        %1739 = vmatprep.subr.mxu0 0.0
        %1740 = vmatpush1.msra.mxu0 0.0
        %1741 = vmatprep.subr.mxu0 0.0
        %1742 = vmatpush1.msra.mxu0 0.0
        %1743 = vmatprep.subr.mxu0 0.0
        %1744 = vmatpush1.msra.mxu0 0.0
        %1745 = vmatprep.subr.mxu0 0.0
        %1746 = vmatpush1.msra.mxu0 0.0
        %1747 = vmatprep.subr.mxu0 0.0
        %1748 = vmatpush1.msra.mxu0 0.0
        %1749 = vmatprep.subr.mxu0 0.0
        %1750 = vmatpush1.msra.mxu0 0.0
        %1751 = vmatprep.subr.mxu0 0.0
        %1752 = vmatpush1.msra.mxu0 0.0
        %1753 = vmatprep.subr.mxu0 0.0
        %1754 = vmatpush1.msra.mxu0 0.0
        %1755 = vmatprep.subr.mxu0 0.0
        %1756 = vmatpush1.msra.mxu0 0.0
        %1757 = vmatprep.subr.mxu0 0.0
        %1758 = vmatpush1.msra.mxu0 0.0
        %1759 = vmatprep.subr.mxu0 0.0
        %1760 = vmatpush1.msra.mxu0 0.0
        %1761 = vmatprep.subr.mxu0 0.0
        %1762 = vmatpush1.msra.mxu0 0.0
        %1763 = vmatprep.subr.mxu0 0.0
        %1764 = vmatpush1.msra.mxu0 0.0
        %1765 = vmatprep.subr.mxu0 0.0
        %1766 = vmatpush1.msra.mxu0 0.0
        %1767 = vmatprep.subr.mxu0 0.0
        %1768 = vmatpush1.msra.mxu0 %v1732
        %1769 = vmatprep.subr.mxu0 0.0
        %1770 = vmatpush2.msra.mxu0 0.0
        %1771 = vmatprep.subr.mxu0 0.0
        %1772 = vmatpush2.msra.mxu0 0.0
        %1773 = vmatprep.subr.mxu0 0.0
        %1774 = vmatpush2.msra.mxu0 0.0
        %1775 = vmatprep.subr.mxu0 0.0
        %1776 = vmatpush2.msra.mxu0 0.0
        %1777 = vmatprep.subr.mxu0 0.0
        %1778 = vmatpush2.msra.mxu0 0.0
        %1779 = vmatprep.subr.mxu0 0.0
        %1780 = vmatpush2.msra.mxu0 0.0
        %1781 = vmatprep.subr.mxu0 0.0
        %1782 = vmatpush2.msra.mxu0 0.0
        %1783 = vmatprep.subr.mxu0 0.0
        %1784 = vmatpush2.msra.mxu0 0.0
        %1785 = vmatprep.subr.mxu0 0.0
        %1786 = vmatpush2.msra.mxu0 0.0
        %1787 = vmatprep.subr.mxu0 0.0
        %1788 = vmatpush2.msra.mxu0 0.0
        %1789 = vmatprep.subr.mxu0 0.0
        %1790 = vmatpush2.msra.mxu0 0.0
        %1791 = vmatprep.subr.mxu0 0.0
        %1792 = vmatpush2.msra.mxu0 0.0
        %1793 = vmatprep.subr.mxu0 0.0
        %1794 = vmatpush2.msra.mxu0 0.0
        %1795 = vmatprep.subr.mxu0 0.0
        %1796 = vmatpush2.msra.mxu0 0.0
        %1797 = vmatprep.subr.mxu0 0.0
        %1798 = vmatpush2.msra.mxu0 0.0
        %1799 = vmatprep.subr.mxu0 0.0
        %1800 = vmatpush2.msra.mxu0 0.0
        %1801 = vmatprep.mubr.f32.mxu0 0.0
        %1802 = vmatmul.mubr.f32.gmra.mxu0 %v1735
        %v1803 = vpop.f32.mrf.mxu0
        %v1804 = vadd.f32 0.0, %v1803
        %v1805 = vpop.f32.mrf.mxu0
        %1806 = vdwg.mxu0
        %v1808 = vsel %vm814, %v1804, 0
        %1810 = vmatprep.subr.mxu0 0.0
        %1811 = vmatpush1.msra.mxu0 0.0
        %1812 = vmatprep.subr.mxu0 0.0
        %1813 = vmatpush1.msra.mxu0 0.0
        %1814 = vmatprep.subr.mxu0 0.0
        %1815 = vmatpush1.msra.mxu0 0.0
        %1816 = vmatprep.subr.mxu0 0.0
        %1817 = vmatpush1.msra.mxu0 0.0
        %1818 = vmatprep.subr.mxu0 0.0
        %1819 = vmatpush1.msra.mxu0 0.0
        %1820 = vmatprep.subr.mxu0 0.0
        %1821 = vmatpush1.msra.mxu0 0.0
        %1822 = vmatprep.subr.mxu0 0.0
        %1823 = vmatpush1.msra.mxu0 0.0
        %1824 = vmatprep.subr.mxu0 0.0
        %1825 = vmatpush1.msra.mxu0 0.0
        %1826 = vmatprep.subr.mxu0 0.0
        %1827 = vmatpush1.msra.mxu0 0.0
        %1828 = vmatprep.subr.mxu0 0.0
        %1829 = vmatpush1.msra.mxu0 0.0
        %1830 = vmatprep.subr.mxu0 0.0
        %1831 = vmatpush1.msra.mxu0 0.0
        %1832 = vmatprep.subr.mxu0 0.0
        %1833 = vmatpush1.msra.mxu0 0.0
        %1834 = vmatprep.subr.mxu0 0.0
        %1835 = vmatpush1.msra.mxu0 0.0
        %1836 = vmatprep.subr.mxu0 0.0
        %1837 = vmatpush1.msra.mxu0 0.0
        %1838 = vmatprep.subr.mxu0 0.0
        %1839 = vmatpush1.msra.mxu0 %v1636
        %1840 = vmatprep.subr.mxu0 0.0
        %1841 = vmatpush1.msra.mxu0 %v1635
        %1842 = vmatprep.subr.mxu0 0.0
        %1843 = vmatpush2.msra.mxu0 0.0
        %1844 = vmatprep.subr.mxu0 0.0
        %1845 = vmatpush2.msra.mxu0 0.0
        %1846 = vmatprep.subr.mxu0 0.0
        %1847 = vmatpush2.msra.mxu0 0.0
        %1848 = vmatprep.subr.mxu0 0.0
        %1849 = vmatpush2.msra.mxu0 0.0
        %1850 = vmatprep.subr.mxu0 0.0
        %1851 = vmatpush2.msra.mxu0 0.0
        %1852 = vmatprep.subr.mxu0 0.0
        %1853 = vmatpush2.msra.mxu0 0.0
        %1854 = vmatprep.subr.mxu0 0.0
        %1855 = vmatpush2.msra.mxu0 0.0
        %1856 = vmatprep.subr.mxu0 0.0
        %1857 = vmatpush2.msra.mxu0 0.0
        %1858 = vmatprep.subr.mxu0 0.0
        %1859 = vmatpush2.msra.mxu0 0.0
        %1860 = vmatprep.subr.mxu0 0.0
        %1861 = vmatpush2.msra.mxu0 0.0
        %1862 = vmatprep.subr.mxu0 0.0
        %1863 = vmatpush2.msra.mxu0 0.0
        %1864 = vmatprep.subr.mxu0 0.0
        %1865 = vmatpush2.msra.mxu0 0.0
        %1866 = vmatprep.subr.mxu0 0.0
        %1867 = vmatpush2.msra.mxu0 0.0
        %1868 = vmatprep.subr.mxu0 0.0
        %1869 = vmatpush2.msra.mxu0 0.0
        %1870 = vmatprep.subr.mxu0 0.0
        %1871 = vmatpush2.msra.mxu0 0.0
        %1872 = vmatprep.subr.mxu0 0.0
        %1873 = vmatpush2.msra.mxu0 0.0
        %1874 = vmatprep.mubr.f32.mxu0 0.0
        %1875 = vmatmul.mubr.f32.gmra.mxu0 %v1808
        %v1876 = vpop.f32.mrf.mxu0
        %v1877 = vadd.f32 0.0, %v1876
        %v1878 = vpop.f32.mrf.mxu0
        %1879 = vdwg.mxu0
        %v1881 = vlaneseq
        %v1882 = vshrl.u32 %v1881, 7
        %v1883 = vsub.s32 0, %v1882
        %v1884 = vrot.slane %v1640, %v1883
        %v1886 = vadd.f32 %v1884, %v1877
        %1887 = vrot.lane.b32.xlu0 %v1631, 112
        %v1888 = vpop.permute.xlu0 %1887
        %1889 = vrot.lane.b32.xlu0 %v1631, 80
        %v1890 = vpop.permute.xlu0 %1889
        %v1891 = vsel %vm814, %v1888, 0
        %v1893 = vsel %vm814, %v1890, 0
        %1895 = vmatprep.subr.mxu0 0.0
        %1896 = vmatpush1.xpose.msra.mxu0 0.0
        %1897 = vmatprep.subr.mxu0 0.0
        %1898 = vmatpush1.xpose.msra.mxu0 0.0
        %1899 = vmatprep.subr.mxu0 0.0
        %1900 = vmatpush1.xpose.msra.mxu0 0.0
        %1901 = vmatprep.subr.mxu0 0.0
        %1902 = vmatpush1.xpose.msra.mxu0 0.0
        %1903 = vmatprep.subr.mxu0 0.0
        %1904 = vmatpush1.xpose.msra.mxu0 0.0
        %1905 = vmatprep.subr.mxu0 0.0
        %1906 = vmatpush1.xpose.msra.mxu0 0.0
        %1907 = vmatprep.subr.mxu0 0.0
        %1908 = vmatpush1.xpose.msra.mxu0 0.0
        %1909 = vmatprep.subr.mxu0 0.0
        %1910 = vmatpush1.xpose.msra.mxu0 0.0
        %1911 = vmatprep.subr.mxu0 0.0
        %1912 = vmatpush1.xpose.msra.mxu0 0.0
        %1913 = vmatprep.subr.mxu0 0.0
        %1914 = vmatpush1.xpose.msra.mxu0 0.0
        %1915 = vmatprep.subr.mxu0 0.0
        %1916 = vmatpush1.xpose.msra.mxu0 0.0
        %1917 = vmatprep.subr.mxu0 0.0
        %1918 = vmatpush1.xpose.msra.mxu0 0.0
        %1919 = vmatprep.subr.mxu0 0.0
        %1920 = vmatpush1.xpose.msra.mxu0 0.0
        %1921 = vmatprep.subr.mxu0 0.0
        %1922 = vmatpush1.xpose.msra.mxu0 0.0
        %1923 = vmatprep.subr.mxu0 0.0
        %1924 = vmatpush1.xpose.msra.mxu0 0.0
        %1925 = vmatprep.subr.mxu0 0.0
        %1926 = vmatpush1.xpose.msra.mxu0 %v1893
        %1927 = vmatprep.subr.mxu0 0.0
        %1928 = vmatpush2.xpose.msra.mxu0 0.0
        %1929 = vmatprep.subr.mxu0 0.0
        %1930 = vmatpush2.xpose.msra.mxu0 0.0
        %1931 = vmatprep.subr.mxu0 0.0
        %1932 = vmatpush2.xpose.msra.mxu0 0.0
        %1933 = vmatprep.subr.mxu0 0.0
        %1934 = vmatpush2.xpose.msra.mxu0 0.0
        %1935 = vmatprep.subr.mxu0 0.0
        %1936 = vmatpush2.xpose.msra.mxu0 0.0
        %1937 = vmatprep.subr.mxu0 0.0
        %1938 = vmatpush2.xpose.msra.mxu0 0.0
        %1939 = vmatprep.subr.mxu0 0.0
        %1940 = vmatpush2.xpose.msra.mxu0 0.0
        %1941 = vmatprep.subr.mxu0 0.0
        %1942 = vmatpush2.xpose.msra.mxu0 0.0
        %1943 = vmatprep.subr.mxu0 0.0
        %1944 = vmatpush2.xpose.msra.mxu0 0.0
        %1945 = vmatprep.subr.mxu0 0.0
        %1946 = vmatpush2.xpose.msra.mxu0 0.0
        %1947 = vmatprep.subr.mxu0 0.0
        %1948 = vmatpush2.xpose.msra.mxu0 0.0
        %1949 = vmatprep.subr.mxu0 0.0
        %1950 = vmatpush2.xpose.msra.mxu0 0.0
        %1951 = vmatprep.subr.mxu0 0.0
        %1952 = vmatpush2.xpose.msra.mxu0 0.0
        %1953 = vmatprep.subr.mxu0 0.0
        %1954 = vmatpush2.xpose.msra.mxu0 0.0
        %1955 = vmatprep.subr.mxu0 0.0
        %1956 = vmatpush2.xpose.msra.mxu0 0.0
        %1957 = vmatprep.subr.mxu0 0.0
        %1958 = vmatpush2.xpose.msra.mxu0 0.0
        %1959 = vmatprep.mubr.f32.mxu0 0.0
        %1960 = vmatmul.mubr.f32.gmra.mxu0 %v1891
        %v1961 = vpop.f32.mrf.mxu0
        %v1962 = vadd.f32 0.0, %v1961
        %v1963 = vpop.f32.mrf.mxu0
        %1964 = vdwg.mxu0
        %v1965 = vmul.f32 %v1962, 0.25
        %v1966 = vadd.f32 %v1965, %v894
        %v1967 = vsel %vm897, %v1966, -inf
        %1968 = vmax.xlane.f32.xlu0 %v1967
        %v1969 = vpop.xlane.xlu0 %1968
        %v1970 = vsub.f32 %v1966, %v1969
        %v1971 = vmul.f32 %v1970, 1.442695
        %v1972 = vpow.pop %v1971
        %v1973 = vsel %vm897, %v1972, 0.0
        %1974 = vadd.xlane.f32.xlu0 %v1973
        %v1975 = vpop.xlane.xlu0 %1974
        %v1976 = vrcp.pop %v1975
        %v1977 = vmul.f32 %v1972, %v1976
        %1978 = vrot.lane.b32.xlu0 %v1631, 48
        %v1979 = vpop.permute.xlu0 %1978
        %v1982 = vsel %vm897, %v1977, 0
        %1984 = vmatprep.subr.mxu0 0.0
        %1985 = vmatpush1.msra.mxu0 0.0
        %1986 = vmatprep.subr.mxu0 0.0
        %1987 = vmatpush1.msra.mxu0 0.0
        %1988 = vmatprep.subr.mxu0 0.0
        %1989 = vmatpush1.msra.mxu0 0.0
        %1990 = vmatprep.subr.mxu0 0.0
        %1991 = vmatpush1.msra.mxu0 0.0
        %1992 = vmatprep.subr.mxu0 0.0
        %1993 = vmatpush1.msra.mxu0 0.0
        %1994 = vmatprep.subr.mxu0 0.0
        %1995 = vmatpush1.msra.mxu0 0.0
        %1996 = vmatprep.subr.mxu0 0.0
        %1997 = vmatpush1.msra.mxu0 0.0
        %1998 = vmatprep.subr.mxu0 0.0
        %1999 = vmatpush1.msra.mxu0 0.0
        %2000 = vmatprep.subr.mxu0 0.0
        %2001 = vmatpush1.msra.mxu0 0.0
        %2002 = vmatprep.subr.mxu0 0.0
        %2003 = vmatpush1.msra.mxu0 0.0
        %2004 = vmatprep.subr.mxu0 0.0
        %2005 = vmatpush1.msra.mxu0 0.0
        %2006 = vmatprep.subr.mxu0 0.0
        %2007 = vmatpush1.msra.mxu0 0.0
        %2008 = vmatprep.subr.mxu0 0.0
        %2009 = vmatpush1.msra.mxu0 0.0
        %2010 = vmatprep.subr.mxu0 0.0
        %2011 = vmatpush1.msra.mxu0 0.0
        %2012 = vmatprep.subr.mxu0 0.0
        %2013 = vmatpush1.msra.mxu0 0.0
        %2014 = vmatprep.subr.mxu0 0.0
        %2015 = vmatpush1.msra.mxu0 %v1979
        %2016 = vmatprep.subr.mxu0 0.0
        %2017 = vmatpush2.msra.mxu0 0.0
        %2018 = vmatprep.subr.mxu0 0.0
        %2019 = vmatpush2.msra.mxu0 0.0
        %2020 = vmatprep.subr.mxu0 0.0
        %2021 = vmatpush2.msra.mxu0 0.0
        %2022 = vmatprep.subr.mxu0 0.0
        %2023 = vmatpush2.msra.mxu0 0.0
        %2024 = vmatprep.subr.mxu0 0.0
        %2025 = vmatpush2.msra.mxu0 0.0
        %2026 = vmatprep.subr.mxu0 0.0
        %2027 = vmatpush2.msra.mxu0 0.0
        %2028 = vmatprep.subr.mxu0 0.0
        %2029 = vmatpush2.msra.mxu0 0.0
        %2030 = vmatprep.subr.mxu0 0.0
        %2031 = vmatpush2.msra.mxu0 0.0
        %2032 = vmatprep.subr.mxu0 0.0
        %2033 = vmatpush2.msra.mxu0 0.0
        %2034 = vmatprep.subr.mxu0 0.0
        %2035 = vmatpush2.msra.mxu0 0.0
        %2036 = vmatprep.subr.mxu0 0.0
        %2037 = vmatpush2.msra.mxu0 0.0
        %2038 = vmatprep.subr.mxu0 0.0
        %2039 = vmatpush2.msra.mxu0 0.0
        %2040 = vmatprep.subr.mxu0 0.0
        %2041 = vmatpush2.msra.mxu0 0.0
        %2042 = vmatprep.subr.mxu0 0.0
        %2043 = vmatpush2.msra.mxu0 0.0
        %2044 = vmatprep.subr.mxu0 0.0
        %2045 = vmatpush2.msra.mxu0 0.0
        %2046 = vmatprep.subr.mxu0 0.0
        %2047 = vmatpush2.msra.mxu0 0.0
        %2048 = vmatprep.mubr.f32.mxu0 0.0
        %2049 = vmatmul.mubr.f32.gmra.mxu0 %v1982
        %v2050 = vpop.f32.mrf.mxu0
        %v2051 = vadd.f32 0.0, %v2050
        %v2052 = vpop.f32.mrf.mxu0
        %2053 = vdwg.mxu0
        %v2055 = vsel %vm814, %v2051, 0
        %2057 = vmatprep.subr.mxu0 0.0
        %2058 = vmatpush1.msra.mxu0 0.0
        %2059 = vmatprep.subr.mxu0 0.0
        %2060 = vmatpush1.msra.mxu0 0.0
        %2061 = vmatprep.subr.mxu0 0.0
        %2062 = vmatpush1.msra.mxu0 0.0
        %2063 = vmatprep.subr.mxu0 0.0
        %2064 = vmatpush1.msra.mxu0 0.0
        %2065 = vmatprep.subr.mxu0 0.0
        %2066 = vmatpush1.msra.mxu0 0.0
        %2067 = vmatprep.subr.mxu0 0.0
        %2068 = vmatpush1.msra.mxu0 0.0
        %2069 = vmatprep.subr.mxu0 0.0
        %2070 = vmatpush1.msra.mxu0 0.0
        %2071 = vmatprep.subr.mxu0 0.0
        %2072 = vmatpush1.msra.mxu0 0.0
        %2073 = vmatprep.subr.mxu0 0.0
        %2074 = vmatpush1.msra.mxu0 0.0
        %2075 = vmatprep.subr.mxu0 0.0
        %2076 = vmatpush1.msra.mxu0 0.0
        %2077 = vmatprep.subr.mxu0 0.0
        %2078 = vmatpush1.msra.mxu0 0.0
        %2079 = vmatprep.subr.mxu0 0.0
        %2080 = vmatpush1.msra.mxu0 0.0
        %2081 = vmatprep.subr.mxu0 0.0
        %2082 = vmatpush1.msra.mxu0 0.0
        %2083 = vmatprep.subr.mxu0 0.0
        %2084 = vmatpush1.msra.mxu0 0.0
        %2085 = vmatprep.subr.mxu0 0.0
        %2086 = vmatpush1.msra.mxu0 %v1638
        %2087 = vmatprep.subr.mxu0 0.0
        %2088 = vmatpush1.msra.mxu0 %v1637
        %2089 = vmatprep.subr.mxu0 0.0
        %2090 = vmatpush2.msra.mxu0 0.0
        %2091 = vmatprep.subr.mxu0 0.0
        %2092 = vmatpush2.msra.mxu0 0.0
        %2093 = vmatprep.subr.mxu0 0.0
        %2094 = vmatpush2.msra.mxu0 0.0
        %2095 = vmatprep.subr.mxu0 0.0
        %2096 = vmatpush2.msra.mxu0 0.0
        %2097 = vmatprep.subr.mxu0 0.0
        %2098 = vmatpush2.msra.mxu0 0.0
        %2099 = vmatprep.subr.mxu0 0.0
        %2100 = vmatpush2.msra.mxu0 0.0
        %2101 = vmatprep.subr.mxu0 0.0
        %2102 = vmatpush2.msra.mxu0 0.0
        %2103 = vmatprep.subr.mxu0 0.0
        %2104 = vmatpush2.msra.mxu0 0.0
        %2105 = vmatprep.subr.mxu0 0.0
        %2106 = vmatpush2.msra.mxu0 0.0
        %2107 = vmatprep.subr.mxu0 0.0
        %2108 = vmatpush2.msra.mxu0 0.0
        %2109 = vmatprep.subr.mxu0 0.0
        %2110 = vmatpush2.msra.mxu0 0.0
        %2111 = vmatprep.subr.mxu0 0.0
        %2112 = vmatpush2.msra.mxu0 0.0
        %2113 = vmatprep.subr.mxu0 0.0
        %2114 = vmatpush2.msra.mxu0 0.0
        %2115 = vmatprep.subr.mxu0 0.0
        %2116 = vmatpush2.msra.mxu0 0.0
        %2117 = vmatprep.subr.mxu0 0.0
        %2118 = vmatpush2.msra.mxu0 0.0
        %2119 = vmatprep.subr.mxu0 0.0
        %2120 = vmatpush2.msra.mxu0 0.0
        %2121 = vmatprep.mubr.f32.mxu0 0.0
        %2122 = vmatmul.mubr.f32.gmra.mxu0 %v2055
        %v2123 = vpop.f32.mrf.mxu0
        %v2124 = vadd.f32 0.0, %v2123
        %v2125 = vpop.f32.mrf.mxu0
        %2126 = vdwg.mxu0
        %v2127 = vadd.f32 %v1886, %v2124
        %v2128 = vadd.f32 %v2127, %v1547
        %s2129 = scalar_lea.vmem [#allocation8], 1
        %v2130 = vld [vmem:[%s2129] sm:$0x1]
        %s2131 = scalar_lea.vmem [#allocation10], 1
        %v2132 = vld [vmem:[%s2131] sm:$0x1]
        %v2133 = vsel %vm693, %v2128, 0.0
        %2134 = vadd.xlane.f32.xlu0 %v2133
        %v2135 = vpop.xlane.xlu0 %2134
        %v2136 = vmul.f32 %v2135, %v697
        %v2137 = vsub.f32 %v2128, %v2136
        %v2138 = vmul.f32 %v2137, %v2137
        %v2139 = vsel %vm693, %v2138, 0.0
        %2140 = vadd.xlane.f32.xlu0 %v2139
        %v2141 = vpop.xlane.xlu0 %2140
        %v2142 = vmul.f32 %v2141, %v697
        %v2143 = vadd.f32 %v2142, 1e-12
        %v2144 = vrsqrt.pop %v2143
        %v2145 = vmul.f32 %v2137, %v2144
        %v2147 = vlaneseq
        %v2148 = vshrl.u32 %v2147, 7
        %v2149 = vsub.s32 0, %v2148
        %v2150 = vrot.slane %v2130, %v2149
        %v2152 = vmul.f32 %v2145, %v2150
        %v2154 = vlaneseq
        %v2155 = vshrl.u32 %v2154, 7
        %v2156 = vsub.s32 0, %v2155
        %v2157 = vrot.slane %v2132, %v2156
        %v2159 = vadd.f32 %v2152, %v2157
        %s2160 = scalar_lea.vmem %s10, 32
        %v2161 = vld [vmem:[%s2160] sm:$0xff]
        %v2162 = vld [vmem:[%s2160 + $0x8] sm:$0xff]
        %v2163 = vld [vmem:[%s2160 + $0x10] sm:$0xff]
        %v2164 = vld [vmem:[%s2160 + $0x18] sm:$0xff]
        %s2165 = scalar_lea.vmem [#allocation11], 1
        %v2166 = vld [vmem:[%s2165] sm:$0x1]
        %v2168 = vlaneseq
        %v2169 = vshrl.u32 %v2168, 7
        %v2170 = vsub.s32 0, %v2169
        %v2171 = vrot.slane %v2166, %v2170
        %v2174 = vsel %vm693, %v2159, 0
        %2176 = vmatprep.subr.mxu0 0.0
        %2177 = vmatpush1.msra.mxu0 0.0
        %2178 = vmatprep.subr.mxu0 0.0
        %2179 = vmatpush1.msra.mxu0 0.0
        %2180 = vmatprep.subr.mxu0 0.0
        %2181 = vmatpush1.msra.mxu0 0.0
        %2182 = vmatprep.subr.mxu0 0.0
        %2183 = vmatpush1.msra.mxu0 0.0
        %2184 = vmatprep.subr.mxu0 0.0
        %2185 = vmatpush1.msra.mxu0 0.0
        %2186 = vmatprep.subr.mxu0 0.0
        %2187 = vmatpush1.msra.mxu0 0.0
        %2188 = vmatprep.subr.mxu0 0.0
        %2189 = vmatpush1.msra.mxu0 0.0
        %2190 = vmatprep.subr.mxu0 0.0
        %2191 = vmatpush1.msra.mxu0 0.0
        %2192 = vmatprep.subr.mxu0 0.0
        %2193 = vmatpush1.msra.mxu0 0.0
        %2194 = vmatprep.subr.mxu0 0.0
        %2195 = vmatpush1.msra.mxu0 0.0
        %2196 = vmatprep.subr.mxu0 0.0
        %2197 = vmatpush1.msra.mxu0 0.0
        %2198 = vmatprep.subr.mxu0 0.0
        %2199 = vmatpush1.msra.mxu0 0.0
        %2200 = vmatprep.subr.mxu0 0.0
        %2201 = vmatpush1.msra.mxu0 %v2164
        %2202 = vmatprep.subr.mxu0 0.0
        %2203 = vmatpush1.msra.mxu0 %v2163
        %2204 = vmatprep.subr.mxu0 0.0
        %2205 = vmatpush1.msra.mxu0 %v2162
        %2206 = vmatprep.subr.mxu0 0.0
        %2207 = vmatpush1.msra.mxu0 %v2161
        %2208 = vmatprep.subr.mxu0 0.0
        %2209 = vmatpush2.msra.mxu0 0.0
        %2210 = vmatprep.subr.mxu0 0.0
        %2211 = vmatpush2.msra.mxu0 0.0
        %2212 = vmatprep.subr.mxu0 0.0
        %2213 = vmatpush2.msra.mxu0 0.0
        %2214 = vmatprep.subr.mxu0 0.0
        %2215 = vmatpush2.msra.mxu0 0.0
        %2216 = vmatprep.subr.mxu0 0.0
        %2217 = vmatpush2.msra.mxu0 0.0
        %2218 = vmatprep.subr.mxu0 0.0
        %2219 = vmatpush2.msra.mxu0 0.0
        %2220 = vmatprep.subr.mxu0 0.0
        %2221 = vmatpush2.msra.mxu0 0.0
        %2222 = vmatprep.subr.mxu0 0.0
        %2223 = vmatpush2.msra.mxu0 0.0
        %2224 = vmatprep.subr.mxu0 0.0
        %2225 = vmatpush2.msra.mxu0 0.0
        %2226 = vmatprep.subr.mxu0 0.0
        %2227 = vmatpush2.msra.mxu0 0.0
        %2228 = vmatprep.subr.mxu0 0.0
        %2229 = vmatpush2.msra.mxu0 0.0
        %2230 = vmatprep.subr.mxu0 0.0
        %2231 = vmatpush2.msra.mxu0 0.0
        %2232 = vmatprep.subr.mxu0 0.0
        %2233 = vmatpush2.msra.mxu0 0.0
        %2234 = vmatprep.subr.mxu0 0.0
        %2235 = vmatpush2.msra.mxu0 0.0
        %2236 = vmatprep.subr.mxu0 0.0
        %2237 = vmatpush2.msra.mxu0 0.0
        %2238 = vmatprep.subr.mxu0 0.0
        %2239 = vmatpush2.msra.mxu0 0.0
        %2240 = vmatprep.mubr.f32.mxu0 0.0
        %2241 = vmatmul.mubr.f32.gmra.mxu0 %v2174
        %v2242 = vpop.f32.mrf.mxu0
        %v2243 = vadd.f32 %v2171, %v2242
        %v2244 = vpop.f32.mrf.mxu0
        %2245 = vdwg.mxu0
        %v2246 = vmul.f32 %v2243, 0.5
        %v2247 = vmul.f32 %v2243, 0.044715
        %v2248 = vmul.f32 %v2247, %v2243
        %v2249 = vmul.f32 %v2248, %v2243
        %v2250 = vadd.f32 %v2243, %v2249
        %v2251 = vmul.f32 %v2250, 0.7978846
        %v2252 = vtanh.pop %v2251
        %v2253 = vadd.f32 %v2252, 1.0
        %v2254 = vmul.f32 %v2246, %v2253
        %s2255 = scalar_lea.vmem %s12, 64
        %v2256 = vld [vmem:[%s2255] sm:$0xff]
        %v2257 = vld [vmem:[%s2255 + $0x8] sm:$0xff]
        %v2258 = vld [vmem:[%s2255 + $0x10] sm:$0xff]
        %v2259 = vld [vmem:[%s2255 + $0x18] sm:$0xff]
        %v2260 = vld [vmem:[%s2255 + $0x20] sm:$0xff]
        %v2261 = vld [vmem:[%s2255 + $0x28] sm:$0xff]
        %v2262 = vld [vmem:[%s2255 + $0x30] sm:$0xff]
        %v2263 = vld [vmem:[%s2255 + $0x38] sm:$0xff]
        %s2264 = scalar_lea.vmem [#allocation13], 1
        %v2265 = vld [vmem:[%s2264] sm:$0x1]
        %v2267 = vlaneseq
        %v2268 = vshrl.u32 %v2267, 7
        %v2269 = vsub.s32 0, %v2268
        %v2270 = vrot.slane %v2265, %v2269
        %v2273 = vsel %vm1444, %v2254, 0
        %2275 = vmatprep.subr.mxu0 0.0
        %2276 = vmatpush1.msra.mxu0 0.0
        %2277 = vmatprep.subr.mxu0 0.0
        %2278 = vmatpush1.msra.mxu0 0.0
        %2279 = vmatprep.subr.mxu0 0.0
        %2280 = vmatpush1.msra.mxu0 0.0
        %2281 = vmatprep.subr.mxu0 0.0
        %2282 = vmatpush1.msra.mxu0 0.0
        %2283 = vmatprep.subr.mxu0 0.0
        %2284 = vmatpush1.msra.mxu0 0.0
        %2285 = vmatprep.subr.mxu0 0.0
        %2286 = vmatpush1.msra.mxu0 0.0
        %2287 = vmatprep.subr.mxu0 0.0
        %2288 = vmatpush1.msra.mxu0 0.0
        %2289 = vmatprep.subr.mxu0 0.0
        %2290 = vmatpush1.msra.mxu0 0.0
        %2291 = vmatprep.subr.mxu0 0.0
        %2292 = vmatpush1.msra.mxu0 %v2263
        %2293 = vmatprep.subr.mxu0 0.0
        %2294 = vmatpush1.msra.mxu0 %v2262
        %2295 = vmatprep.subr.mxu0 0.0
        %2296 = vmatpush1.msra.mxu0 %v2261
        %2297 = vmatprep.subr.mxu0 0.0
        %2298 = vmatpush1.msra.mxu0 %v2260
        %2299 = vmatprep.subr.mxu0 0.0
        %2300 = vmatpush1.msra.mxu0 %v2259
        %2301 = vmatprep.subr.mxu0 0.0
        %2302 = vmatpush1.msra.mxu0 %v2258
        %2303 = vmatprep.subr.mxu0 0.0
        %2304 = vmatpush1.msra.mxu0 %v2257
        %2305 = vmatprep.subr.mxu0 0.0
        %2306 = vmatpush1.msra.mxu0 %v2256
        %2307 = vmatprep.subr.mxu0 0.0
        %2308 = vmatpush2.msra.mxu0 0.0
        %2309 = vmatprep.subr.mxu0 0.0
        %2310 = vmatpush2.msra.mxu0 0.0
        %2311 = vmatprep.subr.mxu0 0.0
        %2312 = vmatpush2.msra.mxu0 0.0
        %2313 = vmatprep.subr.mxu0 0.0
        %2314 = vmatpush2.msra.mxu0 0.0
        %2315 = vmatprep.subr.mxu0 0.0
        %2316 = vmatpush2.msra.mxu0 0.0
        %2317 = vmatprep.subr.mxu0 0.0
        %2318 = vmatpush2.msra.mxu0 0.0
        %2319 = vmatprep.subr.mxu0 0.0
        %2320 = vmatpush2.msra.mxu0 0.0
        %2321 = vmatprep.subr.mxu0 0.0
        %2322 = vmatpush2.msra.mxu0 0.0
        %2323 = vmatprep.subr.mxu0 0.0
        %2324 = vmatpush2.msra.mxu0 0.0
        %2325 = vmatprep.subr.mxu0 0.0
        %2326 = vmatpush2.msra.mxu0 0.0
        %2327 = vmatprep.subr.mxu0 0.0
        %2328 = vmatpush2.msra.mxu0 0.0
        %2329 = vmatprep.subr.mxu0 0.0
        %2330 = vmatpush2.msra.mxu0 0.0
        %2331 = vmatprep.subr.mxu0 0.0
        %2332 = vmatpush2.msra.mxu0 0.0
        %2333 = vmatprep.subr.mxu0 0.0
        %2334 = vmatpush2.msra.mxu0 0.0
        %2335 = vmatprep.subr.mxu0 0.0
        %2336 = vmatpush2.msra.mxu0 0.0
        %2337 = vmatprep.subr.mxu0 0.0
        %2338 = vmatpush2.msra.mxu0 0.0
        %2339 = vmatprep.mubr.f32.mxu0 0.0
        %2340 = vmatmul.mubr.f32.gmra.mxu0 %v2273
        %v2341 = vpop.f32.mrf.mxu0
        %v2342 = vadd.f32 %v2270, %v2341
        %v2343 = vpop.f32.mrf.mxu0
        %2344 = vdwg.mxu0
        %v2345 = vadd.f32 %v2342, %v2159
        %s2346 = scalar_lea.vmem %s14, 1
        %v2347 = vld [vmem:[%s2346] sm:$0x1]
        %s2348 = scalar_lea.vmem %s15, 1
        %v2349 = vld [vmem:[%s2348] sm:$0x1]
        %v2350 = vsel %vm693, %v2345, 0.0
        %2351 = vadd.xlane.f32.xlu0 %v2350
        %v2352 = vpop.xlane.xlu0 %2351
        %v2353 = vmul.f32 %v2352, %v697
        %v2354 = vsub.f32 %v2345, %v2353
        %v2355 = vmul.f32 %v2354, %v2354
        %v2356 = vsel %vm693, %v2355, 0.0
        %2357 = vadd.xlane.f32.xlu0 %v2356
        %v2358 = vpop.xlane.xlu0 %2357
        %v2359 = vmul.f32 %v2358, %v697
        %v2360 = vadd.f32 %v2359, 1e-12
        %v2361 = vrsqrt.pop %v2360
        %v2362 = vmul.f32 %v2354, %v2361
        %v2364 = vlaneseq
        %v2365 = vshrl.u32 %v2364, 7
        %v2366 = vsub.s32 0, %v2365
        %v2367 = vrot.slane %v2347, %v2366
        %v2369 = vmul.f32 %v2362, %v2367
        %v2371 = vlaneseq
        %v2372 = vshrl.u32 %v2371, 7
        %v2373 = vsub.s32 0, %v2372
        %v2374 = vrot.slane %v2349, %v2373
        %v2376 = vadd.f32 %v2369, %v2374
        %v2377 = vsel %vm693, %v2376, 0.0
        %v2378 = vrot.slane %v2377, 4
        %v2379 = vadd.f32 %v2377, %v2378
        %v2380 = vrot.slane %v2379, 2
        %v2381 = vadd.f32 %v2379, %v2380
        %v2382 = vrot.slane %v2381, 1
        %v2383 = vadd.f32 %v2381, %v2382
        %v2384 = vrcp.pop 8.0
        %v2385 = vmul.f32 %v2383, %v2384
        %v2386 = vld [vmem:[%s16] sm:$0xff]
        %v2387 = vld [vmem:[%s16 + $0x8] sm:$0xff]
        %v2388 = vld [vmem:[%s16 + $0x10] sm:$0xff]
        %v2389 = vld [vmem:[%s16 + $0x18] sm:$0xff]
        %v2390 = vld [vmem:[%s17] sm:$0x1]
        %v2392 = vsel %vm693, %v2385, 0
        %2394 = vmatprep.subr.mxu0 0.0
        %2395 = vmatpush1.msra.mxu0 0.0
        %2396 = vmatprep.subr.mxu0 0.0
        %2397 = vmatpush1.msra.mxu0 0.0
        %2398 = vmatprep.subr.mxu0 0.0
        %2399 = vmatpush1.msra.mxu0 0.0
        %2400 = vmatprep.subr.mxu0 0.0
        %2401 = vmatpush1.msra.mxu0 0.0
        %2402 = vmatprep.subr.mxu0 0.0
        %2403 = vmatpush1.msra.mxu0 0.0
        %2404 = vmatprep.subr.mxu0 0.0
        %2405 = vmatpush1.msra.mxu0 0.0
        %2406 = vmatprep.subr.mxu0 0.0
        %2407 = vmatpush1.msra.mxu0 0.0
        %2408 = vmatprep.subr.mxu0 0.0
        %2409 = vmatpush1.msra.mxu0 0.0
        %2410 = vmatprep.subr.mxu0 0.0
        %2411 = vmatpush1.msra.mxu0 0.0
        %2412 = vmatprep.subr.mxu0 0.0
        %2413 = vmatpush1.msra.mxu0 0.0
        %2414 = vmatprep.subr.mxu0 0.0
        %2415 = vmatpush1.msra.mxu0 0.0
        %2416 = vmatprep.subr.mxu0 0.0
        %2417 = vmatpush1.msra.mxu0 0.0
        %2418 = vmatprep.subr.mxu0 0.0
        %2419 = vmatpush1.msra.mxu0 %v2389
        %2420 = vmatprep.subr.mxu0 0.0
        %2421 = vmatpush1.msra.mxu0 %v2388
        %2422 = vmatprep.subr.mxu0 0.0
        %2423 = vmatpush1.msra.mxu0 %v2387
        %2424 = vmatprep.subr.mxu0 0.0
        %2425 = vmatpush1.msra.mxu0 %v2386
        %2426 = vmatprep.subr.mxu0 0.0
        %2427 = vmatpush2.msra.mxu0 0.0
        %2428 = vmatprep.subr.mxu0 0.0
        %2429 = vmatpush2.msra.mxu0 0.0
        %2430 = vmatprep.subr.mxu0 0.0
        %2431 = vmatpush2.msra.mxu0 0.0
        %2432 = vmatprep.subr.mxu0 0.0
        %2433 = vmatpush2.msra.mxu0 0.0
        %2434 = vmatprep.subr.mxu0 0.0
        %2435 = vmatpush2.msra.mxu0 0.0
        %2436 = vmatprep.subr.mxu0 0.0
        %2437 = vmatpush2.msra.mxu0 0.0
        %2438 = vmatprep.subr.mxu0 0.0
        %2439 = vmatpush2.msra.mxu0 0.0
        %2440 = vmatprep.subr.mxu0 0.0
        %2441 = vmatpush2.msra.mxu0 0.0
        %2442 = vmatprep.subr.mxu0 0.0
        %2443 = vmatpush2.msra.mxu0 0.0
        %2444 = vmatprep.subr.mxu0 0.0
        %2445 = vmatpush2.msra.mxu0 0.0
        %2446 = vmatprep.subr.mxu0 0.0
        %2447 = vmatpush2.msra.mxu0 0.0
        %2448 = vmatprep.subr.mxu0 0.0
        %2449 = vmatpush2.msra.mxu0 0.0
        %2450 = vmatprep.subr.mxu0 0.0
        %2451 = vmatpush2.msra.mxu0 0.0
        %2452 = vmatprep.subr.mxu0 0.0
        %2453 = vmatpush2.msra.mxu0 0.0
        %2454 = vmatprep.subr.mxu0 0.0
        %2455 = vmatpush2.msra.mxu0 0.0
        %2456 = vmatprep.subr.mxu0 0.0
        %2457 = vmatpush2.msra.mxu0 0.0
        %2458 = vmatprep.mubr.f32.mxu0 0.0
        %2459 = vmatmul.mubr.f32.gmra.mxu0 %v2392
        %v2460 = vpop.f32.mrf.mxu0
        %v2461 = vadd.f32 %v2390, %v2460
        %v2462 = vpop.f32.mrf.mxu0
        %2463 = vdwg.mxu0
        %vm2464 = vcmask 90112
        %2465 = vst.msk [vmem:[%s685] sm:$0x1] %vm2464, %v2461
        %s2466 = sand.u32 %s434, 1
        %s2467 = scalar_lea.sflag [#allocation4], %s2466
        %s2468 = sand.u32 %s434, 1
        %s2469 = scalar_lea.vmem [#allocation14], %s2468
        // Predicated region
        $region121: #{tpu_custom_call.1} parent=91 // pred_check
          %p2470 = pneg %p444
        $region122: #{tpu_custom_call.1} parent=91 // pred_check_branch
          %2472 = sbr.rel (%p2470) target = $region124
        $region123: #{tpu_custom_call.1} parent=91 // pred_region
          %s2474 = ssub.s32 16, 16
          %2475 = vsyncadd %s2467, %s2474
          %s2476 = smul.addr %s38, 16
          %s2477 = scalar_lea.hbm %s18, %s2476
          %s2479 = sshll.u32 %s2469, 4
          %s2480 = int_to_ptr.vmem [resolvable:$true] %s2479
          %2482 = dma.vmem_to_hbm [thread:$0]  %s2480, 16, %s2477, %s2467
        $region124: #{tpu_custom_call.1} parent=91 // pred_fallthru
          _
      $region92: #{tpu_custom_call.1} parent=5 // pred_fallthru
        _
      %p2483 = scmp.le.s32.totalorder 2, %s33
      // Predicated region
      $region125: #{tpu_custom_call.1} parent=5 // pred_check
        %p2484 = pneg %p2483
      $region126: #{tpu_custom_call.1} parent=5 // pred_check_branch
        %2486 = sbr.rel (%p2484) target = $region128
      $region127: #{tpu_custom_call.1} parent=5 // pred_region
        %s2487 = ssub.s32 %s33, 2
        // Predicated region
        $region129: #{tpu_custom_call.1} parent=127 // pred_check
          %p2488 = pneg %p450
        $region130: #{tpu_custom_call.1} parent=127 // pred_check_branch
          %2490 = sbr.rel (%p2488) target = $region132
        $region131: #{tpu_custom_call.1} parent=127 // pred_region
          %s2491 = sand.u32 %s435, 1
          %s2492 = scalar_lea.sflag [#allocation4], %s2491
          %s2493 = sand.u32 %s435, 1
          %s2494 = scalar_lea.vmem [#allocation14], %s2493
          %2495 = dma.done %s2492, 16
        $region132: #{tpu_custom_call.1} parent=127 // pred_fallthru
          _
      $region128: #{tpu_custom_call.1} parent=5 // pred_fallthru
        _
    $region6: #{tpu_custom_call.1} parent=1 // loop_footer
      %s37 = sadd.s32 1, %s33
    $region7: #{tpu_custom_call.1} parent=1 // loop_footer_branch
      %32 = sbr.rel target = $region3
    $region8: #{tpu_custom_call.1} parent=1 // loop_exit
      _
    %2496 = vsyncpa [#allocation3], 1
    %s2497 = scalar_lea.sflag [#allocation3], 1
    %2498 = vsyncpa %s2497, 1
    %2499 = vsyncpa [#allocation6], 1
    %2500 = vsyncpa [#allocation9], 1
    %2501 = vsyncpa [#allocation12], 1
    %2502 = vsyncpa [#allocation4], 1
    %s2503 = scalar_lea.sflag [#allocation4], 1
    %2504 = vsyncpa %s2503, 1

</llo_original>
